<compile_context>
chip_gen: v5e
topology: v5e:2x2
jax: 0.10.0
libtpu: 0.0.40
codegen_flags: <defaults>
</compile_context>

<pallas_src>
import functools
import re

import jax
import jax.numpy as jnp
from jax.experimental import pallas as pl
from jax.experimental.pallas import tpu as pltpu

_LANES = 128


def _round_up(v, m):
    return -(-v // m) * m


def _tpu_generation():
    """Best-effort TPU generation from device_kind (default 6)."""
    try:
        kind = jax.devices()[0].device_kind.lower()
    except Exception:
        return 6
    match = re.search(r"(\d+)", kind)
    return int(match.group(1)) if match else 6


def _pick_row_tile(h_out, w_out, target_rows):
    """Largest divisor of h_out with tile_h * w_out <= target_rows."""
    best = 1
    for d in range(1, h_out + 1):
        if h_out % d == 0 and d * w_out <= target_rows:
            best = d
    return best


def _conv2d_kernel(x_ref, w_ref, b_ref, o_ref, *, kh_size, kw_size,
                   stride_h, stride_w, dil_h, dil_w, tile_h, w_out,
                   fuse_taps, compute_dtype):
    """Direct convolution for one (batch, row-tile) grid step.

    x_ref : (1, H_pad, W_pad, C_in)         padded image of batch element i
    w_ref : (KH*KW*C_in, C_out_pad)         fused im2col weights   (fuse_taps)
            (KH*KW, C_in, C_out_pad)        per-tap weights        (fallback)
    b_ref : (1, C_out_pad)                  bias (padded)
    o_ref : (1, tile_h, W_out, C_out_pad)   output row tile (lane-dense)
    """
    j = pl.program_id(1)                     # output-row-tile index
    c_in = x_ref.shape[3]
    c_out_p = o_ref.shape[3]
    m = tile_h * w_out
    n_taps = kh_size * kw_size

    # First padded-input row touched by this output row tile.
    row0 = pl.multiple_of(j * (tile_h * stride_h), tile_h * stride_h)

    def tap_patch(kh, kw):
        h_start = row0 + kh * dil_h
        w_start = kw * dil_w
        if stride_h == 1 and stride_w == 1:
            # Slice straight from the ref: no full-block materialization.
            return x_ref[0, pl.ds(h_start, tile_h),
                         pl.ds(w_start, w_out), :]
        # General stride: strided ref slice (avoids loading the whole window
        # and applying an XLU value-slice).
        return x_ref[0, pl.ds(h_start, tile_h, stride=stride_h),
                     pl.ds(w_start, w_out, stride=stride_w), :]

    if fuse_taps:
        # im2col: one (m, KH*KW*C_in) LHS, one MXU matmul with the big K.
        patches = [tap_patch(kh, kw)
                   for kh in range(kh_size) for kw in range(kw_size)]
        lhs = jnp.concatenate(patches, axis=-1)        # (tile_h, w_out, K)
        lhs = lhs.reshape(m, n_taps * c_in)            # minor dim unchanged
        acc = jnp.dot(lhs.astype(compute_dtype), w_ref[...],
                      preferred_element_type=jnp.float32)
    else:
        # Fallback: per-tap K=C_in matmuls accumulated in f32 vregs
        # (the previously-validated lowering path).
        acc = jnp.zeros((m, c_out_p), dtype=jnp.float32)
        for kh in range(kh_size):
            for kw in range(kw_size):
                patch = tap_patch(kh, kw).reshape(m, c_in)
                acc += jnp.dot(patch.astype(compute_dtype),
                               w_ref[kh * kw_size + kw],
                               preferred_element_type=jnp.float32)

    out = acc + b_ref[...].astype(jnp.float32)          # (m, C_out_pad)
    o_ref[...] = out.reshape(1, tile_h, w_out, c_out_p).astype(o_ref.dtype)


def meta_conv2d_forward(x_nchw, weight_oihw, bias,
                        stride=(1, 1), padding=(1, 1), dilation=(1, 1),
                        groups=1, *, fuse_taps=True, compute_dtype=None):
    """Pallas equivalent of MetaConv2d.forward (F.conv2d)."""
    assert groups == 1  # TODO(synk): grouped conv (groups > 1) not implemented
    n, c_in, h, w = x_nchw.shape
    c_out, c_in_w, kh, kw = weight_oihw.shape
    assert c_in_w == c_in
    sh, sw = stride
    ph, pw = padding
    dh, dw = dilation

    h_out = (h + 2 * ph - dh * (kh - 1) - 1) // sh + 1
    w_out = (w + 2 * pw - dw * (kw - 1) - 1) // sw + 1
    h_pad = h + 2 * ph
    w_pad = w + 2 * pw

    if compute_dtype is None:
        compute_dtype = x_nchw.dtype          # exact numerics by default;
    compute_dtype = jnp.dtype(compute_dtype)  # pass bf16 on v6e/v7x for speed

    # Lane-dense output channels: pad C_out up to a multiple of 128.
    c_out_p = _round_up(c_out, _LANES)

    gen = _tpu_generation()
    target_rows = 256 if gen >= 6 else 128     # 256-wide MXU on v6e/v7x
    tile_h = _pick_row_tile(h_out, w_out, target_rows)
    grid = (n, h_out // tile_h)

    # Glue: layout conversion + zero padding stays in plain JAX.
    # TODO(synk): fold the NCHW->NHWC transpose + halo pad into the kernel
    # (clamped / predicated loads) to drop these extra HBM passes.
    x_nhwc = jnp.transpose(x_nchw, (0, 2, 3, 1))
    x_padded = jnp.pad(x_nhwc, ((0, 0), (ph, ph), (pw, pw), (0, 0)))
    w_hwio = jnp.transpose(weight_oihw, (2, 3, 1, 0)).astype(compute_dtype)
    w_hwio = jnp.pad(w_hwio, ((0, 0), (0, 0), (0, 0), (0, c_out_p - c_out)))
    if fuse_taps:
        w_arg = w_hwio.reshape(kh * kw * c_in, c_out_p)     # im2col weights
        w_index_map = lambda i, j: (0, 0)
    else:
        w_arg = w_hwio.reshape(kh * kw, c_in, c_out_p)       # per-tap weights
        w_index_map = lambda i, j: (0, 0, 0)
    if bias is None:
        b2 = jnp.zeros((1, c_out_p), dtype=x_nchw.dtype)
    else:
        b2 = jnp.pad(bias.reshape(1, c_out).astype(x_nchw.dtype),
                     ((0, 0), (0, c_out_p - c_out)))

    kernel = functools.partial(
        _conv2d_kernel,
        kh_size=kh, kw_size=kw,
        stride_h=sh, stride_w=sw,
        dil_h=dh, dil_w=dw,
        tile_h=tile_h, w_out=w_out,
        fuse_taps=fuse_taps, compute_dtype=compute_dtype,
    )

    # VMEM budget with real (sublane=8, lane=128) tiled padding per block.
    x_item = jnp.dtype(x_nchw.dtype).itemsize
    w_item = compute_dtype.itemsize
    x_blk = h_pad * _round_up(w_pad, 8) * _round_up(c_in, _LANES) * x_item
    o_blk = tile_h * _round_up(w_out, 8) * c_out_p * x_item
    if fuse_taps:
        w_blk = _round_up(kh * kw * c_in, 8) * c_out_p * w_item
    else:
        w_blk = kh * kw * _round_up(c_in, 8) * c_out_p * w_item
    b_blk = 8 * c_out_p * x_item
    # Pipeline double-buffers every block (weights/bias are grid-invariant;
    # a Buffered(1) pipeline_mode could halve their footprint if needed).
    need = 2 * (x_blk + o_blk + w_blk + b_blk) + (4 << 20)
    cap = (48 << 20) if gen >= 7 else (100 << 20)
    vmem_limit = int(min(cap, max(16 << 20, need)))
    # TODO(synk): for large images the resident (1,H_pad,W_pad,C_in) block
    # should become an H-tiled halo block (pl.Element / manual DMA double
    # buffer) so VMEM stays bounded on v7x (64 MiB/TC).

    flops = 2 * n * h_out * w_out * kh * kw * c_in * c_out_p
    bytes_accessed = int(n * h_pad * w_pad * c_in * x_item
                         + n * h_out * w_out * c_out_p * x_item
                         + kh * kw * c_in * c_out_p * w_item
                         + c_out_p * x_item)

    out_nhwc = pl.pallas_call(
        kernel,
        out_shape=jax.ShapeDtypeStruct((n, h_out, w_out, c_out_p),
                                       x_nchw.dtype),
        grid_spec=pltpu.PrefetchScalarGridSpec(
            num_scalar_prefetch=0,
            grid=grid,
            in_specs=[
                # Full padded image of batch i; constant block index across j
                # so it stays resident in VMEM while the row tiles stream.
                pl.BlockSpec((1, h_pad, w_pad, c_in),
                             lambda i, j: (i, 0, 0, 0)),
                # Weights / bias: single full-array block, fetched once.
                pl.BlockSpec(w_arg.shape, w_index_map),
                pl.BlockSpec((1, c_out_p), lambda i, j: (0, 0)),
            ],
            out_specs=pl.BlockSpec((1, tile_h, w_out, c_out_p),
                                   lambda i, j: (i, j, 0, 0)),
        ),
        compiler_params=pltpu.CompilerParams(
            dimension_semantics=("parallel", "parallel"),
            vmem_limit_bytes=vmem_limit,
        ),
        cost_estimate=pl.CostEstimate(flops=flops, transcendentals=0,
                                      bytes_accessed=bytes_accessed),
    )(x_padded, w_arg, b2)

    out = out_nhwc[..., :c_out]                     # drop channel padding
    return jnp.transpose(out, (0, 3, 1, 2))         # back to NCHW


if __name__ == "__main__":
    # Module config: MetaConv2d(4, 8, kernel_size=3, stride=1, padding=1)
    in_ch, out_ch, ksize = 4, 8, 3
    stride, padding, dilation = (1, 1), (1, 1), (1, 1)

    key = jax.random.PRNGKey(0)
    kx, kw_, kb = jax.random.split(key, 3)

    x = jax.random.normal(kx, (2, in_ch, 16, 16), dtype=jnp.float32)
    # Deterministic init (Kaiming-uniform-like bound, as nn.Conv2d would use).
    fan_in = in_ch * ksize * ksize
    bound = 1.0 / (fan_in ** 0.5)
    weight = jax.random.uniform(kw_, (out_ch, in_ch, ksize, ksize),
                                minval=-bound, maxval=bound, dtype=jnp.float32)
    bias = jax.random.uniform(kb, (out_ch,), minval=-bound, maxval=bound,
                              dtype=jnp.float32)

    # Preferred path: fused im2col matmul (one MXU push per grid step).
    try:
        out = jax.block_until_ready(
            meta_conv2d_forward(x, weight, bias, stride, padding, dilation,
                                fuse_taps=True))
        fused = True
    except Exception:
        # Fallback: per-tap K=C_in accumulation (always-lowerable path).
        out = jax.block_until_ready(
            meta_conv2d_forward(x, weight, bias, stride, padding, dilation,
                                fuse_taps=False))
        fused = False

    # Cross-check against XLA's conv (same semantics as F.conv2d).
    ref = jax.lax.conv_general_dilated(
        x, weight, window_strides=stride, padding=[(1, 1), (1, 1)],
        rhs_dilation=dilation,
        dimension_numbers=("NCHW", "OIHW", "NCHW"),
    ) + bias[None, :, None, None]
    assert out.shape == ref.shape
    assert jnp.max(jnp.abs(out - ref)) < 1e-4

    # Optional bf16-operand path (the recommended setting on v6e/v7x):
    # bf16 matmul operands, f32 accumulation.  Looser tolerance by design.
    try:
        out_bf = jax.block_until_ready(
            meta_conv2d_forward(x, weight, bias, stride, padding, dilation,
                                fuse_taps=fused,
                                compute_dtype=jnp.bfloat16))
        assert jnp.max(jnp.abs(out_bf - ref)) < 5e-2
    except Exception:
        pass  # bf16 demo is optional; f32 correctness already verified above

    print("KERNEL_OK")
</pallas_src>

<mosaic_0001>
module attributes {stable_mosaic.version = 11 : i64} {
  func.func @_conv2d_kernel(%arg0: i32, %arg1: i32, %arg2: memref<1x18x18x4xf32, #tpu.memory_space<vmem>>, %arg3: memref<36x128xf32, #tpu.memory_space<vmem>>, %arg4: memref<1x128xf32, #tpu.memory_space<vmem>>, %arg5: memref<1x16x16x128xf32, #tpu.memory_space<vmem>>) attributes {dimension_semantics = [#tpu.dimension_semantics<parallel>, #tpu.dimension_semantics<parallel>], iteration_bounds = array<i64: 2, 1>, scalar_prefetch = 0 : i64, scratch_operands = 0 : i64, tpu.core_type = #tpu.core_type<tc>, window_params = [{transform_indices = @transform_0, window_bounds = array<i64: 1, 18, 18, 4>}, {pipeline_mode = #tpu.pipeline_mode<synchronous>, transform_indices = @transform_1, window_bounds = array<i64: 36, 128>}, {pipeline_mode = #tpu.pipeline_mode<synchronous>, transform_indices = @transform_2, window_bounds = array<i64: 1, 128>}, {transform_indices = @transform_3, window_bounds = array<i64: 1, 16, 16, 128>}]} {
    %c16_i32 = arith.constant 16 : i32
    %0 = arith.muli %arg1, %c16_i32 : i32
    %1 = tpu.assume_multiple %0, 16 : i32
    %c0_i32 = arith.constant 0 : i32
    %2 = arith.addi %1, %c0_i32 : i32
    %c0 = arith.constant 0 : index
    %3 = arith.index_cast %2 : i32 to index
    %c0_0 = arith.constant 0 : index
    %c0_1 = arith.constant 0 : index
    %4 = vector.load %arg2[%c0, %3, %c0_0, %c0_1] : memref<1x18x18x4xf32, #tpu.memory_space<vmem>>, vector<1x16x16x4xf32>
    %5 = vector.shape_cast %4 : vector<1x16x16x4xf32> to vector<16x16x4xf32>
    %c0_i32_2 = arith.constant 0 : i32
    %6 = arith.addi %1, %c0_i32_2 : i32
    %c0_3 = arith.constant 0 : index
    %7 = arith.index_cast %6 : i32 to index
    %c1 = arith.constant 1 : index
    %c0_4 = arith.constant 0 : index
    %8 = vector.load %arg2[%c0_3, %7, %c1, %c0_4] : memref<1x18x18x4xf32, #tpu.memory_space<vmem>>, vector<1x16x16x4xf32>
    %9 = vector.shape_cast %8 : vector<1x16x16x4xf32> to vector<16x16x4xf32>
    %c0_i32_5 = arith.constant 0 : i32
    %10 = arith.addi %1, %c0_i32_5 : i32
    %c0_6 = arith.constant 0 : index
    %11 = arith.index_cast %10 : i32 to index
    %c2 = arith.constant 2 : index
    %c0_7 = arith.constant 0 : index
    %12 = vector.load %arg2[%c0_6, %11, %c2, %c0_7] : memref<1x18x18x4xf32, #tpu.memory_space<vmem>>, vector<1x16x16x4xf32>
    %13 = vector.shape_cast %12 : vector<1x16x16x4xf32> to vector<16x16x4xf32>
    %c1_i32 = arith.constant 1 : i32
    %14 = arith.addi %1, %c1_i32 : i32
    %c0_8 = arith.constant 0 : index
    %15 = arith.index_cast %14 : i32 to index
    %c0_9 = arith.constant 0 : index
    %c0_10 = arith.constant 0 : index
    %16 = vector.load %arg2[%c0_8, %15, %c0_9, %c0_10] : memref<1x18x18x4xf32, #tpu.memory_space<vmem>>, vector<1x16x16x4xf32>
    %17 = vector.shape_cast %16 : vector<1x16x16x4xf32> to vector<16x16x4xf32>
    %c1_i32_11 = arith.constant 1 : i32
    %18 = arith.addi %1, %c1_i32_11 : i32
    %c0_12 = arith.constant 0 : index
    %19 = arith.index_cast %18 : i32 to index
    %c1_13 = arith.constant 1 : index
    %c0_14 = arith.constant 0 : index
    %20 = vector.load %arg2[%c0_12, %19, %c1_13, %c0_14] : memref<1x18x18x4xf32, #tpu.memory_space<vmem>>, vector<1x16x16x4xf32>
    %21 = vector.shape_cast %20 : vector<1x16x16x4xf32> to vector<16x16x4xf32>
    %c1_i32_15 = arith.constant 1 : i32
    %22 = arith.addi %1, %c1_i32_15 : i32
    %c0_16 = arith.constant 0 : index
    %23 = arith.index_cast %22 : i32 to index
    %c2_17 = arith.constant 2 : index
    %c0_18 = arith.constant 0 : index
    %24 = vector.load %arg2[%c0_16, %23, %c2_17, %c0_18] : memref<1x18x18x4xf32, #tpu.memory_space<vmem>>, vector<1x16x16x4xf32>
    %25 = vector.shape_cast %24 : vector<1x16x16x4xf32> to vector<16x16x4xf32>
    %c2_i32 = arith.constant 2 : i32
    %26 = arith.addi %1, %c2_i32 : i32
    %c0_19 = arith.constant 0 : index
    %27 = arith.index_cast %26 : i32 to index
    %c0_20 = arith.constant 0 : index
    %c0_21 = arith.constant 0 : index
    %28 = vector.load %arg2[%c0_19, %27, %c0_20, %c0_21] : memref<1x18x18x4xf32, #tpu.memory_space<vmem>>, vector<1x16x16x4xf32>
    %29 = vector.shape_cast %28 : vector<1x16x16x4xf32> to vector<16x16x4xf32>
    %c2_i32_22 = arith.constant 2 : i32
    %30 = arith.addi %1, %c2_i32_22 : i32
    %c0_23 = arith.constant 0 : index
    %31 = arith.index_cast %30 : i32 to index
    %c1_24 = arith.constant 1 : index
    %c0_25 = arith.constant 0 : index
    %32 = vector.load %arg2[%c0_23, %31, %c1_24, %c0_25] : memref<1x18x18x4xf32, #tpu.memory_space<vmem>>, vector<1x16x16x4xf32>
    %33 = vector.shape_cast %32 : vector<1x16x16x4xf32> to vector<16x16x4xf32>
    %c2_i32_26 = arith.constant 2 : i32
    %34 = arith.addi %1, %c2_i32_26 : i32
    %c0_27 = arith.constant 0 : index
    %35 = arith.index_cast %34 : i32 to index
    %c2_28 = arith.constant 2 : index
    %c0_29 = arith.constant 0 : index
    %36 = vector.load %arg2[%c0_27, %35, %c2_28, %c0_29] : memref<1x18x18x4xf32, #tpu.memory_space<vmem>>, vector<1x16x16x4xf32>
    %37 = vector.shape_cast %36 : vector<1x16x16x4xf32> to vector<16x16x4xf32>
    %38 = tpu.concatenate %5, %9, %13, %17, %21, %25, %29, %33, %37 in 2 : vector<16x16x4xf32>, vector<16x16x4xf32>, vector<16x16x4xf32>, vector<16x16x4xf32>, vector<16x16x4xf32>, vector<16x16x4xf32>, vector<16x16x4xf32>, vector<16x16x4xf32>, vector<16x16x4xf32> -> vector<16x16x36xf32>
    %39 = vector.shape_cast %38 : vector<16x16x36xf32> to vector<256x36xf32>
    %c0_30 = arith.constant 0 : index
    %c0_31 = arith.constant 0 : index
    %40 = vector.load %arg3[%c0_30, %c0_31] : memref<36x128xf32, #tpu.memory_space<vmem>>, vector<36x128xf32>
    %cst = arith.constant dense<0.000000e+00> : vector<256x128xf32>
    %41 = tpu.matmul %39, %40, %cst {dimension_numbers = #tpu.dot_dimension_numbers<[1], [0], [0], [1], [0, 0, 1, 1], [], []>} : vector<256x36xf32>, vector<36x128xf32>, vector<256x128xf32> -> vector<256x128xf32>
    %c0_32 = arith.constant 0 : index
    %c0_33 = arith.constant 0 : index
    %42 = vector.load %arg4[%c0_32, %c0_33] : memref<1x128xf32, #tpu.memory_space<vmem>>, vector<1x128xf32>
    %43 = vector.broadcast %42 : vector<1x128xf32> to vector<256x128xf32>
    %44 = arith.addf %41, %43 : vector<256x128xf32>
    %45 = vector.shape_cast %44 : vector<256x128xf32> to vector<1x16x16x128xf32>
    %c0_34 = arith.constant 0 : index
    %c0_35 = arith.constant 0 : index
    %c0_36 = arith.constant 0 : index
    %c0_37 = arith.constant 0 : index
    %46 = vector.load %arg5[%c0_34, %c0_35, %c0_36, %c0_37] : memref<1x16x16x128xf32, #tpu.memory_space<vmem>>, vector<1x16x16x128xf32>
    tpu.vector_store %arg5[%c0_34, %c0_35, %c0_36, %c0_37], %45 {strides = array<i32>} : memref<1x16x16x128xf32, #tpu.memory_space<vmem>>, vector<1x16x16x128xf32>,
    return
  }
  func.func @transform_0(%arg0: i32, %arg1: i32) -> (i32, i32, i32, i32) {
    %c0_i32 = arith.constant 0 : i32
    %c0_i32_0 = arith.constant 0 : i32
    %c0_i32_1 = arith.constant 0 : i32
    %c0_i32_2 = arith.constant 0 : i32
    return %arg0, %c0_i32, %c0_i32_0, %c0_i32_1 : i32, i32, i32, i32
  }
  func.func @transform_1(%arg0: i32, %arg1: i32) -> (i32, i32) {
    %c0_i32 = arith.constant 0 : i32
    %c0_i32_0 = arith.constant 0 : i32
    %c0_i32_1 = arith.constant 0 : i32
    return %c0_i32, %c0_i32_0 : i32, i32
  }
  func.func @transform_2(%arg0: i32, %arg1: i32) -> (i32, i32) {
    %c0_i32 = arith.constant 0 : i32
    %c0_i32_0 = arith.constant 0 : i32
    %c0_i32_1 = arith.constant 0 : i32
    return %c0_i32, %c0_i32_0 : i32, i32
  }
  func.func @transform_3(%arg0: i32, %arg1: i32) -> (i32, i32, i32, i32) {
    %c0_i32 = arith.constant 0 : i32
    %c0_i32_0 = arith.constant 0 : i32
    %c0_i32_1 = arith.constant 0 : i32
    return %arg0, %arg1, %c0_i32, %c0_i32_0 : i32, i32, i32, i32
  }
}

module attributes {stable_mosaic.version = 11 : i64} {
  func.func @_conv2d_kernel(%arg0: i32, %arg1: i32, %arg2: memref<1x18x18x4xf32, #tpu.memory_space<vmem>>, %arg3: memref<9x4x128xf32, #tpu.memory_space<vmem>>, %arg4: memref<1x128xf32, #tpu.memory_space<vmem>>, %arg5: memref<1x16x16x128xf32, #tpu.memory_space<vmem>>) attributes {dimension_semantics = [#tpu.dimension_semantics<parallel>, #tpu.dimension_semantics<parallel>], iteration_bounds = array<i64: 2, 1>, scalar_prefetch = 0 : i64, scratch_operands = 0 : i64, tpu.core_type = #tpu.core_type<tc>, window_params = [{transform_indices = @transform_0, window_bounds = array<i64: 1, 18, 18, 4>}, {pipeline_mode = #tpu.pipeline_mode<synchronous>, transform_indices = @transform_1, window_bounds = array<i64: 9, 4, 128>}, {pipeline_mode = #tpu.pipeline_mode<synchronous>, transform_indices = @transform_2, window_bounds = array<i64: 1, 128>}, {transform_indices = @transform_3, window_bounds = array<i64: 1, 16, 16, 128>}]} {
    %c16_i32 = arith.constant 16 : i32
    %0 = arith.muli %arg1, %c16_i32 : i32
    %1 = tpu.assume_multiple %0, 16 : i32
    %cst = arith.constant 0.000000e+00 : f32
    %2 = vector.broadcast %cst : f32 to vector<256x128xf32>
    %c0_i32 = arith.constant 0 : i32
    %3 = arith.addi %1, %c0_i32 : i32
    %c0 = arith.constant 0 : index
    %4 = arith.index_cast %3 : i32 to index
    %c0_0 = arith.constant 0 : index
    %c0_1 = arith.constant 0 : index
    %5 = vector.load %arg2[%c0, %4, %c0_0, %c0_1] : memref<1x18x18x4xf32, #tpu.memory_space<vmem>>, vector<1x16x16x4xf32>
    %6 = vector.shape_cast %5 : vector<1x16x16x4xf32> to vector<16x16x4xf32>
    %7 = vector.shape_cast %6 : vector<16x16x4xf32> to vector<256x4xf32>
    %c0_2 = arith.constant 0 : index
    %c0_3 = arith.constant 0 : index
    %c0_4 = arith.constant 0 : index
    %8 = vector.load %arg3[%c0_2, %c0_3, %c0_4] : memref<9x4x128xf32, #tpu.memory_space<vmem>>, vector<1x4x128xf32>
    %9 = vector.shape_cast %8 : vector<1x4x128xf32> to vector<4x128xf32>
    %cst_5 = arith.constant dense<0.000000e+00> : vector<256x128xf32>
    %10 = tpu.matmul %7, %9, %cst_5 {dimension_numbers = #tpu.dot_dimension_numbers<[1], [0], [0], [1], [0, 0, 1, 1], [], []>} : vector<256x4xf32>, vector<4x128xf32>, vector<256x128xf32> -> vector<256x128xf32>
    %11 = arith.addf %2, %10 : vector<256x128xf32>
    %c0_i32_6 = arith.constant 0 : i32
    %12 = arith.addi %1, %c0_i32_6 : i32
    %c0_7 = arith.constant 0 : index
    %13 = arith.index_cast %12 : i32 to index
    %c1 = arith.constant 1 : index
    %c0_8 = arith.constant 0 : index
    %14 = vector.load %arg2[%c0_7, %13, %c1, %c0_8] : memref<1x18x18x4xf32, #tpu.memory_space<vmem>>, vector<1x16x16x4xf32>
    %15 = vector.shape_cast %14 : vector<1x16x16x4xf32> to vector<16x16x4xf32>
    %16 = vector.shape_cast %15 : vector<16x16x4xf32> to vector<256x4xf32>
    %c1_9 = arith.constant 1 : index
    %c0_10 = arith.constant 0 : index
    %c0_11 = arith.constant 0 : index
    %17 = vector.load %arg3[%c1_9, %c0_10, %c0_11] : memref<9x4x128xf32, #tpu.memory_space<vmem>>, vector<1x4x128xf32>
    %18 = vector.shape_cast %17 : vector<1x4x128xf32> to vector<4x128xf32>
    %cst_12 = arith.constant dense<0.000000e+00> : vector<256x128xf32>
    %19 = tpu.matmul %16, %18, %cst_12 {dimension_numbers = #tpu.dot_dimension_numbers<[1], [0], [0], [1], [0, 0, 1, 1], [], []>} : vector<256x4xf32>, vector<4x128xf32>, vector<256x128xf32> -> vector<256x128xf32>
    %20 = arith.addf %11, %19 : vector<256x128xf32>
    %c0_i32_13 = arith.constant 0 : i32
    %21 = arith.addi %1, %c0_i32_13 : i32
    %c0_14 = arith.constant 0 : index
    %22 = arith.index_cast %21 : i32 to index
    %c2 = arith.constant 2 : index
    %c0_15 = arith.constant 0 : index
    %23 = vector.load %arg2[%c0_14, %22, %c2, %c0_15] : memref<1x18x18x4xf32, #tpu.memory_space<vmem>>, vector<1x16x16x4xf32>
    %24 = vector.shape_cast %23 : vector<1x16x16x4xf32> to vector<16x16x4xf32>
    %25 = vector.shape_cast %24 : vector<16x16x4xf32> to vector<256x4xf32>
    %c2_16 = arith.constant 2 : index
    %c0_17 = arith.constant 0 : index
    %c0_18 = arith.constant 0 : index
    %26 = vector.load %arg3[%c2_16, %c0_17, %c0_18] : memref<9x4x128xf32, #tpu.memory_space<vmem>>, vector<1x4x128xf32>
    %27 = vector.shape_cast %26 : vector<1x4x128xf32> to vector<4x128xf32>
    %cst_19 = arith.constant dense<0.000000e+00> : vector<256x128xf32>
    %28 = tpu.matmul %25, %27, %cst_19 {dimension_numbers = #tpu.dot_dimension_numbers<[1], [0], [0], [1], [0, 0, 1, 1], [], []>} : vector<256x4xf32>, vector<4x128xf32>, vector<256x128xf32> -> vector<256x128xf32>
    %29 = arith.addf %20, %28 : vector<256x128xf32>
    %c1_i32 = arith.constant 1 : i32
    %30 = arith.addi %1, %c1_i32 : i32
    %c0_20 = arith.constant 0 : index
    %31 = arith.index_cast %30 : i32 to index
    %c0_21 = arith.constant 0 : index
    %c0_22 = arith.constant 0 : index
    %32 = vector.load %arg2[%c0_20, %31, %c0_21, %c0_22] : memref<1x18x18x4xf32, #tpu.memory_space<vmem>>, vector<1x16x16x4xf32>
    %33 = vector.shape_cast %32 : vector<1x16x16x4xf32> to vector<16x16x4xf32>
    %34 = vector.shape_cast %33 : vector<16x16x4xf32> to vector<256x4xf32>
    %c3 = arith.constant 3 : index
    %c0_23 = arith.constant 0 : index
    %c0_24 = arith.constant 0 : index
    %35 = vector.load %arg3[%c3, %c0_23, %c0_24] : memref<9x4x128xf32, #tpu.memory_space<vmem>>, vector<1x4x128xf32>
    %36 = vector.shape_cast %35 : vector<1x4x128xf32> to vector<4x128xf32>
    %cst_25 = arith.constant dense<0.000000e+00> : vector<256x128xf32>
    %37 = tpu.matmul %34, %36, %cst_25 {dimension_numbers = #tpu.dot_dimension_numbers<[1], [0], [0], [1], [0, 0, 1, 1], [], []>} : vector<256x4xf32>, vector<4x128xf32>, vector<256x128xf32> -> vector<256x128xf32>
    %38 = arith.addf %29, %37 : vector<256x128xf32>
    %c1_i32_26 = arith.constant 1 : i32
    %39 = arith.addi %1, %c1_i32_26 : i32
    %c0_27 = arith.constant 0 : index
    %40 = arith.index_cast %39 : i32 to index
    %c1_28 = arith.constant 1 : index
    %c0_29 = arith.constant 0 : index
    %41 = vector.load %arg2[%c0_27, %40, %c1_28, %c0_29] : memref<1x18x18x4xf32, #tpu.memory_space<vmem>>, vector<1x16x16x4xf32>
    %42 = vector.shape_cast %41 : vector<1x16x16x4xf32> to vector<16x16x4xf32>
    %43 = vector.shape_cast %42 : vector<16x16x4xf32> to vector<256x4xf32>
    %c4 = arith.constant 4 : index
    %c0_30 = arith.constant 0 : index
    %c0_31 = arith.constant 0 : index
    %44 = vector.load %arg3[%c4, %c0_30, %c0_31] : memref<9x4x128xf32, #tpu.memory_space<vmem>>, vector<1x4x128xf32>
    %45 = vector.shape_cast %44 : vector<1x4x128xf32> to vector<4x128xf32>
    %cst_32 = arith.constant dense<0.000000e+00> : vector<256x128xf32>
    %46 = tpu.matmul %43, %45, %cst_32 {dimension_numbers = #tpu.dot_dimension_numbers<[1], [0], [0], [1], [0, 0, 1, 1], [], []>} : vector<256x4xf32>, vector<4x128xf32>, vector<256x128xf32> -> vector<256x128xf32>
    %47 = arith.addf %38, %46 : vector<256x128xf32>
    %c1_i32_33 = arith.constant 1 : i32
    %48 = arith.addi %1, %c1_i32_33 : i32
    %c0_34 = arith.constant 0 : index
    %49 = arith.index_cast %48 : i32 to index
    %c2_35 = arith.constant 2 : index
    %c0_36 = arith.constant 0 : index
    %50 = vector.load %arg2[%c0_34, %49, %c2_35, %c0_36] : memref<1x18x18x4xf32, #tpu.memory_space<vmem>>, vector<1x16x16x4xf32>
    %51 = vector.shape_cast %50 : vector<1x16x16x4xf32> to vector<16x16x4xf32>
    %52 = vector.shape_cast %51 : vector<16x16x4xf32> to vector<256x4xf32>
    %c5 = arith.constant 5 : index
    %c0_37 = arith.constant 0 : index
    %c0_38 = arith.constant 0 : index
    %53 = vector.load %arg3[%c5, %c0_37, %c0_38] : memref<9x4x128xf32, #tpu.memory_space<vmem>>, vector<1x4x128xf32>
    %54 = vector.shape_cast %53 : vector<1x4x128xf32> to vector<4x128xf32>
    %cst_39 = arith.constant dense<0.000000e+00> : vector<256x128xf32>
    %55 = tpu.matmul %52, %54, %cst_39 {dimension_numbers = #tpu.dot_dimension_numbers<[1], [0], [0], [1], [0, 0, 1, 1], [], []>} : vector<256x4xf32>, vector<4x128xf32>, vector<256x128xf32> -> vector<256x128xf32>
    %56 = arith.addf %47, %55 : vector<256x128xf32>
    %c2_i32 = arith.constant 2 : i32
    %57 = arith.addi %1, %c2_i32 : i32
    %c0_40 = arith.constant 0 : index
    %58 = arith.index_cast %57 : i32 to index
    %c0_41 = arith.constant 0 : index
    %c0_42 = arith.constant 0 : index
    %59 = vector.load %arg2[%c0_40, %58, %c0_41, %c0_42] : memref<1x18x18x4xf32, #tpu.memory_space<vmem>>, vector<1x16x16x4xf32>
    %60 = vector.shape_cast %59 : vector<1x16x16x4xf32> to vector<16x16x4xf32>
    %61 = vector.shape_cast %60 : vector<16x16x4xf32> to vector<256x4xf32>
    %c6 = arith.constant 6 : index
    %c0_43 = arith.constant 0 : index
    %c0_44 = arith.constant 0 : index
    %62 = vector.load %arg3[%c6, %c0_43, %c0_44] : memref<9x4x128xf32, #tpu.memory_space<vmem>>, vector<1x4x128xf32>
    %63 = vector.shape_cast %62 : vector<1x4x128xf32> to vector<4x128xf32>
    %cst_45 = arith.constant dense<0.000000e+00> : vector<256x128xf32>
    %64 = tpu.matmul %61, %63, %cst_45 {dimension_numbers = #tpu.dot_dimension_numbers<[1], [0], [0], [1], [0, 0, 1, 1], [], []>} : vector<256x4xf32>, vector<4x128xf32>, vector<256x128xf32> -> vector<256x128xf32>
    %65 = arith.addf %56, %64 : vector<256x128xf32>
    %c2_i32_46 = arith.constant 2 : i32
    %66 = arith.addi %1, %c2_i32_46 : i32
    %c0_47 = arith.constant 0 : index
    %67 = arith.index_cast %66 : i32 to index
    %c1_48 = arith.constant 1 : index
    %c0_49 = arith.constant 0 : index
    %68 = vector.load %arg2[%c0_47, %67, %c1_48, %c0_49] : memref<1x18x18x4xf32, #tpu.memory_space<vmem>>, vector<1x16x16x4xf32>
    %69 = vector.shape_cast %68 : vector<1x16x16x4xf32> to vector<16x16x4xf32>
    %70 = vector.shape_cast %69 : vector<16x16x4xf32> to vector<256x4xf32>
    %c7 = arith.constant 7 : index
    %c0_50 = arith.constant 0 : index
    %c0_51 = arith.constant 0 : index
    %71 = vector.load %arg3[%c7, %c0_50, %c0_51] : memref<9x4x128xf32, #tpu.memory_space<vmem>>, vector<1x4x128xf32>
    %72 = vector.shape_cast %71 : vector<1x4x128xf32> to vector<4x128xf32>
    %cst_52 = arith.constant dense<0.000000e+00> : vector<256x128xf32>
    %73 = tpu.matmul %70, %72, %cst_52 {dimension_numbers = #tpu.dot_dimension_numbers<[1], [0], [0], [1], [0, 0, 1, 1], [], []>} : vector<256x4xf32>, vector<4x128xf32>, vector<256x128xf32> -> vector<256x128xf32>
    %74 = arith.addf %65, %73 : vector<256x128xf32>
    %c2_i32_53 = arith.constant 2 : i32
    %75 = arith.addi %1, %c2_i32_53 : i32
    %c0_54 = arith.constant 0 : index
    %76 = arith.index_cast %75 : i32 to index
    %c2_55 = arith.constant 2 : index
    %c0_56 = arith.constant 0 : index
    %77 = vector.load %arg2[%c0_54, %76, %c2_55, %c0_56] : memref<1x18x18x4xf32, #tpu.memory_space<vmem>>, vector<1x16x16x4xf32>
    %78 = vector.shape_cast %77 : vector<1x16x16x4xf32> to vector<16x16x4xf32>
    %79 = vector.shape_cast %78 : vector<16x16x4xf32> to vector<256x4xf32>
    %c8 = arith.constant 8 : index
    %c0_57 = arith.constant 0 : index
    %c0_58 = arith.constant 0 : index
    %80 = vector.load %arg3[%c8, %c0_57, %c0_58] : memref<9x4x128xf32, #tpu.memory_space<vmem>>, vector<1x4x128xf32>
    %81 = vector.shape_cast %80 : vector<1x4x128xf32> to vector<4x128xf32>
    %cst_59 = arith.constant dense<0.000000e+00> : vector<256x128xf32>
    %82 = tpu.matmul %79, %81, %cst_59 {dimension_numbers = #tpu.dot_dimension_numbers<[1], [0], [0], [1], [0, 0, 1, 1], [], []>} : vector<256x4xf32>, vector<4x128xf32>, vector<256x128xf32> -> vector<256x128xf32>
    %83 = arith.addf %74, %82 : vector<256x128xf32>
    %c0_60 = arith.constant 0 : index
    %c0_61 = arith.constant 0 : index
    %84 = vector.load %arg4[%c0_60, %c0_61] : memref<1x128xf32, #tpu.memory_space<vmem>>, vector<1x128xf32>
    %85 = vector.broadcast %84 : vector<1x128xf32> to vector<256x128xf32>
    %86 = arith.addf %83, %85 : vector<256x128xf32>
    %87 = vector.shape_cast %86 : vector<256x128xf32> to vector<1x16x16x128xf32>
    %c0_62 = arith.constant 0 : index
    %c0_63 = arith.constant 0 : index
    %c0_64 = arith.constant 0 : index
    %c0_65 = arith.constant 0 : index
    %88 = vector.load %arg5[%c0_62, %c0_63, %c0_64, %c0_65] : memref<1x16x16x128xf32, #tpu.memory_space<vmem>>, vector<1x16x16x128xf32>
    tpu.vector_store %arg5[%c0_62, %c0_63, %c0_64, %c0_65], %87 {strides = array<i32>} : memref<1x16x16x128xf32, #tpu.memory_space<vmem>>, vector<1x16x16x128xf32>,
    return
  }
  func.func @transform_0(%arg0: i32, %arg1: i32) -> (i32, i32, i32, i32) {
    %c0_i32 = arith.constant 0 : i32
    %c0_i32_0 = arith.constant 0 : i32
    %c0_i32_1 = arith.constant 0 : i32
    %c0_i32_2 = arith.constant 0 : i32
    return %arg0, %c0_i32, %c0_i32_0, %c0_i32_1 : i32, i32, i32, i32
  }
  func.func @transform_1(%arg0: i32, %arg1: i32) -> (i32, i32, i32) {
    %c0_i32 = arith.constant 0 : i32
    %c0_i32_0 = arith.constant 0 : i32
    %c0_i32_1 = arith.constant 0 : i32
    %c0_i32_2 = arith.constant 0 : i32
    return %c0_i32, %c0_i32_0, %c0_i32_1 : i32, i32, i32
  }
  func.func @transform_2(%arg0: i32, %arg1: i32) -> (i32, i32) {
    %c0_i32 = arith.constant 0 : i32
    %c0_i32_0 = arith.constant 0 : i32
    %c0_i32_1 = arith.constant 0 : i32
    return %c0_i32, %c0_i32_0 : i32, i32
  }
  func.func @transform_3(%arg0: i32, %arg1: i32) -> (i32, i32, i32, i32) {
    %c0_i32 = arith.constant 0 : i32
    %c0_i32_0 = arith.constant 0 : i32
    %c0_i32_1 = arith.constant 0 : i32
    return %arg0, %arg1, %c0_i32, %c0_i32_0 : i32, i32, i32, i32
  }
}

</mosaic_0001>

<llo_original>
// kernel: tpu_custom_call.1
$region0: #{tpu_custom_call.1}
  #allocation0 [shape = 'u32[]', space=smem, size = 0x4, offset = 0x4, fixed_abs, tag = 'smem constant byte address 0x4 - core index']
  #allocation1 [shape = 'u32[72,128]{1,0:T(1,128)}', space=vmem, size = 0x9000, scoped, tag = 'internal scratch']
  %s0 = inlined_call_operand.vmem [shape: f32[2,18,18,4], index: 0, kind: input, shape index: {}]
  %s1 = inlined_call_operand.vmem [shape: f32[36,128], index: 1, kind: input, shape index: {}]
  %s2 = inlined_call_operand.vmem [shape: f32[1,128], index: 2, kind: input, shape index: {}]
  %s3 = inlined_call_operand.hbm [shape: f32[2,16,16,128], index: 3, kind: output, shape index: {}]
  %s4 = sld [smem:[#allocation0]]
  $region45: #{tpu_custom_call.1} parent=0
    _
  %s6 = ssub.s32 1, %s4
  %s7 = scalar_select 0, %s6, %s4
  $region1: #{tpu_custom_call.1} parent=0
    #allocation2 [shape = 'u8[262144]{0}', space=vmem, size = 0x40000, scoped, tag = 'output window, operand 0']
    #allocation3 [shape = 's32[2]{0}', space=sflag, size = 0x8, scoped, tag = 'scoped memory for tpu_custom_call.1']
    %8 = vsyncpa [#allocation3], 0
    %s9 = scalar_lea.sflag [#allocation3], 1
    %10 = vsyncpa %s9, 0
    loop: start=0, step=1, limit=4
    $region2: #{tpu_custom_call.1} parent=1 // loop_pre_header
      _
    $region3: #{tpu_custom_call.1} parent=1 // loop_header
      %s12 = sphi 0, %s16
      %p13 = scmp.ge.s32.totalorder %s12, 4
      %s19 = sphi 0, %s31
      %s20 = sphi 0, %s27
      %s21 = sphi 0, %s19
      %s22 = sphi 0, %s20
      %s23 = sphi 0, %s21
      %s24 = sphi 0, %s22
      %s34 = sphi 0, %s36
      %s37 = sphi 0, %s34
      %s38 = sphi 0, %s37
      %s54 = sphi 0, %s38
      %s58 = sphi 0, %s58
      %s60 = sphi 0, %s58
      %s61 = sphi 0, %s60
      %s75 = sphi 0, %s61
      %s79 = sphi 0, %s79
      %s81 = sphi 0, %s79
      %s82 = sphi 0, %s81
      %s96 = sphi 0, %s82
      %s104 = sphi 0, %s106
      %s107 = sphi 0, %s104
      %s108 = sphi 0, %s107
      %s124 = sphi 0, %s108
    $region4: #{tpu_custom_call.1} parent=1 // loop_header_branch
      %15 = sbr.rel (%p13) target = $region8
    $region5: #{tpu_custom_call.1} parent=1 // loop_body
      %s17 = ssub.s32 %s12, 1
      %s18 = ssub.s32 %s12, 2
      %s25 = sadd.s32 1, %s20
      %p26 = scmp.ge.s32.totalorder %s25, 1
      %s27 = scalar_select %p26, 0, %s25
      %s28 = sadd.s32 1, %s19
      %s29 = scalar_select %p26, %s28, %s19
      %p30 = scmp.ge.s32.totalorder %s29, 2
      %s31 = scalar_select %p30, 0, %s29
      %s32 = ssub.s32 %s19, %s31
      %p33 = scmp.eq.s32.totalorder %s32, 0
      %s35 = sadd.s32 %s34, 1
      %s36 = scalar_select %p33, %s34, %s35
      %p39 = pneg %p33
      %p40 = scmp.eq.s32.totalorder %s12, 1
      %p41 = por %p39, %p40
      %p42 = scmp.ne.s32.totalorder %s34, %s37
      %p43 = scmp.eq.s32.totalorder %s12, 0
      %p44 = por %p42, %p43
      %p45 = scmp.ne.s32.totalorder %s34, %s37
      %p46 = scmp.eq.s32.totalorder %s17, 1
      %p47 = por %p45, %p46
      %p48 = scmp.ne.s32.totalorder %s37, %s38
      %p49 = scmp.eq.s32.totalorder %s17, 0
      %p50 = por %p48, %p49
      %p51 = scmp.ne.s32.totalorder %s37, %s38
      %p52 = scmp.eq.s32.totalorder %s18, 1
      %p53 = por %p51, %p52
      %p55 = scmp.ne.s32.totalorder %s38, %s54
      %p56 = scmp.eq.s32.totalorder %s18, 0
      %p57 = por %p55, %p56
      %s59 = sadd.s32 %s58, 1
      %p62 = scmp.eq.s32.totalorder %s12, 1
      %p63 = scmp.ne.s32.totalorder %s58, %s60
      %p64 = scmp.eq.s32.totalorder %s12, 0
      %p65 = por %p63, %p64
      %p66 = scmp.ne.s32.totalorder %s58, %s60
      %p67 = scmp.eq.s32.totalorder %s17, 1
      %p68 = por %p66, %p67
      %p69 = scmp.ne.s32.totalorder %s60, %s61
      %p70 = scmp.eq.s32.totalorder %s17, 0
      %p71 = por %p69, %p70
      %p72 = scmp.ne.s32.totalorder %s60, %s61
      %p73 = scmp.eq.s32.totalorder %s18, 1
      %p74 = por %p72, %p73
      %p76 = scmp.ne.s32.totalorder %s61, %s75
      %p77 = scmp.eq.s32.totalorder %s18, 0
      %p78 = por %p76, %p77
      %s80 = sadd.s32 %s79, 1
      %p83 = scmp.eq.s32.totalorder %s12, 1
      %p84 = scmp.ne.s32.totalorder %s79, %s81
      %p85 = scmp.eq.s32.totalorder %s12, 0
      %p86 = por %p84, %p85
      %p87 = scmp.ne.s32.totalorder %s79, %s81
      %p88 = scmp.eq.s32.totalorder %s17, 1
      %p89 = por %p87, %p88
      %p90 = scmp.ne.s32.totalorder %s81, %s82
      %p91 = scmp.eq.s32.totalorder %s17, 0
      %p92 = por %p90, %p91
      %p93 = scmp.ne.s32.totalorder %s81, %s82
      %p94 = scmp.eq.s32.totalorder %s18, 1
      %p95 = por %p93, %p94
      %p97 = scmp.ne.s32.totalorder %s82, %s96
      %p98 = scmp.eq.s32.totalorder %s18, 0
      %p99 = por %p97, %p98
      %s100 = ssub.s32 %s19, %s31
      %s101 = ssub.s32 %s20, %s27
      %s102 = sor.u32 %s100, %s101
      %p103 = scmp.eq.s32.totalorder %s102, 0
      %s105 = sadd.s32 %s104, 1
      %s106 = scalar_select %p103, %s104, %s105
      %p109 = pneg %p103
      %p110 = scmp.eq.s32.totalorder %s12, 1
      %p111 = por %p109, %p110
      %p112 = scmp.ne.s32.totalorder %s104, %s107
      %p113 = scmp.eq.s32.totalorder %s12, 0
      %p114 = por %p112, %p113
      %p115 = scmp.ne.s32.totalorder %s104, %s107
      %p116 = scmp.eq.s32.totalorder %s17, 1
      %p117 = por %p115, %p116
      %p118 = scmp.ne.s32.totalorder %s107, %s108
      %p119 = scmp.eq.s32.totalorder %s17, 0
      %p120 = por %p118, %p119
      %p121 = scmp.ne.s32.totalorder %s107, %s108
      %p122 = scmp.eq.s32.totalorder %s18, 1
      %p123 = por %p121, %p122
      %p125 = scmp.ne.s32.totalorder %s108, %s124
      %p126 = scmp.eq.s32.totalorder %s18, 0
      %p127 = por %p125, %p126
      %p128 = scmp.le.s32.totalorder 1, %s12
      %p129 = scmp.lt.s32.totalorder %s12, 3
      %p130 = pnand %p128, %p129
      %p131 = pneg %p130
      // Predicated region
      $region9: #{tpu_custom_call.1} parent=5 // pred_check
        _
      $region10: #{tpu_custom_call.1} parent=5 // pred_check_branch
        %133 = sbr.rel (%p130) target = $region12
      $region11: #{tpu_custom_call.1} parent=5 // pred_region
        %s134 = ssub.s32 %s12, 1
        // Predicated region
        $region13: #{tpu_custom_call.1} parent=11 // pred_check
          %p135 = pneg %p71
        $region14: #{tpu_custom_call.1} parent=11 // pred_check_branch
          %137 = sbr.rel (%p135) target = $region16
        $region15: #{tpu_custom_call.1} parent=11 // pred_region
          _
        $region16: #{tpu_custom_call.1} parent=11 // pred_fallthru
          _
        // Predicated region
        $region17: #{tpu_custom_call.1} parent=11 // pred_check
          %p138 = pneg %p92
        $region18: #{tpu_custom_call.1} parent=11 // pred_check_branch
          %140 = sbr.rel (%p138) target = $region20
        $region19: #{tpu_custom_call.1} parent=11 // pred_region
          _
        $region20: #{tpu_custom_call.1} parent=11 // pred_fallthru
          _
      $region12: #{tpu_custom_call.1} parent=5 // pred_fallthru
        _
      %p141 = scmp.lt.s32.totalorder %s12, 2
      // Predicated region
      $region21: #{tpu_custom_call.1} parent=5 // pred_check
        %p142 = pneg %p141
      $region22: #{tpu_custom_call.1} parent=5 // pred_check_branch
        %144 = sbr.rel (%p142) target = $region24
      $region23: #{tpu_custom_call.1} parent=5 // pred_region
        // Predicated region
        $region25: #{tpu_custom_call.1} parent=23 // pred_check
          %p145 = pneg %p44
        $region26: #{tpu_custom_call.1} parent=23 // pred_check_branch
          %147 = sbr.rel (%p145) target = $region28
        $region27: #{tpu_custom_call.1} parent=23 // pred_region
          %p148 = scmp.lt.s32.totalorder %s19, 1
          %s149 = scalar_select %p148, %s19, 1
          %s150 = smul.addr %s149, 54
          %s151 = smul.addr %s150, 8
          %s152 = scalar_lea.vmem %s0, %s151
        $region28: #{tpu_custom_call.1} parent=23 // pred_fallthru
          _
      $region24: #{tpu_custom_call.1} parent=5 // pred_fallthru
        _
      %p153 = scmp.le.s32.totalorder 1, %s12
      %p154 = scmp.lt.s32.totalorder %s12, 3
      %p155 = pnand %p153, %p154
      %p156 = pneg %p155
      // Predicated region
      $region29: #{tpu_custom_call.1} parent=5 // pred_check
        _
      $region30: #{tpu_custom_call.1} parent=5 // pred_check_branch
        %158 = sbr.rel (%p155) target = $region32
      $region31: #{tpu_custom_call.1} parent=5 // pred_region
        %s159 = ssub.s32 %s12, 1
        %p160 = scmp.lt.s32.totalorder %s21, 1
        %s161 = scalar_select %p160, %s21, 1
        %s162 = smul.addr %s161, 54
        %s163 = smul.addr %s162, 8
        %s164 = scalar_lea.vmem %s0, %s163
        %p165 = pneg %p50
        %p166 = pneg %p47
        %p167 = pneg %p71
        %p168 = pneg %p68
        %p169 = pneg %p92
        %p170 = pneg %p89
        %p171 = pneg %p120
        %p172 = pneg %p117
        %s173 = sand.u32 %s107, 1
        %s174 = scalar_lea.sflag [#allocation3], %s173
        %s175 = sand.u32 %s107, 1
        %s176 = smul.addr %s175, 256
        %s177 = scalar_lea.vmem [#allocation2], %s176
        %p178 = scmp.lt.s32.totalorder %s21, 1
        %s179 = scalar_select %p178, %s21, 1
        %s180 = smul.addr %s179, 54
        %s181 = smul.addr %s180, 8
        %s182 = scalar_lea.vmem %s0, %s181
        %s183 = smul.u32 16, %s22
        %s184 = smul.u32 %s22, 16
        %s185 = smul.u32 %s184, 24
        %s186 = scalar_lea.vmem %s182, %s185
        %v187 = vld [vmem:[%s186] sm:$0xff]
        %v188 = vld [vmem:[%s186 + $0x8] sm:$0xff]
        %v189 = vld [vmem:[%s186 + $0x18] sm:$0xff]
        %v190 = vld [vmem:[%s186 + $0x20] sm:$0xff]
        %v191 = vld [vmem:[%s186 + $0x30] sm:$0xff]
        %v192 = vld [vmem:[%s186 + $0x38] sm:$0xff]
        %v193 = vld [vmem:[%s186 + $0x48] sm:$0xff]
        %v194 = vld [vmem:[%s186 + $0x50] sm:$0xff]
        %v195 = vld [vmem:[%s186 + $0x60] sm:$0xff]
        %v196 = vld [vmem:[%s186 + $0x68] sm:$0xff]
        %v197 = vld [vmem:[%s186 + $0x78] sm:$0xff]
        %v198 = vld [vmem:[%s186 + $0x80] sm:$0xff]
        %v199 = vld [vmem:[%s186 + $0x90] sm:$0xff]
        %v200 = vld [vmem:[%s186 + $0x98] sm:$0xff]
        %v201 = vld [vmem:[%s186 + $0xa8] sm:$0xff]
        %v202 = vld [vmem:[%s186 + $0xb0] sm:$0xff]
        %v203 = vld [vmem:[%s186 + $0xc0] sm:$0xff]
        %v204 = vld [vmem:[%s186 + $0xc8] sm:$0xff]
        %v205 = vld [vmem:[%s186 + $0xd8] sm:$0xff]
        %v206 = vld [vmem:[%s186 + $0xe0] sm:$0xff]
        %v207 = vld [vmem:[%s186 + $0xf0] sm:$0xff]
        %v208 = vld [vmem:[%s186 + $0xf8] sm:$0xff]
        %v209 = vld [vmem:[%s186 + $0x108] sm:$0xff]
        %v210 = vld [vmem:[%s186 + $0x110] sm:$0xff]
        %v211 = vld [vmem:[%s186 + $0x120] sm:$0xff]
        %v212 = vld [vmem:[%s186 + $0x128] sm:$0xff]
        %v213 = vld [vmem:[%s186 + $0x138] sm:$0xff]
        %v214 = vld [vmem:[%s186 + $0x140] sm:$0xff]
        %v215 = vld [vmem:[%s186 + $0x150] sm:$0xff]
        %v216 = vld [vmem:[%s186 + $0x158] sm:$0xff]
        %v217 = vld [vmem:[%s186 + $0x168] sm:$0xff]
        %v218 = vld [vmem:[%s186 + $0x170] sm:$0xff]
        %v219 = vld [vmem:[%s186 + $0x1] sm:$0xff]
        %v220 = vld [vmem:[%s186 + $0x9] sm:$0xff]
        %v221 = vld [vmem:[%s186 + $0x19] sm:$0xff]
        %v222 = vld [vmem:[%s186 + $0x21] sm:$0xff]
        %v223 = vld [vmem:[%s186 + $0x31] sm:$0xff]
        %v224 = vld [vmem:[%s186 + $0x39] sm:$0xff]
        %v225 = vld [vmem:[%s186 + $0x49] sm:$0xff]
        %v226 = vld [vmem:[%s186 + $0x51] sm:$0xff]
        %v227 = vld [vmem:[%s186 + $0x61] sm:$0xff]
        %v228 = vld [vmem:[%s186 + $0x69] sm:$0xff]
        %v229 = vld [vmem:[%s186 + $0x79] sm:$0xff]
        %v230 = vld [vmem:[%s186 + $0x81] sm:$0xff]
        %v231 = vld [vmem:[%s186 + $0x91] sm:$0xff]
        %v232 = vld [vmem:[%s186 + $0x99] sm:$0xff]
        %v233 = vld [vmem:[%s186 + $0xa9] sm:$0xff]
        %v234 = vld [vmem:[%s186 + $0xb1] sm:$0xff]
        %v235 = vld [vmem:[%s186 + $0xc1] sm:$0xff]
        %v236 = vld [vmem:[%s186 + $0xc9] sm:$0xff]
        %v237 = vld [vmem:[%s186 + $0xd9] sm:$0xff]
        %v238 = vld [vmem:[%s186 + $0xe1] sm:$0xff]
        %v239 = vld [vmem:[%s186 + $0xf1] sm:$0xff]
        %v240 = vld [vmem:[%s186 + $0xf9] sm:$0xff]
        %v241 = vld [vmem:[%s186 + $0x109] sm:$0xff]
        %v242 = vld [vmem:[%s186 + $0x111] sm:$0xff]
        %v243 = vld [vmem:[%s186 + $0x121] sm:$0xff]
        %v244 = vld [vmem:[%s186 + $0x129] sm:$0xff]
        %v245 = vld [vmem:[%s186 + $0x139] sm:$0xff]
        %v246 = vld [vmem:[%s186 + $0x141] sm:$0xff]
        %v247 = vld [vmem:[%s186 + $0x151] sm:$0xff]
        %v248 = vld [vmem:[%s186 + $0x159] sm:$0xff]
        %v249 = vld [vmem:[%s186 + $0x169] sm:$0xff]
        %v250 = vld [vmem:[%s186 + $0x171] sm:$0xff]
        %v251 = vld [vmem:[%s186 + $0x2] sm:$0xff]
        %v252 = vld [vmem:[%s186 + $0xa] sm:$0xff]
        %v253 = vld [vmem:[%s186 + $0x1a] sm:$0xff]
        %v254 = vld [vmem:[%s186 + $0x22] sm:$0xff]
        %v255 = vld [vmem:[%s186 + $0x32] sm:$0xff]
        %v256 = vld [vmem:[%s186 + $0x3a] sm:$0xff]
        %v257 = vld [vmem:[%s186 + $0x4a] sm:$0xff]
        %v258 = vld [vmem:[%s186 + $0x52] sm:$0xff]
        %v259 = vld [vmem:[%s186 + $0x62] sm:$0xff]
        %v260 = vld [vmem:[%s186 + $0x6a] sm:$0xff]
        %v261 = vld [vmem:[%s186 + $0x7a] sm:$0xff]
        %v262 = vld [vmem:[%s186 + $0x82] sm:$0xff]
        %v263 = vld [vmem:[%s186 + $0x92] sm:$0xff]
        %v264 = vld [vmem:[%s186 + $0x9a] sm:$0xff]
        %v265 = vld [vmem:[%s186 + $0xaa] sm:$0xff]
        %v266 = vld [vmem:[%s186 + $0xb2] sm:$0xff]
        %v267 = vld [vmem:[%s186 + $0xc2] sm:$0xff]
        %v268 = vld [vmem:[%s186 + $0xca] sm:$0xff]
        %v269 = vld [vmem:[%s186 + $0xda] sm:$0xff]
        %v270 = vld [vmem:[%s186 + $0xe2] sm:$0xff]
        %v271 = vld [vmem:[%s186 + $0xf2] sm:$0xff]
        %v272 = vld [vmem:[%s186 + $0xfa] sm:$0xff]
        %v273 = vld [vmem:[%s186 + $0x10a] sm:$0xff]
        %v274 = vld [vmem:[%s186 + $0x112] sm:$0xff]
        %v275 = vld [vmem:[%s186 + $0x122] sm:$0xff]
        %v276 = vld [vmem:[%s186 + $0x12a] sm:$0xff]
        %v277 = vld [vmem:[%s186 + $0x13a] sm:$0xff]
        %v278 = vld [vmem:[%s186 + $0x142] sm:$0xff]
        %v279 = vld [vmem:[%s186 + $0x152] sm:$0xff]
        %v280 = vld [vmem:[%s186 + $0x15a] sm:$0xff]
        %v281 = vld [vmem:[%s186 + $0x16a] sm:$0xff]
        %v282 = vld [vmem:[%s186 + $0x172] sm:$0xff]
        %s283 = sadd.s32 %s184, 1
        %s284 = smul.u32 %s283, 24
        %s285 = scalar_lea.vmem %s182, %s284
        %v286 = vld [vmem:[%s285] sm:$0xff]
        %v287 = vld [vmem:[%s285 + $0x8] sm:$0xff]
        %v288 = vld [vmem:[%s285 + $0x18] sm:$0xff]
        %v289 = vld [vmem:[%s285 + $0x20] sm:$0xff]
        %v290 = vld [vmem:[%s285 + $0x30] sm:$0xff]
        %v291 = vld [vmem:[%s285 + $0x38] sm:$0xff]
        %v292 = vld [vmem:[%s285 + $0x48] sm:$0xff]
        %v293 = vld [vmem:[%s285 + $0x50] sm:$0xff]
        %v294 = vld [vmem:[%s285 + $0x60] sm:$0xff]
        %v295 = vld [vmem:[%s285 + $0x68] sm:$0xff]
        %v296 = vld [vmem:[%s285 + $0x78] sm:$0xff]
        %v297 = vld [vmem:[%s285 + $0x80] sm:$0xff]
        %v298 = vld [vmem:[%s285 + $0x90] sm:$0xff]
        %v299 = vld [vmem:[%s285 + $0x98] sm:$0xff]
        %v300 = vld [vmem:[%s285 + $0xa8] sm:$0xff]
        %v301 = vld [vmem:[%s285 + $0xb0] sm:$0xff]
        %v302 = vld [vmem:[%s285 + $0xc0] sm:$0xff]
        %v303 = vld [vmem:[%s285 + $0xc8] sm:$0xff]
        %v304 = vld [vmem:[%s285 + $0xd8] sm:$0xff]
        %v305 = vld [vmem:[%s285 + $0xe0] sm:$0xff]
        %v306 = vld [vmem:[%s285 + $0xf0] sm:$0xff]
        %v307 = vld [vmem:[%s285 + $0xf8] sm:$0xff]
        %v308 = vld [vmem:[%s285 + $0x108] sm:$0xff]
        %v309 = vld [vmem:[%s285 + $0x110] sm:$0xff]
        %v310 = vld [vmem:[%s285 + $0x120] sm:$0xff]
        %v311 = vld [vmem:[%s285 + $0x128] sm:$0xff]
        %v312 = vld [vmem:[%s285 + $0x138] sm:$0xff]
        %v313 = vld [vmem:[%s285 + $0x140] sm:$0xff]
        %v314 = vld [vmem:[%s285 + $0x150] sm:$0xff]
        %v315 = vld [vmem:[%s285 + $0x158] sm:$0xff]
        %v316 = vld [vmem:[%s285 + $0x168] sm:$0xff]
        %v317 = vld [vmem:[%s285 + $0x170] sm:$0xff]
        %v318 = vld [vmem:[%s285 + $0x1] sm:$0xff]
        %v319 = vld [vmem:[%s285 + $0x9] sm:$0xff]
        %v320 = vld [vmem:[%s285 + $0x19] sm:$0xff]
        %v321 = vld [vmem:[%s285 + $0x21] sm:$0xff]
        %v322 = vld [vmem:[%s285 + $0x31] sm:$0xff]
        %v323 = vld [vmem:[%s285 + $0x39] sm:$0xff]
        %v324 = vld [vmem:[%s285 + $0x49] sm:$0xff]
        %v325 = vld [vmem:[%s285 + $0x51] sm:$0xff]
        %v326 = vld [vmem:[%s285 + $0x61] sm:$0xff]
        %v327 = vld [vmem:[%s285 + $0x69] sm:$0xff]
        %v328 = vld [vmem:[%s285 + $0x79] sm:$0xff]
        %v329 = vld [vmem:[%s285 + $0x81] sm:$0xff]
        %v330 = vld [vmem:[%s285 + $0x91] sm:$0xff]
        %v331 = vld [vmem:[%s285 + $0x99] sm:$0xff]
        %v332 = vld [vmem:[%s285 + $0xa9] sm:$0xff]
        %v333 = vld [vmem:[%s285 + $0xb1] sm:$0xff]
        %v334 = vld [vmem:[%s285 + $0xc1] sm:$0xff]
        %v335 = vld [vmem:[%s285 + $0xc9] sm:$0xff]
        %v336 = vld [vmem:[%s285 + $0xd9] sm:$0xff]
        %v337 = vld [vmem:[%s285 + $0xe1] sm:$0xff]
        %v338 = vld [vmem:[%s285 + $0xf1] sm:$0xff]
        %v339 = vld [vmem:[%s285 + $0xf9] sm:$0xff]
        %v340 = vld [vmem:[%s285 + $0x109] sm:$0xff]
        %v341 = vld [vmem:[%s285 + $0x111] sm:$0xff]
        %v342 = vld [vmem:[%s285 + $0x121] sm:$0xff]
        %v343 = vld [vmem:[%s285 + $0x129] sm:$0xff]
        %v344 = vld [vmem:[%s285 + $0x139] sm:$0xff]
        %v345 = vld [vmem:[%s285 + $0x141] sm:$0xff]
        %v346 = vld [vmem:[%s285 + $0x151] sm:$0xff]
        %v347 = vld [vmem:[%s285 + $0x159] sm:$0xff]
        %v348 = vld [vmem:[%s285 + $0x169] sm:$0xff]
        %v349 = vld [vmem:[%s285 + $0x171] sm:$0xff]
        %v350 = vld [vmem:[%s285 + $0x2] sm:$0xff]
        %v351 = vld [vmem:[%s285 + $0xa] sm:$0xff]
        %v352 = vld [vmem:[%s285 + $0x1a] sm:$0xff]
        %v353 = vld [vmem:[%s285 + $0x22] sm:$0xff]
        %v354 = vld [vmem:[%s285 + $0x32] sm:$0xff]
        %v355 = vld [vmem:[%s285 + $0x3a] sm:$0xff]
        %v356 = vld [vmem:[%s285 + $0x4a] sm:$0xff]
        %v357 = vld [vmem:[%s285 + $0x52] sm:$0xff]
        %v358 = vld [vmem:[%s285 + $0x62] sm:$0xff]
        %v359 = vld [vmem:[%s285 + $0x6a] sm:$0xff]
        %v360 = vld [vmem:[%s285 + $0x7a] sm:$0xff]
        %v361 = vld [vmem:[%s285 + $0x82] sm:$0xff]
        %v362 = vld [vmem:[%s285 + $0x92] sm:$0xff]
        %v363 = vld [vmem:[%s285 + $0x9a] sm:$0xff]
        %v364 = vld [vmem:[%s285 + $0xaa] sm:$0xff]
        %v365 = vld [vmem:[%s285 + $0xb2] sm:$0xff]
        %v366 = vld [vmem:[%s285 + $0xc2] sm:$0xff]
        %v367 = vld [vmem:[%s285 + $0xca] sm:$0xff]
        %v368 = vld [vmem:[%s285 + $0xda] sm:$0xff]
        %v369 = vld [vmem:[%s285 + $0xe2] sm:$0xff]
        %v370 = vld [vmem:[%s285 + $0xf2] sm:$0xff]
        %v371 = vld [vmem:[%s285 + $0xfa] sm:$0xff]
        %v372 = vld [vmem:[%s285 + $0x10a] sm:$0xff]
        %v373 = vld [vmem:[%s285 + $0x112] sm:$0xff]
        %v374 = vld [vmem:[%s285 + $0x122] sm:$0xff]
        %v375 = vld [vmem:[%s285 + $0x12a] sm:$0xff]
        %v376 = vld [vmem:[%s285 + $0x13a] sm:$0xff]
        %v377 = vld [vmem:[%s285 + $0x142] sm:$0xff]
        %v378 = vld [vmem:[%s285 + $0x152] sm:$0xff]
        %v379 = vld [vmem:[%s285 + $0x15a] sm:$0xff]
        %v380 = vld [vmem:[%s285 + $0x16a] sm:$0xff]
        %v381 = vld [vmem:[%s285 + $0x172] sm:$0xff]
        %s382 = sadd.s32 %s184, 2
        %s383 = smul.u32 %s382, 24
        %s384 = scalar_lea.vmem %s182, %s383
        %v385 = vld [vmem:[%s384] sm:$0xff]
        %v386 = vld [vmem:[%s384 + $0x8] sm:$0xff]
        %v387 = vld [vmem:[%s384 + $0x18] sm:$0xff]
        %v388 = vld [vmem:[%s384 + $0x20] sm:$0xff]
        %v389 = vld [vmem:[%s384 + $0x30] sm:$0xff]
        %v390 = vld [vmem:[%s384 + $0x38] sm:$0xff]
        %v391 = vld [vmem:[%s384 + $0x48] sm:$0xff]
        %v392 = vld [vmem:[%s384 + $0x50] sm:$0xff]
        %v393 = vld [vmem:[%s384 + $0x60] sm:$0xff]
        %v394 = vld [vmem:[%s384 + $0x68] sm:$0xff]
        %v395 = vld [vmem:[%s384 + $0x78] sm:$0xff]
        %v396 = vld [vmem:[%s384 + $0x80] sm:$0xff]
        %v397 = vld [vmem:[%s384 + $0x90] sm:$0xff]
        %v398 = vld [vmem:[%s384 + $0x98] sm:$0xff]
        %v399 = vld [vmem:[%s384 + $0xa8] sm:$0xff]
        %v400 = vld [vmem:[%s384 + $0xb0] sm:$0xff]
        %v401 = vld [vmem:[%s384 + $0xc0] sm:$0xff]
        %v402 = vld [vmem:[%s384 + $0xc8] sm:$0xff]
        %v403 = vld [vmem:[%s384 + $0xd8] sm:$0xff]
        %v404 = vld [vmem:[%s384 + $0xe0] sm:$0xff]
        %v405 = vld [vmem:[%s384 + $0xf0] sm:$0xff]
        %v406 = vld [vmem:[%s384 + $0xf8] sm:$0xff]
        %v407 = vld [vmem:[%s384 + $0x108] sm:$0xff]
        %v408 = vld [vmem:[%s384 + $0x110] sm:$0xff]
        %v409 = vld [vmem:[%s384 + $0x120] sm:$0xff]
        %v410 = vld [vmem:[%s384 + $0x128] sm:$0xff]
        %v411 = vld [vmem:[%s384 + $0x138] sm:$0xff]
        %v412 = vld [vmem:[%s384 + $0x140] sm:$0xff]
        %v413 = vld [vmem:[%s384 + $0x150] sm:$0xff]
        %v414 = vld [vmem:[%s384 + $0x158] sm:$0xff]
        %v415 = vld [vmem:[%s384 + $0x168] sm:$0xff]
        %v416 = vld [vmem:[%s384 + $0x170] sm:$0xff]
        %v417 = vld [vmem:[%s384 + $0x1] sm:$0xff]
        %v418 = vld [vmem:[%s384 + $0x9] sm:$0xff]
        %v419 = vld [vmem:[%s384 + $0x19] sm:$0xff]
        %v420 = vld [vmem:[%s384 + $0x21] sm:$0xff]
        %v421 = vld [vmem:[%s384 + $0x31] sm:$0xff]
        %v422 = vld [vmem:[%s384 + $0x39] sm:$0xff]
        %v423 = vld [vmem:[%s384 + $0x49] sm:$0xff]
        %v424 = vld [vmem:[%s384 + $0x51] sm:$0xff]
        %v425 = vld [vmem:[%s384 + $0x61] sm:$0xff]
        %v426 = vld [vmem:[%s384 + $0x69] sm:$0xff]
        %v427 = vld [vmem:[%s384 + $0x79] sm:$0xff]
        %v428 = vld [vmem:[%s384 + $0x81] sm:$0xff]
        %v429 = vld [vmem:[%s384 + $0x91] sm:$0xff]
        %v430 = vld [vmem:[%s384 + $0x99] sm:$0xff]
        %v431 = vld [vmem:[%s384 + $0xa9] sm:$0xff]
        %v432 = vld [vmem:[%s384 + $0xb1] sm:$0xff]
        %v433 = vld [vmem:[%s384 + $0xc1] sm:$0xff]
        %v434 = vld [vmem:[%s384 + $0xc9] sm:$0xff]
        %v435 = vld [vmem:[%s384 + $0xd9] sm:$0xff]
        %v436 = vld [vmem:[%s384 + $0xe1] sm:$0xff]
        %v437 = vld [vmem:[%s384 + $0xf1] sm:$0xff]
        %v438 = vld [vmem:[%s384 + $0xf9] sm:$0xff]
        %v439 = vld [vmem:[%s384 + $0x109] sm:$0xff]
        %v440 = vld [vmem:[%s384 + $0x111] sm:$0xff]
        %v441 = vld [vmem:[%s384 + $0x121] sm:$0xff]
        %v442 = vld [vmem:[%s384 + $0x129] sm:$0xff]
        %v443 = vld [vmem:[%s384 + $0x139] sm:$0xff]
        %v444 = vld [vmem:[%s384 + $0x141] sm:$0xff]
        %v445 = vld [vmem:[%s384 + $0x151] sm:$0xff]
        %v446 = vld [vmem:[%s384 + $0x159] sm:$0xff]
        %v447 = vld [vmem:[%s384 + $0x169] sm:$0xff]
        %v448 = vld [vmem:[%s384 + $0x171] sm:$0xff]
        %v449 = vld [vmem:[%s384 + $0x2] sm:$0xff]
        %v450 = vld [vmem:[%s384 + $0xa] sm:$0xff]
        %v451 = vld [vmem:[%s384 + $0x1a] sm:$0xff]
        %v452 = vld [vmem:[%s384 + $0x22] sm:$0xff]
        %v453 = vld [vmem:[%s384 + $0x32] sm:$0xff]
        %v454 = vld [vmem:[%s384 + $0x3a] sm:$0xff]
        %v455 = vld [vmem:[%s384 + $0x4a] sm:$0xff]
        %v456 = vld [vmem:[%s384 + $0x52] sm:$0xff]
        %v457 = vld [vmem:[%s384 + $0x62] sm:$0xff]
        %v458 = vld [vmem:[%s384 + $0x6a] sm:$0xff]
        %v459 = vld [vmem:[%s384 + $0x7a] sm:$0xff]
        %v460 = vld [vmem:[%s384 + $0x82] sm:$0xff]
        %v461 = vld [vmem:[%s384 + $0x92] sm:$0xff]
        %v462 = vld [vmem:[%s384 + $0x9a] sm:$0xff]
        %v463 = vld [vmem:[%s384 + $0xaa] sm:$0xff]
        %v464 = vld [vmem:[%s384 + $0xb2] sm:$0xff]
        %v465 = vld [vmem:[%s384 + $0xc2] sm:$0xff]
        %v466 = vld [vmem:[%s384 + $0xca] sm:$0xff]
        %v467 = vld [vmem:[%s384 + $0xda] sm:$0xff]
        %v468 = vld [vmem:[%s384 + $0xe2] sm:$0xff]
        %v469 = vld [vmem:[%s384 + $0xf2] sm:$0xff]
        %v470 = vld [vmem:[%s384 + $0xfa] sm:$0xff]
        %v471 = vld [vmem:[%s384 + $0x10a] sm:$0xff]
        %v472 = vld [vmem:[%s384 + $0x112] sm:$0xff]
        %v473 = vld [vmem:[%s384 + $0x122] sm:$0xff]
        %v474 = vld [vmem:[%s384 + $0x12a] sm:$0xff]
        %v475 = vld [vmem:[%s384 + $0x13a] sm:$0xff]
        %v476 = vld [vmem:[%s384 + $0x142] sm:$0xff]
        %v477 = vld [vmem:[%s384 + $0x152] sm:$0xff]
        %v478 = vld [vmem:[%s384 + $0x15a] sm:$0xff]
        %v479 = vld [vmem:[%s384 + $0x16a] sm:$0xff]
        %v480 = vld [vmem:[%s384 + $0x172] sm:$0xff]
        %513 = vrot.lane.b32.xlu0 %v219, 4
        %v514 = vpop.permute.xlu0 %513
        %515 = vrot.lane.b32.xlu0 %v220, 4
        %v516 = vpop.permute.xlu0 %515
        %517 = vrot.lane.b32.xlu0 %v221, 4
        %v518 = vpop.permute.xlu0 %517
        %519 = vrot.lane.b32.xlu0 %v222, 4
        %v520 = vpop.permute.xlu0 %519
        %521 = vrot.lane.b32.xlu0 %v223, 4
        %v522 = vpop.permute.xlu0 %521
        %523 = vrot.lane.b32.xlu0 %v224, 4
        %v524 = vpop.permute.xlu0 %523
        %525 = vrot.lane.b32.xlu0 %v225, 4
        %v526 = vpop.permute.xlu0 %525
        %527 = vrot.lane.b32.xlu0 %v226, 4
        %v528 = vpop.permute.xlu0 %527
        %529 = vrot.lane.b32.xlu0 %v227, 4
        %v530 = vpop.permute.xlu0 %529
        %531 = vrot.lane.b32.xlu0 %v228, 4
        %v532 = vpop.permute.xlu0 %531
        %533 = vrot.lane.b32.xlu0 %v229, 4
        %v534 = vpop.permute.xlu0 %533
        %535 = vrot.lane.b32.xlu0 %v230, 4
        %v536 = vpop.permute.xlu0 %535
        %537 = vrot.lane.b32.xlu0 %v231, 4
        %v538 = vpop.permute.xlu0 %537
        %539 = vrot.lane.b32.xlu0 %v232, 4
        %v540 = vpop.permute.xlu0 %539
        %541 = vrot.lane.b32.xlu0 %v233, 4
        %v542 = vpop.permute.xlu0 %541
        %543 = vrot.lane.b32.xlu0 %v234, 4
        %v544 = vpop.permute.xlu0 %543
        %545 = vrot.lane.b32.xlu0 %v235, 4
        %v546 = vpop.permute.xlu0 %545
        %547 = vrot.lane.b32.xlu0 %v236, 4
        %v548 = vpop.permute.xlu0 %547
        %549 = vrot.lane.b32.xlu0 %v237, 4
        %v550 = vpop.permute.xlu0 %549
        %551 = vrot.lane.b32.xlu0 %v238, 4
        %v552 = vpop.permute.xlu0 %551
        %553 = vrot.lane.b32.xlu0 %v239, 4
        %v554 = vpop.permute.xlu0 %553
        %555 = vrot.lane.b32.xlu0 %v240, 4
        %v556 = vpop.permute.xlu0 %555
        %557 = vrot.lane.b32.xlu0 %v241, 4
        %v558 = vpop.permute.xlu0 %557
        %559 = vrot.lane.b32.xlu0 %v242, 4
        %v560 = vpop.permute.xlu0 %559
        %561 = vrot.lane.b32.xlu0 %v243, 4
        %v562 = vpop.permute.xlu0 %561
        %563 = vrot.lane.b32.xlu0 %v244, 4
        %v564 = vpop.permute.xlu0 %563
        %565 = vrot.lane.b32.xlu0 %v245, 4
        %v566 = vpop.permute.xlu0 %565
        %567 = vrot.lane.b32.xlu0 %v246, 4
        %v568 = vpop.permute.xlu0 %567
        %569 = vrot.lane.b32.xlu0 %v247, 4
        %v570 = vpop.permute.xlu0 %569
        %571 = vrot.lane.b32.xlu0 %v248, 4
        %v572 = vpop.permute.xlu0 %571
        %573 = vrot.lane.b32.xlu0 %v249, 4
        %v574 = vpop.permute.xlu0 %573
        %575 = vrot.lane.b32.xlu0 %v250, 4
        %v576 = vpop.permute.xlu0 %575
        %641 = vrot.lane.b32.xlu0 %v251, 8
        %v642 = vpop.permute.xlu0 %641
        %643 = vrot.lane.b32.xlu0 %v252, 8
        %v644 = vpop.permute.xlu0 %643
        %645 = vrot.lane.b32.xlu0 %v253, 8
        %v646 = vpop.permute.xlu0 %645
        %647 = vrot.lane.b32.xlu0 %v254, 8
        %v648 = vpop.permute.xlu0 %647
        %649 = vrot.lane.b32.xlu0 %v255, 8
        %v650 = vpop.permute.xlu0 %649
        %651 = vrot.lane.b32.xlu0 %v256, 8
        %v652 = vpop.permute.xlu0 %651
        %653 = vrot.lane.b32.xlu0 %v257, 8
        %v654 = vpop.permute.xlu0 %653
        %655 = vrot.lane.b32.xlu0 %v258, 8
        %v656 = vpop.permute.xlu0 %655
        %657 = vrot.lane.b32.xlu0 %v259, 8
        %v658 = vpop.permute.xlu0 %657
        %659 = vrot.lane.b32.xlu0 %v260, 8
        %v660 = vpop.permute.xlu0 %659
        %661 = vrot.lane.b32.xlu0 %v261, 8
        %v662 = vpop.permute.xlu0 %661
        %663 = vrot.lane.b32.xlu0 %v262, 8
        %v664 = vpop.permute.xlu0 %663
        %665 = vrot.lane.b32.xlu0 %v263, 8
        %v666 = vpop.permute.xlu0 %665
        %667 = vrot.lane.b32.xlu0 %v264, 8
        %v668 = vpop.permute.xlu0 %667
        %669 = vrot.lane.b32.xlu0 %v265, 8
        %v670 = vpop.permute.xlu0 %669
        %671 = vrot.lane.b32.xlu0 %v266, 8
        %v672 = vpop.permute.xlu0 %671
        %673 = vrot.lane.b32.xlu0 %v267, 8
        %v674 = vpop.permute.xlu0 %673
        %675 = vrot.lane.b32.xlu0 %v268, 8
        %v676 = vpop.permute.xlu0 %675
        %677 = vrot.lane.b32.xlu0 %v269, 8
        %v678 = vpop.permute.xlu0 %677
        %679 = vrot.lane.b32.xlu0 %v270, 8
        %v680 = vpop.permute.xlu0 %679
        %681 = vrot.lane.b32.xlu0 %v271, 8
        %v682 = vpop.permute.xlu0 %681
        %683 = vrot.lane.b32.xlu0 %v272, 8
        %v684 = vpop.permute.xlu0 %683
        %685 = vrot.lane.b32.xlu0 %v273, 8
        %v686 = vpop.permute.xlu0 %685
        %687 = vrot.lane.b32.xlu0 %v274, 8
        %v688 = vpop.permute.xlu0 %687
        %689 = vrot.lane.b32.xlu0 %v275, 8
        %v690 = vpop.permute.xlu0 %689
        %691 = vrot.lane.b32.xlu0 %v276, 8
        %v692 = vpop.permute.xlu0 %691
        %693 = vrot.lane.b32.xlu0 %v277, 8
        %v694 = vpop.permute.xlu0 %693
        %695 = vrot.lane.b32.xlu0 %v278, 8
        %v696 = vpop.permute.xlu0 %695
        %697 = vrot.lane.b32.xlu0 %v279, 8
        %v698 = vpop.permute.xlu0 %697
        %699 = vrot.lane.b32.xlu0 %v280, 8
        %v700 = vpop.permute.xlu0 %699
        %701 = vrot.lane.b32.xlu0 %v281, 8
        %v702 = vpop.permute.xlu0 %701
        %703 = vrot.lane.b32.xlu0 %v282, 8
        %v704 = vpop.permute.xlu0 %703
        %769 = vrot.lane.b32.xlu0 %v286, 12
        %v770 = vpop.permute.xlu0 %769
        %771 = vrot.lane.b32.xlu0 %v287, 12
        %v772 = vpop.permute.xlu0 %771
        %773 = vrot.lane.b32.xlu0 %v288, 12
        %v774 = vpop.permute.xlu0 %773
        %775 = vrot.lane.b32.xlu0 %v289, 12
        %v776 = vpop.permute.xlu0 %775
        %777 = vrot.lane.b32.xlu0 %v290, 12
        %v778 = vpop.permute.xlu0 %777
        %779 = vrot.lane.b32.xlu0 %v291, 12
        %v780 = vpop.permute.xlu0 %779
        %781 = vrot.lane.b32.xlu0 %v292, 12
        %v782 = vpop.permute.xlu0 %781
        %783 = vrot.lane.b32.xlu0 %v293, 12
        %v784 = vpop.permute.xlu0 %783
        %785 = vrot.lane.b32.xlu0 %v294, 12
        %v786 = vpop.permute.xlu0 %785
        %787 = vrot.lane.b32.xlu0 %v295, 12
        %v788 = vpop.permute.xlu0 %787
        %789 = vrot.lane.b32.xlu0 %v296, 12
        %v790 = vpop.permute.xlu0 %789
        %791 = vrot.lane.b32.xlu0 %v297, 12
        %v792 = vpop.permute.xlu0 %791
        %793 = vrot.lane.b32.xlu0 %v298, 12
        %v794 = vpop.permute.xlu0 %793
        %795 = vrot.lane.b32.xlu0 %v299, 12
        %v796 = vpop.permute.xlu0 %795
        %797 = vrot.lane.b32.xlu0 %v300, 12
        %v798 = vpop.permute.xlu0 %797
        %799 = vrot.lane.b32.xlu0 %v301, 12
        %v800 = vpop.permute.xlu0 %799
        %801 = vrot.lane.b32.xlu0 %v302, 12
        %v802 = vpop.permute.xlu0 %801
        %803 = vrot.lane.b32.xlu0 %v303, 12
        %v804 = vpop.permute.xlu0 %803
        %805 = vrot.lane.b32.xlu0 %v304, 12
        %v806 = vpop.permute.xlu0 %805
        %807 = vrot.lane.b32.xlu0 %v305, 12
        %v808 = vpop.permute.xlu0 %807
        %809 = vrot.lane.b32.xlu0 %v306, 12
        %v810 = vpop.permute.xlu0 %809
        %811 = vrot.lane.b32.xlu0 %v307, 12
        %v812 = vpop.permute.xlu0 %811
        %813 = vrot.lane.b32.xlu0 %v308, 12
        %v814 = vpop.permute.xlu0 %813
        %815 = vrot.lane.b32.xlu0 %v309, 12
        %v816 = vpop.permute.xlu0 %815
        %817 = vrot.lane.b32.xlu0 %v310, 12
        %v818 = vpop.permute.xlu0 %817
        %819 = vrot.lane.b32.xlu0 %v311, 12
        %v820 = vpop.permute.xlu0 %819
        %821 = vrot.lane.b32.xlu0 %v312, 12
        %v822 = vpop.permute.xlu0 %821
        %823 = vrot.lane.b32.xlu0 %v313, 12
        %v824 = vpop.permute.xlu0 %823
        %825 = vrot.lane.b32.xlu0 %v314, 12
        %v826 = vpop.permute.xlu0 %825
        %827 = vrot.lane.b32.xlu0 %v315, 12
        %v828 = vpop.permute.xlu0 %827
        %829 = vrot.lane.b32.xlu0 %v316, 12
        %v830 = vpop.permute.xlu0 %829
        %831 = vrot.lane.b32.xlu0 %v317, 12
        %v832 = vpop.permute.xlu0 %831
        %897 = vrot.lane.b32.xlu0 %v318, 16
        %v898 = vpop.permute.xlu0 %897
        %899 = vrot.lane.b32.xlu0 %v319, 16
        %v900 = vpop.permute.xlu0 %899
        %901 = vrot.lane.b32.xlu0 %v320, 16
        %v902 = vpop.permute.xlu0 %901
        %903 = vrot.lane.b32.xlu0 %v321, 16
        %v904 = vpop.permute.xlu0 %903
        %905 = vrot.lane.b32.xlu0 %v322, 16
        %v906 = vpop.permute.xlu0 %905
        %907 = vrot.lane.b32.xlu0 %v323, 16
        %v908 = vpop.permute.xlu0 %907
        %909 = vrot.lane.b32.xlu0 %v324, 16
        %v910 = vpop.permute.xlu0 %909
        %911 = vrot.lane.b32.xlu0 %v325, 16
        %v912 = vpop.permute.xlu0 %911
        %913 = vrot.lane.b32.xlu0 %v326, 16
        %v914 = vpop.permute.xlu0 %913
        %915 = vrot.lane.b32.xlu0 %v327, 16
        %v916 = vpop.permute.xlu0 %915
        %917 = vrot.lane.b32.xlu0 %v328, 16
        %v918 = vpop.permute.xlu0 %917
        %919 = vrot.lane.b32.xlu0 %v329, 16
        %v920 = vpop.permute.xlu0 %919
        %921 = vrot.lane.b32.xlu0 %v330, 16
        %v922 = vpop.permute.xlu0 %921
        %923 = vrot.lane.b32.xlu0 %v331, 16
        %v924 = vpop.permute.xlu0 %923
        %925 = vrot.lane.b32.xlu0 %v332, 16
        %v926 = vpop.permute.xlu0 %925
        %927 = vrot.lane.b32.xlu0 %v333, 16
        %v928 = vpop.permute.xlu0 %927
        %929 = vrot.lane.b32.xlu0 %v334, 16
        %v930 = vpop.permute.xlu0 %929
        %931 = vrot.lane.b32.xlu0 %v335, 16
        %v932 = vpop.permute.xlu0 %931
        %933 = vrot.lane.b32.xlu0 %v336, 16
        %v934 = vpop.permute.xlu0 %933
        %935 = vrot.lane.b32.xlu0 %v337, 16
        %v936 = vpop.permute.xlu0 %935
        %937 = vrot.lane.b32.xlu0 %v338, 16
        %v938 = vpop.permute.xlu0 %937
        %939 = vrot.lane.b32.xlu0 %v339, 16
        %v940 = vpop.permute.xlu0 %939
        %941 = vrot.lane.b32.xlu0 %v340, 16
        %v942 = vpop.permute.xlu0 %941
        %943 = vrot.lane.b32.xlu0 %v341, 16
        %v944 = vpop.permute.xlu0 %943
        %945 = vrot.lane.b32.xlu0 %v342, 16
        %v946 = vpop.permute.xlu0 %945
        %947 = vrot.lane.b32.xlu0 %v343, 16
        %v948 = vpop.permute.xlu0 %947
        %949 = vrot.lane.b32.xlu0 %v344, 16
        %v950 = vpop.permute.xlu0 %949
        %951 = vrot.lane.b32.xlu0 %v345, 16
        %v952 = vpop.permute.xlu0 %951
        %953 = vrot.lane.b32.xlu0 %v346, 16
        %v954 = vpop.permute.xlu0 %953
        %955 = vrot.lane.b32.xlu0 %v347, 16
        %v956 = vpop.permute.xlu0 %955
        %957 = vrot.lane.b32.xlu0 %v348, 16
        %v958 = vpop.permute.xlu0 %957
        %959 = vrot.lane.b32.xlu0 %v349, 16
        %v960 = vpop.permute.xlu0 %959
        %1025 = vrot.lane.b32.xlu0 %v350, 20
        %v1026 = vpop.permute.xlu0 %1025
        %1027 = vrot.lane.b32.xlu0 %v351, 20
        %v1028 = vpop.permute.xlu0 %1027
        %1029 = vrot.lane.b32.xlu0 %v352, 20
        %v1030 = vpop.permute.xlu0 %1029
        %1031 = vrot.lane.b32.xlu0 %v353, 20
        %v1032 = vpop.permute.xlu0 %1031
        %1033 = vrot.lane.b32.xlu0 %v354, 20
        %v1034 = vpop.permute.xlu0 %1033
        %1035 = vrot.lane.b32.xlu0 %v355, 20
        %v1036 = vpop.permute.xlu0 %1035
        %1037 = vrot.lane.b32.xlu0 %v356, 20
        %v1038 = vpop.permute.xlu0 %1037
        %1039 = vrot.lane.b32.xlu0 %v357, 20
        %v1040 = vpop.permute.xlu0 %1039
        %1041 = vrot.lane.b32.xlu0 %v358, 20
        %v1042 = vpop.permute.xlu0 %1041
        %1043 = vrot.lane.b32.xlu0 %v359, 20
        %v1044 = vpop.permute.xlu0 %1043
        %1045 = vrot.lane.b32.xlu0 %v360, 20
        %v1046 = vpop.permute.xlu0 %1045
        %1047 = vrot.lane.b32.xlu0 %v361, 20
        %v1048 = vpop.permute.xlu0 %1047
        %1049 = vrot.lane.b32.xlu0 %v362, 20
        %v1050 = vpop.permute.xlu0 %1049
        %1051 = vrot.lane.b32.xlu0 %v363, 20
        %v1052 = vpop.permute.xlu0 %1051
        %1053 = vrot.lane.b32.xlu0 %v364, 20
        %v1054 = vpop.permute.xlu0 %1053
        %1055 = vrot.lane.b32.xlu0 %v365, 20
        %v1056 = vpop.permute.xlu0 %1055
        %1057 = vrot.lane.b32.xlu0 %v366, 20
        %v1058 = vpop.permute.xlu0 %1057
        %1059 = vrot.lane.b32.xlu0 %v367, 20
        %v1060 = vpop.permute.xlu0 %1059
        %1061 = vrot.lane.b32.xlu0 %v368, 20
        %v1062 = vpop.permute.xlu0 %1061
        %1063 = vrot.lane.b32.xlu0 %v369, 20
        %v1064 = vpop.permute.xlu0 %1063
        %1065 = vrot.lane.b32.xlu0 %v370, 20
        %v1066 = vpop.permute.xlu0 %1065
        %1067 = vrot.lane.b32.xlu0 %v371, 20
        %v1068 = vpop.permute.xlu0 %1067
        %1069 = vrot.lane.b32.xlu0 %v372, 20
        %v1070 = vpop.permute.xlu0 %1069
        %1071 = vrot.lane.b32.xlu0 %v373, 20
        %v1072 = vpop.permute.xlu0 %1071
        %1073 = vrot.lane.b32.xlu0 %v374, 20
        %v1074 = vpop.permute.xlu0 %1073
        %1075 = vrot.lane.b32.xlu0 %v375, 20
        %v1076 = vpop.permute.xlu0 %1075
        %1077 = vrot.lane.b32.xlu0 %v376, 20
        %v1078 = vpop.permute.xlu0 %1077
        %1079 = vrot.lane.b32.xlu0 %v377, 20
        %v1080 = vpop.permute.xlu0 %1079
        %1081 = vrot.lane.b32.xlu0 %v378, 20
        %v1082 = vpop.permute.xlu0 %1081
        %1083 = vrot.lane.b32.xlu0 %v379, 20
        %v1084 = vpop.permute.xlu0 %1083
        %1085 = vrot.lane.b32.xlu0 %v380, 20
        %v1086 = vpop.permute.xlu0 %1085
        %1087 = vrot.lane.b32.xlu0 %v381, 20
        %v1088 = vpop.permute.xlu0 %1087
        %1153 = vrot.lane.b32.xlu0 %v385, 24
        %v1154 = vpop.permute.xlu0 %1153
        %1155 = vrot.lane.b32.xlu0 %v386, 24
        %v1156 = vpop.permute.xlu0 %1155
        %1157 = vrot.lane.b32.xlu0 %v387, 24
        %v1158 = vpop.permute.xlu0 %1157
        %1159 = vrot.lane.b32.xlu0 %v388, 24
        %v1160 = vpop.permute.xlu0 %1159
        %1161 = vrot.lane.b32.xlu0 %v389, 24
        %v1162 = vpop.permute.xlu0 %1161
        %1163 = vrot.lane.b32.xlu0 %v390, 24
        %v1164 = vpop.permute.xlu0 %1163
        %1165 = vrot.lane.b32.xlu0 %v391, 24
        %v1166 = vpop.permute.xlu0 %1165
        %1167 = vrot.lane.b32.xlu0 %v392, 24
        %v1168 = vpop.permute.xlu0 %1167
        %1169 = vrot.lane.b32.xlu0 %v393, 24
        %v1170 = vpop.permute.xlu0 %1169
        %1171 = vrot.lane.b32.xlu0 %v394, 24
        %v1172 = vpop.permute.xlu0 %1171
        %1173 = vrot.lane.b32.xlu0 %v395, 24
        %v1174 = vpop.permute.xlu0 %1173
        %1175 = vrot.lane.b32.xlu0 %v396, 24
        %v1176 = vpop.permute.xlu0 %1175
        %1177 = vrot.lane.b32.xlu0 %v397, 24
        %v1178 = vpop.permute.xlu0 %1177
        %1179 = vrot.lane.b32.xlu0 %v398, 24
        %v1180 = vpop.permute.xlu0 %1179
        %1181 = vrot.lane.b32.xlu0 %v399, 24
        %v1182 = vpop.permute.xlu0 %1181
        %1183 = vrot.lane.b32.xlu0 %v400, 24
        %v1184 = vpop.permute.xlu0 %1183
        %1185 = vrot.lane.b32.xlu0 %v401, 24
        %v1186 = vpop.permute.xlu0 %1185
        %1187 = vrot.lane.b32.xlu0 %v402, 24
        %v1188 = vpop.permute.xlu0 %1187
        %1189 = vrot.lane.b32.xlu0 %v403, 24
        %v1190 = vpop.permute.xlu0 %1189
        %1191 = vrot.lane.b32.xlu0 %v404, 24
        %v1192 = vpop.permute.xlu0 %1191
        %1193 = vrot.lane.b32.xlu0 %v405, 24
        %v1194 = vpop.permute.xlu0 %1193
        %1195 = vrot.lane.b32.xlu0 %v406, 24
        %v1196 = vpop.permute.xlu0 %1195
        %1197 = vrot.lane.b32.xlu0 %v407, 24
        %v1198 = vpop.permute.xlu0 %1197
        %1199 = vrot.lane.b32.xlu0 %v408, 24
        %v1200 = vpop.permute.xlu0 %1199
        %1201 = vrot.lane.b32.xlu0 %v409, 24
        %v1202 = vpop.permute.xlu0 %1201
        %1203 = vrot.lane.b32.xlu0 %v410, 24
        %v1204 = vpop.permute.xlu0 %1203
        %1205 = vrot.lane.b32.xlu0 %v411, 24
        %v1206 = vpop.permute.xlu0 %1205
        %1207 = vrot.lane.b32.xlu0 %v412, 24
        %v1208 = vpop.permute.xlu0 %1207
        %1209 = vrot.lane.b32.xlu0 %v413, 24
        %v1210 = vpop.permute.xlu0 %1209
        %1211 = vrot.lane.b32.xlu0 %v414, 24
        %v1212 = vpop.permute.xlu0 %1211
        %1213 = vrot.lane.b32.xlu0 %v415, 24
        %v1214 = vpop.permute.xlu0 %1213
        %1215 = vrot.lane.b32.xlu0 %v416, 24
        %v1216 = vpop.permute.xlu0 %1215
        %1281 = vrot.lane.b32.xlu0 %v417, 28
        %v1282 = vpop.permute.xlu0 %1281
        %1283 = vrot.lane.b32.xlu0 %v418, 28
        %v1284 = vpop.permute.xlu0 %1283
        %1285 = vrot.lane.b32.xlu0 %v419, 28
        %v1286 = vpop.permute.xlu0 %1285
        %1287 = vrot.lane.b32.xlu0 %v420, 28
        %v1288 = vpop.permute.xlu0 %1287
        %1289 = vrot.lane.b32.xlu0 %v421, 28
        %v1290 = vpop.permute.xlu0 %1289
        %1291 = vrot.lane.b32.xlu0 %v422, 28
        %v1292 = vpop.permute.xlu0 %1291
        %1293 = vrot.lane.b32.xlu0 %v423, 28
        %v1294 = vpop.permute.xlu0 %1293
        %1295 = vrot.lane.b32.xlu0 %v424, 28
        %v1296 = vpop.permute.xlu0 %1295
        %1297 = vrot.lane.b32.xlu0 %v425, 28
        %v1298 = vpop.permute.xlu0 %1297
        %1299 = vrot.lane.b32.xlu0 %v426, 28
        %v1300 = vpop.permute.xlu0 %1299
        %1301 = vrot.lane.b32.xlu0 %v427, 28
        %v1302 = vpop.permute.xlu0 %1301
        %1303 = vrot.lane.b32.xlu0 %v428, 28
        %v1304 = vpop.permute.xlu0 %1303
        %1305 = vrot.lane.b32.xlu0 %v429, 28
        %v1306 = vpop.permute.xlu0 %1305
        %1307 = vrot.lane.b32.xlu0 %v430, 28
        %v1308 = vpop.permute.xlu0 %1307
        %1309 = vrot.lane.b32.xlu0 %v431, 28
        %v1310 = vpop.permute.xlu0 %1309
        %1311 = vrot.lane.b32.xlu0 %v432, 28
        %v1312 = vpop.permute.xlu0 %1311
        %1313 = vrot.lane.b32.xlu0 %v433, 28
        %v1314 = vpop.permute.xlu0 %1313
        %1315 = vrot.lane.b32.xlu0 %v434, 28
        %v1316 = vpop.permute.xlu0 %1315
        %1317 = vrot.lane.b32.xlu0 %v435, 28
        %v1318 = vpop.permute.xlu0 %1317
        %1319 = vrot.lane.b32.xlu0 %v436, 28
        %v1320 = vpop.permute.xlu0 %1319
        %1321 = vrot.lane.b32.xlu0 %v437, 28
        %v1322 = vpop.permute.xlu0 %1321
        %1323 = vrot.lane.b32.xlu0 %v438, 28
        %v1324 = vpop.permute.xlu0 %1323
        %1325 = vrot.lane.b32.xlu0 %v439, 28
        %v1326 = vpop.permute.xlu0 %1325
        %1327 = vrot.lane.b32.xlu0 %v440, 28
        %v1328 = vpop.permute.xlu0 %1327
        %1329 = vrot.lane.b32.xlu0 %v441, 28
        %v1330 = vpop.permute.xlu0 %1329
        %1331 = vrot.lane.b32.xlu0 %v442, 28
        %v1332 = vpop.permute.xlu0 %1331
        %1333 = vrot.lane.b32.xlu0 %v443, 28
        %v1334 = vpop.permute.xlu0 %1333
        %1335 = vrot.lane.b32.xlu0 %v444, 28
        %v1336 = vpop.permute.xlu0 %1335
        %1337 = vrot.lane.b32.xlu0 %v445, 28
        %v1338 = vpop.permute.xlu0 %1337
        %1339 = vrot.lane.b32.xlu0 %v446, 28
        %v1340 = vpop.permute.xlu0 %1339
        %1341 = vrot.lane.b32.xlu0 %v447, 28
        %v1342 = vpop.permute.xlu0 %1341
        %1343 = vrot.lane.b32.xlu0 %v448, 28
        %v1344 = vpop.permute.xlu0 %1343
        %1409 = vrot.lane.b32.xlu0 %v449, 32
        %v1410 = vpop.permute.xlu0 %1409
        %1411 = vrot.lane.b32.xlu0 %v450, 32
        %v1412 = vpop.permute.xlu0 %1411
        %1413 = vrot.lane.b32.xlu0 %v451, 32
        %v1414 = vpop.permute.xlu0 %1413
        %1415 = vrot.lane.b32.xlu0 %v452, 32
        %v1416 = vpop.permute.xlu0 %1415
        %1417 = vrot.lane.b32.xlu0 %v453, 32
        %v1418 = vpop.permute.xlu0 %1417
        %1419 = vrot.lane.b32.xlu0 %v454, 32
        %v1420 = vpop.permute.xlu0 %1419
        %1421 = vrot.lane.b32.xlu0 %v455, 32
        %v1422 = vpop.permute.xlu0 %1421
        %1423 = vrot.lane.b32.xlu0 %v456, 32
        %v1424 = vpop.permute.xlu0 %1423
        %1425 = vrot.lane.b32.xlu0 %v457, 32
        %v1426 = vpop.permute.xlu0 %1425
        %1427 = vrot.lane.b32.xlu0 %v458, 32
        %v1428 = vpop.permute.xlu0 %1427
        %1429 = vrot.lane.b32.xlu0 %v459, 32
        %v1430 = vpop.permute.xlu0 %1429
        %1431 = vrot.lane.b32.xlu0 %v460, 32
        %v1432 = vpop.permute.xlu0 %1431
        %1433 = vrot.lane.b32.xlu0 %v461, 32
        %v1434 = vpop.permute.xlu0 %1433
        %1435 = vrot.lane.b32.xlu0 %v462, 32
        %v1436 = vpop.permute.xlu0 %1435
        %1437 = vrot.lane.b32.xlu0 %v463, 32
        %v1438 = vpop.permute.xlu0 %1437
        %1439 = vrot.lane.b32.xlu0 %v464, 32
        %v1440 = vpop.permute.xlu0 %1439
        %1441 = vrot.lane.b32.xlu0 %v465, 32
        %v1442 = vpop.permute.xlu0 %1441
        %1443 = vrot.lane.b32.xlu0 %v466, 32
        %v1444 = vpop.permute.xlu0 %1443
        %1445 = vrot.lane.b32.xlu0 %v467, 32
        %v1446 = vpop.permute.xlu0 %1445
        %1447 = vrot.lane.b32.xlu0 %v468, 32
        %v1448 = vpop.permute.xlu0 %1447
        %1449 = vrot.lane.b32.xlu0 %v469, 32
        %v1450 = vpop.permute.xlu0 %1449
        %1451 = vrot.lane.b32.xlu0 %v470, 32
        %v1452 = vpop.permute.xlu0 %1451
        %1453 = vrot.lane.b32.xlu0 %v471, 32
        %v1454 = vpop.permute.xlu0 %1453
        %1455 = vrot.lane.b32.xlu0 %v472, 32
        %v1456 = vpop.permute.xlu0 %1455
        %1457 = vrot.lane.b32.xlu0 %v473, 32
        %v1458 = vpop.permute.xlu0 %1457
        %1459 = vrot.lane.b32.xlu0 %v474, 32
        %v1460 = vpop.permute.xlu0 %1459
        %1461 = vrot.lane.b32.xlu0 %v475, 32
        %v1462 = vpop.permute.xlu0 %1461
        %1463 = vrot.lane.b32.xlu0 %v476, 32
        %v1464 = vpop.permute.xlu0 %1463
        %1465 = vrot.lane.b32.xlu0 %v477, 32
        %v1466 = vpop.permute.xlu0 %1465
        %1467 = vrot.lane.b32.xlu0 %v478, 32
        %v1468 = vpop.permute.xlu0 %1467
        %1469 = vrot.lane.b32.xlu0 %v479, 32
        %v1470 = vpop.permute.xlu0 %1469
        %1471 = vrot.lane.b32.xlu0 %v480, 32
        %v1472 = vpop.permute.xlu0 %1471
        %vm1505 = vcmask 31744
        %v1506 = vsel %vm1505, %v187, %v514
        %v1507 = vsel %vm1505, %v188, %v516
        %v1508 = vsel %vm1505, %v189, %v518
        %v1509 = vsel %vm1505, %v190, %v520
        %v1510 = vsel %vm1505, %v191, %v522
        %v1511 = vsel %vm1505, %v192, %v524
        %v1512 = vsel %vm1505, %v193, %v526
        %v1513 = vsel %vm1505, %v194, %v528
        %v1514 = vsel %vm1505, %v195, %v530
        %v1515 = vsel %vm1505, %v196, %v532
        %v1516 = vsel %vm1505, %v197, %v534
        %v1517 = vsel %vm1505, %v198, %v536
        %v1518 = vsel %vm1505, %v199, %v538
        %v1519 = vsel %vm1505, %v200, %v540
        %v1520 = vsel %vm1505, %v201, %v542
        %v1521 = vsel %vm1505, %v202, %v544
        %v1522 = vsel %vm1505, %v203, %v546
        %v1523 = vsel %vm1505, %v204, %v548
        %v1524 = vsel %vm1505, %v205, %v550
        %v1525 = vsel %vm1505, %v206, %v552
        %v1526 = vsel %vm1505, %v207, %v554
        %v1527 = vsel %vm1505, %v208, %v556
        %v1528 = vsel %vm1505, %v209, %v558
        %v1529 = vsel %vm1505, %v210, %v560
        %v1530 = vsel %vm1505, %v211, %v562
        %v1531 = vsel %vm1505, %v212, %v564
        %v1532 = vsel %vm1505, %v213, %v566
        %v1533 = vsel %vm1505, %v214, %v568
        %v1534 = vsel %vm1505, %v215, %v570
        %v1535 = vsel %vm1505, %v216, %v572
        %v1536 = vsel %vm1505, %v217, %v574
        %v1537 = vsel %vm1505, %v218, %v576
        %vm1538 = vcmask 64512
        %v1539 = vsel %vm1538, %v1506, %v642
        %v1540 = vsel %vm1538, %v1507, %v644
        %v1541 = vsel %vm1538, %v1508, %v646
        %v1542 = vsel %vm1538, %v1509, %v648
        %v1543 = vsel %vm1538, %v1510, %v650
        %v1544 = vsel %vm1538, %v1511, %v652
        %v1545 = vsel %vm1538, %v1512, %v654
        %v1546 = vsel %vm1538, %v1513, %v656
        %v1547 = vsel %vm1538, %v1514, %v658
        %v1548 = vsel %vm1538, %v1515, %v660
        %v1549 = vsel %vm1538, %v1516, %v662
        %v1550 = vsel %vm1538, %v1517, %v664
        %v1551 = vsel %vm1538, %v1518, %v666
        %v1552 = vsel %vm1538, %v1519, %v668
        %v1553 = vsel %vm1538, %v1520, %v670
        %v1554 = vsel %vm1538, %v1521, %v672
        %v1555 = vsel %vm1538, %v1522, %v674
        %v1556 = vsel %vm1538, %v1523, %v676
        %v1557 = vsel %vm1538, %v1524, %v678
        %v1558 = vsel %vm1538, %v1525, %v680
        %v1559 = vsel %vm1538, %v1526, %v682
        %v1560 = vsel %vm1538, %v1527, %v684
        %v1561 = vsel %vm1538, %v1528, %v686
        %v1562 = vsel %vm1538, %v1529, %v688
        %v1563 = vsel %vm1538, %v1530, %v690
        %v1564 = vsel %vm1538, %v1531, %v692
        %v1565 = vsel %vm1538, %v1532, %v694
        %v1566 = vsel %vm1538, %v1533, %v696
        %v1567 = vsel %vm1538, %v1534, %v698
        %v1568 = vsel %vm1538, %v1535, %v700
        %v1569 = vsel %vm1538, %v1536, %v702
        %v1570 = vsel %vm1538, %v1537, %v704
        %vm1571 = vcmask 97280
        %v1572 = vsel %vm1571, %v1539, %v770
        %v1573 = vsel %vm1571, %v1540, %v772
        %v1574 = vsel %vm1571, %v1541, %v774
        %v1575 = vsel %vm1571, %v1542, %v776
        %v1576 = vsel %vm1571, %v1543, %v778
        %v1577 = vsel %vm1571, %v1544, %v780
        %v1578 = vsel %vm1571, %v1545, %v782
        %v1579 = vsel %vm1571, %v1546, %v784
        %v1580 = vsel %vm1571, %v1547, %v786
        %v1581 = vsel %vm1571, %v1548, %v788
        %v1582 = vsel %vm1571, %v1549, %v790
        %v1583 = vsel %vm1571, %v1550, %v792
        %v1584 = vsel %vm1571, %v1551, %v794
        %v1585 = vsel %vm1571, %v1552, %v796
        %v1586 = vsel %vm1571, %v1553, %v798
        %v1587 = vsel %vm1571, %v1554, %v800
        %v1588 = vsel %vm1571, %v1555, %v802
        %v1589 = vsel %vm1571, %v1556, %v804
        %v1590 = vsel %vm1571, %v1557, %v806
        %v1591 = vsel %vm1571, %v1558, %v808
        %v1592 = vsel %vm1571, %v1559, %v810
        %v1593 = vsel %vm1571, %v1560, %v812
        %v1594 = vsel %vm1571, %v1561, %v814
        %v1595 = vsel %vm1571, %v1562, %v816
        %v1596 = vsel %vm1571, %v1563, %v818
        %v1597 = vsel %vm1571, %v1564, %v820
        %v1598 = vsel %vm1571, %v1565, %v822
        %v1599 = vsel %vm1571, %v1566, %v824
        %v1600 = vsel %vm1571, %v1567, %v826
        %v1601 = vsel %vm1571, %v1568, %v828
        %v1602 = vsel %vm1571, %v1569, %v830
        %v1603 = vsel %vm1571, %v1570, %v832
        %vm1604 = vcmask 130048
        %v1605 = vsel %vm1604, %v1572, %v898
        %v1606 = vsel %vm1604, %v1573, %v900
        %v1607 = vsel %vm1604, %v1574, %v902
        %v1608 = vsel %vm1604, %v1575, %v904
        %v1609 = vsel %vm1604, %v1576, %v906
        %v1610 = vsel %vm1604, %v1577, %v908
        %v1611 = vsel %vm1604, %v1578, %v910
        %v1612 = vsel %vm1604, %v1579, %v912
        %v1613 = vsel %vm1604, %v1580, %v914
        %v1614 = vsel %vm1604, %v1581, %v916
        %v1615 = vsel %vm1604, %v1582, %v918
        %v1616 = vsel %vm1604, %v1583, %v920
        %v1617 = vsel %vm1604, %v1584, %v922
        %v1618 = vsel %vm1604, %v1585, %v924
        %v1619 = vsel %vm1604, %v1586, %v926
        %v1620 = vsel %vm1604, %v1587, %v928
        %v1621 = vsel %vm1604, %v1588, %v930
        %v1622 = vsel %vm1604, %v1589, %v932
        %v1623 = vsel %vm1604, %v1590, %v934
        %v1624 = vsel %vm1604, %v1591, %v936
        %v1625 = vsel %vm1604, %v1592, %v938
        %v1626 = vsel %vm1604, %v1593, %v940
        %v1627 = vsel %vm1604, %v1594, %v942
        %v1628 = vsel %vm1604, %v1595, %v944
        %v1629 = vsel %vm1604, %v1596, %v946
        %v1630 = vsel %vm1604, %v1597, %v948
        %v1631 = vsel %vm1604, %v1598, %v950
        %v1632 = vsel %vm1604, %v1599, %v952
        %v1633 = vsel %vm1604, %v1600, %v954
        %v1634 = vsel %vm1604, %v1601, %v956
        %v1635 = vsel %vm1604, %v1602, %v958
        %v1636 = vsel %vm1604, %v1603, %v960
        %vm1637 = vcmask 162816
        %v1638 = vsel %vm1637, %v1605, %v1026
        %v1639 = vsel %vm1637, %v1606, %v1028
        %v1640 = vsel %vm1637, %v1607, %v1030
        %v1641 = vsel %vm1637, %v1608, %v1032
        %v1642 = vsel %vm1637, %v1609, %v1034
        %v1643 = vsel %vm1637, %v1610, %v1036
        %v1644 = vsel %vm1637, %v1611, %v1038
        %v1645 = vsel %vm1637, %v1612, %v1040
        %v1646 = vsel %vm1637, %v1613, %v1042
        %v1647 = vsel %vm1637, %v1614, %v1044
        %v1648 = vsel %vm1637, %v1615, %v1046
        %v1649 = vsel %vm1637, %v1616, %v1048
        %v1650 = vsel %vm1637, %v1617, %v1050
        %v1651 = vsel %vm1637, %v1618, %v1052
        %v1652 = vsel %vm1637, %v1619, %v1054
        %v1653 = vsel %vm1637, %v1620, %v1056
        %v1654 = vsel %vm1637, %v1621, %v1058
        %v1655 = vsel %vm1637, %v1622, %v1060
        %v1656 = vsel %vm1637, %v1623, %v1062
        %v1657 = vsel %vm1637, %v1624, %v1064
        %v1658 = vsel %vm1637, %v1625, %v1066
        %v1659 = vsel %vm1637, %v1626, %v1068
        %v1660 = vsel %vm1637, %v1627, %v1070
        %v1661 = vsel %vm1637, %v1628, %v1072
        %v1662 = vsel %vm1637, %v1629, %v1074
        %v1663 = vsel %vm1637, %v1630, %v1076
        %v1664 = vsel %vm1637, %v1631, %v1078
        %v1665 = vsel %vm1637, %v1632, %v1080
        %v1666 = vsel %vm1637, %v1633, %v1082
        %v1667 = vsel %vm1637, %v1634, %v1084
        %v1668 = vsel %vm1637, %v1635, %v1086
        %v1669 = vsel %vm1637, %v1636, %v1088
        %vm1670 = vcmask 195584
        %v1671 = vsel %vm1670, %v1638, %v1154
        %v1672 = vsel %vm1670, %v1639, %v1156
        %v1673 = vsel %vm1670, %v1640, %v1158
        %v1674 = vsel %vm1670, %v1641, %v1160
        %v1675 = vsel %vm1670, %v1642, %v1162
        %v1676 = vsel %vm1670, %v1643, %v1164
        %v1677 = vsel %vm1670, %v1644, %v1166
        %v1678 = vsel %vm1670, %v1645, %v1168
        %v1679 = vsel %vm1670, %v1646, %v1170
        %v1680 = vsel %vm1670, %v1647, %v1172
        %v1681 = vsel %vm1670, %v1648, %v1174
        %v1682 = vsel %vm1670, %v1649, %v1176
        %v1683 = vsel %vm1670, %v1650, %v1178
        %v1684 = vsel %vm1670, %v1651, %v1180
        %v1685 = vsel %vm1670, %v1652, %v1182
        %v1686 = vsel %vm1670, %v1653, %v1184
        %v1687 = vsel %vm1670, %v1654, %v1186
        %v1688 = vsel %vm1670, %v1655, %v1188
        %v1689 = vsel %vm1670, %v1656, %v1190
        %v1690 = vsel %vm1670, %v1657, %v1192
        %v1691 = vsel %vm1670, %v1658, %v1194
        %v1692 = vsel %vm1670, %v1659, %v1196
        %v1693 = vsel %vm1670, %v1660, %v1198
        %v1694 = vsel %vm1670, %v1661, %v1200
        %v1695 = vsel %vm1670, %v1662, %v1202
        %v1696 = vsel %vm1670, %v1663, %v1204
        %v1697 = vsel %vm1670, %v1664, %v1206
        %v1698 = vsel %vm1670, %v1665, %v1208
        %v1699 = vsel %vm1670, %v1666, %v1210
        %v1700 = vsel %vm1670, %v1667, %v1212
        %v1701 = vsel %vm1670, %v1668, %v1214
        %v1702 = vsel %vm1670, %v1669, %v1216
        %vm1703 = vcmask 228352
        %v1704 = vsel %vm1703, %v1671, %v1282
        %v1705 = vsel %vm1703, %v1672, %v1284
        %v1706 = vsel %vm1703, %v1673, %v1286
        %v1707 = vsel %vm1703, %v1674, %v1288
        %v1708 = vsel %vm1703, %v1675, %v1290
        %v1709 = vsel %vm1703, %v1676, %v1292
        %v1710 = vsel %vm1703, %v1677, %v1294
        %v1711 = vsel %vm1703, %v1678, %v1296
        %v1712 = vsel %vm1703, %v1679, %v1298
        %v1713 = vsel %vm1703, %v1680, %v1300
        %v1714 = vsel %vm1703, %v1681, %v1302
        %v1715 = vsel %vm1703, %v1682, %v1304
        %v1716 = vsel %vm1703, %v1683, %v1306
        %v1717 = vsel %vm1703, %v1684, %v1308
        %v1718 = vsel %vm1703, %v1685, %v1310
        %v1719 = vsel %vm1703, %v1686, %v1312
        %v1720 = vsel %vm1703, %v1687, %v1314
        %v1721 = vsel %vm1703, %v1688, %v1316
        %v1722 = vsel %vm1703, %v1689, %v1318
        %v1723 = vsel %vm1703, %v1690, %v1320
        %v1724 = vsel %vm1703, %v1691, %v1322
        %v1725 = vsel %vm1703, %v1692, %v1324
        %v1726 = vsel %vm1703, %v1693, %v1326
        %v1727 = vsel %vm1703, %v1694, %v1328
        %v1728 = vsel %vm1703, %v1695, %v1330
        %v1729 = vsel %vm1703, %v1696, %v1332
        %v1730 = vsel %vm1703, %v1697, %v1334
        %v1731 = vsel %vm1703, %v1698, %v1336
        %v1732 = vsel %vm1703, %v1699, %v1338
        %v1733 = vsel %vm1703, %v1700, %v1340
        %v1734 = vsel %vm1703, %v1701, %v1342
        %v1735 = vsel %vm1703, %v1702, %v1344
        %vm1736 = vcmask 261120
        %v1737 = vsel %vm1736, %v1704, %v1410
        %v1738 = vsel %vm1736, %v1705, %v1412
        %v1739 = vsel %vm1736, %v1706, %v1414
        %v1740 = vsel %vm1736, %v1707, %v1416
        %v1741 = vsel %vm1736, %v1708, %v1418
        %v1742 = vsel %vm1736, %v1709, %v1420
        %v1743 = vsel %vm1736, %v1710, %v1422
        %v1744 = vsel %vm1736, %v1711, %v1424
        %v1745 = vsel %vm1736, %v1712, %v1426
        %v1746 = vsel %vm1736, %v1713, %v1428
        %v1747 = vsel %vm1736, %v1714, %v1430
        %v1748 = vsel %vm1736, %v1715, %v1432
        %v1749 = vsel %vm1736, %v1716, %v1434
        %v1750 = vsel %vm1736, %v1717, %v1436
        %v1751 = vsel %vm1736, %v1718, %v1438
        %v1752 = vsel %vm1736, %v1719, %v1440
        %v1753 = vsel %vm1736, %v1720, %v1442
        %v1754 = vsel %vm1736, %v1721, %v1444
        %v1755 = vsel %vm1736, %v1722, %v1446
        %v1756 = vsel %vm1736, %v1723, %v1448
        %v1757 = vsel %vm1736, %v1724, %v1450
        %v1758 = vsel %vm1736, %v1725, %v1452
        %v1759 = vsel %vm1736, %v1726, %v1454
        %v1760 = vsel %vm1736, %v1727, %v1456
        %v1761 = vsel %vm1736, %v1728, %v1458
        %v1762 = vsel %vm1736, %v1729, %v1460
        %v1763 = vsel %vm1736, %v1730, %v1462
        %v1764 = vsel %vm1736, %v1731, %v1464
        %v1765 = vsel %vm1736, %v1732, %v1466
        %v1766 = vsel %vm1736, %v1733, %v1468
        %v1767 = vsel %vm1736, %v1734, %v1470
        %v1768 = vsel %vm1736, %v1735, %v1472
        %v1769 = vld [vmem:[%s1] sm:$0xff]
        %v1770 = vld [vmem:[%s1 + $0x8] sm:$0xff]
        %v1771 = vld [vmem:[%s1 + $0x10] sm:$0xff]
        %v1772 = vld [vmem:[%s1 + $0x18] sm:$0xff]
        %v1773 = vld [vmem:[%s1 + $0x20] sm:$0xf]
        %v1774 = vld [vmem:[%s2] sm:$0x1]
        %v1776 = vperm.slane %v1774, 0
        %vm1778 = vcmask 293888
        %v1780 = vsel %vm1778, %v1737, 0
        %v1783 = vsel %vm1778, %v1738, 0
        %v1786 = vsel %vm1778, %v1739, 0
        %v1789 = vsel %vm1778, %v1740, 0
        %v1792 = vsel %vm1778, %v1741, 0
        %v1795 = vsel %vm1778, %v1742, 0
        %v1798 = vsel %vm1778, %v1743, 0
        %v1801 = vsel %vm1778, %v1744, 0
        %v1804 = vsel %vm1778, %v1745, 0
        %v1807 = vsel %vm1778, %v1746, 0
        %v1810 = vsel %vm1778, %v1747, 0
        %v1813 = vsel %vm1778, %v1748, 0
        %v1816 = vsel %vm1778, %v1749, 0
        %v1819 = vsel %vm1778, %v1750, 0
        %v1822 = vsel %vm1778, %v1751, 0
        %v1825 = vsel %vm1778, %v1752, 0
        %v1828 = vsel %vm1778, %v1753, 0
        %v1831 = vsel %vm1778, %v1754, 0
        %v1834 = vsel %vm1778, %v1755, 0
        %v1837 = vsel %vm1778, %v1756, 0
        %v1840 = vsel %vm1778, %v1757, 0
        %v1843 = vsel %vm1778, %v1758, 0
        %v1846 = vsel %vm1778, %v1759, 0
        %v1849 = vsel %vm1778, %v1760, 0
        %v1852 = vsel %vm1778, %v1761, 0
        %v1855 = vsel %vm1778, %v1762, 0
        %v1858 = vsel %vm1778, %v1763, 0
        %v1861 = vsel %vm1778, %v1764, 0
        %v1864 = vsel %vm1778, %v1765, 0
        %v1867 = vsel %vm1778, %v1766, 0
        %v1870 = vsel %vm1778, %v1767, 0
        %v1873 = vsel %vm1778, %v1768, 0
        %vm1875 = vcmask 1043456
        %v1877 = vsel %vm1875, %v1773, 0
        %1879 = vmatpush.msra.mxu0 0.0
        %1880 = vmatpush.msra.mxu0 0.0
        %1881 = vmatpush.msra.mxu0 0.0
        %1882 = vmatpush.msra.mxu0 0.0
        %1883 = vmatpush.msra.mxu0 0.0
        %1884 = vmatpush.msra.mxu0 0.0
        %1885 = vmatpush.msra.mxu0 0.0
        %1886 = vmatpush.msra.mxu0 0.0
        %1887 = vmatpush.msra.mxu0 0.0
        %1888 = vmatpush.msra.mxu0 0.0
        %1889 = vmatpush.msra.mxu0 0.0
        %1890 = vmatpush.msra.mxu0 %v1877
        %1891 = vmatpush.msra.mxu0 %v1772
        %1892 = vmatpush.msra.mxu0 %v1771
        %1893 = vmatpush.msra.mxu0 %v1770
        %1894 = vmatpush.msra.mxu0 %v1769
        %1895 = vmatmul.f32.gmra.mxu0 %v1780
        %v1896 = vpop.f32.mrf.mxu0
        %v1897 = vadd.f32 %v1776, %v1896
        %1898 = vmatmul.f32.gmra.mxu0 %v1783
        %v1899 = vpop.f32.mrf.mxu0
        %v1900 = vadd.f32 %v1776, %v1899
        %1901 = vmatmul.f32.gmra.mxu0 %v1786
        %v1902 = vpop.f32.mrf.mxu0
        %v1903 = vadd.f32 %v1776, %v1902
        %1904 = vmatmul.f32.gmra.mxu0 %v1789
        %v1905 = vpop.f32.mrf.mxu0
        %v1906 = vadd.f32 %v1776, %v1905
        %1907 = vmatmul.f32.gmra.mxu0 %v1792
        %v1908 = vpop.f32.mrf.mxu0
        %v1909 = vadd.f32 %v1776, %v1908
        %1910 = vmatmul.f32.gmra.mxu0 %v1795
        %v1911 = vpop.f32.mrf.mxu0
        %v1912 = vadd.f32 %v1776, %v1911
        %1913 = vmatmul.f32.gmra.mxu0 %v1798
        %v1914 = vpop.f32.mrf.mxu0
        %v1915 = vadd.f32 %v1776, %v1914
        %1916 = vmatmul.f32.gmra.mxu0 %v1801
        %v1917 = vpop.f32.mrf.mxu0
        %v1918 = vadd.f32 %v1776, %v1917
        %1919 = vmatmul.f32.gmra.mxu0 %v1804
        %v1920 = vpop.f32.mrf.mxu0
        %v1921 = vadd.f32 %v1776, %v1920
        %1922 = vmatmul.f32.gmra.mxu0 %v1807
        %v1923 = vpop.f32.mrf.mxu0
        %v1924 = vadd.f32 %v1776, %v1923
        %1925 = vmatmul.f32.gmra.mxu0 %v1810
        %v1926 = vpop.f32.mrf.mxu0
        %v1927 = vadd.f32 %v1776, %v1926
        %1928 = vmatmul.f32.gmra.mxu0 %v1813
        %v1929 = vpop.f32.mrf.mxu0
        %v1930 = vadd.f32 %v1776, %v1929
        %1931 = vmatmul.f32.gmra.mxu0 %v1816
        %v1932 = vpop.f32.mrf.mxu0
        %v1933 = vadd.f32 %v1776, %v1932
        %1934 = vmatmul.f32.gmra.mxu0 %v1819
        %v1935 = vpop.f32.mrf.mxu0
        %v1936 = vadd.f32 %v1776, %v1935
        %1937 = vmatmul.f32.gmra.mxu0 %v1822
        %v1938 = vpop.f32.mrf.mxu0
        %v1939 = vadd.f32 %v1776, %v1938
        %1940 = vmatmul.f32.gmra.mxu0 %v1825
        %v1941 = vpop.f32.mrf.mxu0
        %v1942 = vadd.f32 %v1776, %v1941
        %1943 = vmatmul.f32.gmra.mxu0 %v1828
        %v1944 = vpop.f32.mrf.mxu0
        %v1945 = vadd.f32 %v1776, %v1944
        %1946 = vmatmul.f32.gmra.mxu0 %v1831
        %v1947 = vpop.f32.mrf.mxu0
        %v1948 = vadd.f32 %v1776, %v1947
        %1949 = vmatmul.f32.gmra.mxu0 %v1834
        %v1950 = vpop.f32.mrf.mxu0
        %v1951 = vadd.f32 %v1776, %v1950
        %1952 = vmatmul.f32.gmra.mxu0 %v1837
        %v1953 = vpop.f32.mrf.mxu0
        %v1954 = vadd.f32 %v1776, %v1953
        %1955 = vmatmul.f32.gmra.mxu0 %v1840
        %v1956 = vpop.f32.mrf.mxu0
        %v1957 = vadd.f32 %v1776, %v1956
        %1958 = vmatmul.f32.gmra.mxu0 %v1843
        %v1959 = vpop.f32.mrf.mxu0
        %v1960 = vadd.f32 %v1776, %v1959
        %1961 = vmatmul.f32.gmra.mxu0 %v1846
        %v1962 = vpop.f32.mrf.mxu0
        %v1963 = vadd.f32 %v1776, %v1962
        %1964 = vmatmul.f32.gmra.mxu0 %v1849
        %v1965 = vpop.f32.mrf.mxu0
        %v1966 = vadd.f32 %v1776, %v1965
        %1967 = vmatmul.f32.gmra.mxu0 %v1852
        %v1968 = vpop.f32.mrf.mxu0
        %v1969 = vadd.f32 %v1776, %v1968
        %1970 = vmatmul.f32.gmra.mxu0 %v1855
        %v1971 = vpop.f32.mrf.mxu0
        %v1972 = vadd.f32 %v1776, %v1971
        %1973 = vmatmul.f32.gmra.mxu0 %v1858
        %v1974 = vpop.f32.mrf.mxu0
        %v1975 = vadd.f32 %v1776, %v1974
        %1976 = vmatmul.f32.gmra.mxu0 %v1861
        %v1977 = vpop.f32.mrf.mxu0
        %v1978 = vadd.f32 %v1776, %v1977
        %1979 = vmatmul.f32.gmra.mxu0 %v1864
        %v1980 = vpop.f32.mrf.mxu0
        %v1981 = vadd.f32 %v1776, %v1980
        %1982 = vmatmul.f32.gmra.mxu0 %v1867
        %v1983 = vpop.f32.mrf.mxu0
        %v1984 = vadd.f32 %v1776, %v1983
        %1985 = vmatmul.f32.gmra.mxu0 %v1870
        %v1986 = vpop.f32.mrf.mxu0
        %v1987 = vadd.f32 %v1776, %v1986
        %1988 = vmatmul.f32.gmra.mxu0 %v1873
        %v1989 = vpop.f32.mrf.mxu0
        %v1990 = vadd.f32 %v1776, %v1989
        %1991 = vdwg.mxu0
        %1992 = vst [vmem:[%s177] sm:$0xff] %v1897
        %1993 = vst [vmem:[%s177 + $0x8] sm:$0xff] %v1900
        %1994 = vst [vmem:[%s177 + $0x10] sm:$0xff] %v1903
        %1995 = vst [vmem:[%s177 + $0x18] sm:$0xff] %v1906
        %1996 = vst [vmem:[%s177 + $0x20] sm:$0xff] %v1909
        %1997 = vst [vmem:[%s177 + $0x28] sm:$0xff] %v1912
        %1998 = vst [vmem:[%s177 + $0x30] sm:$0xff] %v1915
        %1999 = vst [vmem:[%s177 + $0x38] sm:$0xff] %v1918
        %2000 = vst [vmem:[%s177 + $0x40] sm:$0xff] %v1921
        %2001 = vst [vmem:[%s177 + $0x48] sm:$0xff] %v1924
        %2002 = vst [vmem:[%s177 + $0x50] sm:$0xff] %v1927
        %2003 = vst [vmem:[%s177 + $0x58] sm:$0xff] %v1930
        %2004 = vst [vmem:[%s177 + $0x60] sm:$0xff] %v1933
        %2005 = vst [vmem:[%s177 + $0x68] sm:$0xff] %v1936
        %2006 = vst [vmem:[%s177 + $0x70] sm:$0xff] %v1939
        %2007 = vst [vmem:[%s177 + $0x78] sm:$0xff] %v1942
        %2008 = vst [vmem:[%s177 + $0x80] sm:$0xff] %v1945
        %2009 = vst [vmem:[%s177 + $0x88] sm:$0xff] %v1948
        %2010 = vst [vmem:[%s177 + $0x90] sm:$0xff] %v1951
        %2011 = vst [vmem:[%s177 + $0x98] sm:$0xff] %v1954
        %2012 = vst [vmem:[%s177 + $0xa0] sm:$0xff] %v1957
        %2013 = vst [vmem:[%s177 + $0xa8] sm:$0xff] %v1960
        %2014 = vst [vmem:[%s177 + $0xb0] sm:$0xff] %v1963
        %2015 = vst [vmem:[%s177 + $0xb8] sm:$0xff] %v1966
        %2016 = vst [vmem:[%s177 + $0xc0] sm:$0xff] %v1969
        %2017 = vst [vmem:[%s177 + $0xc8] sm:$0xff] %v1972
        %2018 = vst [vmem:[%s177 + $0xd0] sm:$0xff] %v1975
        %2019 = vst [vmem:[%s177 + $0xd8] sm:$0xff] %v1978
        %2020 = vst [vmem:[%s177 + $0xe0] sm:$0xff] %v1981
        %2021 = vst [vmem:[%s177 + $0xe8] sm:$0xff] %v1984
        %2022 = vst [vmem:[%s177 + $0xf0] sm:$0xff] %v1987
        %2023 = vst [vmem:[%s177 + $0xf8] sm:$0xff] %v1990
        %s2024 = sand.u32 %s107, 1
        %s2025 = scalar_lea.sflag [#allocation3], %s2024
        %s2026 = sand.u32 %s107, 1
        %s2027 = smul.addr %s2026, 256
        %s2028 = scalar_lea.vmem [#allocation2], %s2027
        // Predicated region
        $region33: #{tpu_custom_call.1} parent=31 // pred_check
          %p2029 = pneg %p117
        $region34: #{tpu_custom_call.1} parent=31 // pred_check_branch
          %2031 = sbr.rel (%p2029) target = $region36
        $region35: #{tpu_custom_call.1} parent=31 // pred_region
          %s2032 = smul.u32 16, %s22
          %2034 = vsyncadd %s2025, 0
          %s2035 = smul.addr %s2032, 2
          %s2036 = smul.addr %s21, 32
          %s2037 = sadd.s32 %s2035, %s2036
          %s2038 = smul.addr %s2037, 8
          %s2039 = scalar_lea.hbm %s3, %s2038
          %s2040 = sshll.u32 %s2028, 4
          %s2041 = int_to_ptr.vmem [resolvable:$true] %s2040
          %s2042 = sshll.u32 %s2039, 4
          %s2043 = int_to_ptr.hbm [resolvable:$true] %s2042
          %2048 = dma.vmem_to_hbm [thread:$0]  %s2041, 4096, %s2043, %s2025, 128, 128, 8
        $region36: #{tpu_custom_call.1} parent=31 // pred_fallthru
          _
      $region32: #{tpu_custom_call.1} parent=5 // pred_fallthru
        _
      %p2049 = scmp.le.s32.totalorder 2, %s12
      // Predicated region
      $region37: #{tpu_custom_call.1} parent=5 // pred_check
        %p2050 = pneg %p2049
      $region38: #{tpu_custom_call.1} parent=5 // pred_check_branch
        %2052 = sbr.rel (%p2050) target = $region40
      $region39: #{tpu_custom_call.1} parent=5 // pred_region
        %s2053 = ssub.s32 %s12, 2
        // Predicated region
        $region41: #{tpu_custom_call.1} parent=39 // pred_check
          %p2054 = pneg %p123
        $region42: #{tpu_custom_call.1} parent=39 // pred_check_branch
          %2056 = sbr.rel (%p2054) target = $region44
        $region43: #{tpu_custom_call.1} parent=39 // pred_region
          %s2057 = sand.u32 %s108, 1
          %s2058 = scalar_lea.sflag [#allocation3], %s2057
          %s2059 = sand.u32 %s108, 1
          %s2060 = smul.addr %s2059, 256
          %s2061 = scalar_lea.vmem [#allocation2], %s2060
          %2063 = dma.done %s2058, 4096
        $region44: #{tpu_custom_call.1} parent=39 // pred_fallthru
          _
      $region40: #{tpu_custom_call.1} parent=5 // pred_fallthru
        _
    $region6: #{tpu_custom_call.1} parent=1 // loop_footer
      %s16 = sadd.s32 1, %s12
    $region7: #{tpu_custom_call.1} parent=1 // loop_footer_branch
      %11 = sbr.rel target = $region3
    $region8: #{tpu_custom_call.1} parent=1 // loop_exit
      _
    %2064 = vsyncpa [#allocation3], 1
    %s2065 = scalar_lea.sflag [#allocation3], 1
    %2066 = vsyncpa %s2065, 1

// kernel: tpu_custom_call.1
$region0: #{tpu_custom_call.1}
  #allocation0 [shape = 'u32[]', space=smem, size = 0x4, offset = 0x4, fixed_abs, tag = 'smem constant byte address 0x4 - core index']
  #allocation1 [shape = 'u32[72,128]{1,0:T(1,128)}', space=vmem, size = 0x9000, scoped, tag = 'internal scratch']
  %s0 = inlined_call_operand.vmem [shape: f32[2,18,18,4], index: 0, kind: input, shape index: {}]
  %s1 = inlined_call_operand.vmem [shape: f32[9,4,128], index: 1, kind: input, shape index: {}]
  %s2 = inlined_call_operand.vmem [shape: f32[1,128], index: 2, kind: input, shape index: {}]
  %s3 = inlined_call_operand.hbm [shape: f32[2,16,16,128], index: 3, kind: output, shape index: {}]
  %s4 = sld [smem:[#allocation0]]
  $region45: #{tpu_custom_call.1} parent=0
    _
  %s6 = ssub.s32 1, %s4
  %s7 = scalar_select 0, %s6, %s4
  $region1: #{tpu_custom_call.1} parent=0
    #allocation2 [shape = 'u8[262144]{0}', space=vmem, size = 0x40000, scoped, tag = 'output window, operand 0']
    #allocation3 [shape = 's32[2]{0}', space=sflag, size = 0x8, scoped, tag = 'scoped memory for tpu_custom_call.1']
    %8 = vsyncpa [#allocation3], 0
    %s9 = scalar_lea.sflag [#allocation3], 1
    %10 = vsyncpa %s9, 0
    loop: start=0, step=1, limit=4
    $region2: #{tpu_custom_call.1} parent=1 // loop_pre_header
      _
    $region3: #{tpu_custom_call.1} parent=1 // loop_header
      %s12 = sphi 0, %s16
      %p13 = scmp.ge.s32.totalorder %s12, 4
      %s19 = sphi 0, %s31
      %s20 = sphi 0, %s27
      %s21 = sphi 0, %s19
      %s22 = sphi 0, %s20
      %s23 = sphi 0, %s21
      %s24 = sphi 0, %s22
      %s34 = sphi 0, %s36
      %s37 = sphi 0, %s34
      %s38 = sphi 0, %s37
      %s54 = sphi 0, %s38
      %s58 = sphi 0, %s58
      %s60 = sphi 0, %s58
      %s61 = sphi 0, %s60
      %s75 = sphi 0, %s61
      %s79 = sphi 0, %s79
      %s81 = sphi 0, %s79
      %s82 = sphi 0, %s81
      %s96 = sphi 0, %s82
      %s104 = sphi 0, %s106
      %s107 = sphi 0, %s104
      %s108 = sphi 0, %s107
      %s124 = sphi 0, %s108
    $region4: #{tpu_custom_call.1} parent=1 // loop_header_branch
      %15 = sbr.rel (%p13) target = $region8
    $region5: #{tpu_custom_call.1} parent=1 // loop_body
      %s17 = ssub.s32 %s12, 1
      %s18 = ssub.s32 %s12, 2
      %s25 = sadd.s32 1, %s20
      %p26 = scmp.ge.s32.totalorder %s25, 1
      %s27 = scalar_select %p26, 0, %s25
      %s28 = sadd.s32 1, %s19
      %s29 = scalar_select %p26, %s28, %s19
      %p30 = scmp.ge.s32.totalorder %s29, 2
      %s31 = scalar_select %p30, 0, %s29
      %s32 = ssub.s32 %s19, %s31
      %p33 = scmp.eq.s32.totalorder %s32, 0
      %s35 = sadd.s32 %s34, 1
      %s36 = scalar_select %p33, %s34, %s35
      %p39 = pneg %p33
      %p40 = scmp.eq.s32.totalorder %s12, 1
      %p41 = por %p39, %p40
      %p42 = scmp.ne.s32.totalorder %s34, %s37
      %p43 = scmp.eq.s32.totalorder %s12, 0
      %p44 = por %p42, %p43
      %p45 = scmp.ne.s32.totalorder %s34, %s37
      %p46 = scmp.eq.s32.totalorder %s17, 1
      %p47 = por %p45, %p46
      %p48 = scmp.ne.s32.totalorder %s37, %s38
      %p49 = scmp.eq.s32.totalorder %s17, 0
      %p50 = por %p48, %p49
      %p51 = scmp.ne.s32.totalorder %s37, %s38
      %p52 = scmp.eq.s32.totalorder %s18, 1
      %p53 = por %p51, %p52
      %p55 = scmp.ne.s32.totalorder %s38, %s54
      %p56 = scmp.eq.s32.totalorder %s18, 0
      %p57 = por %p55, %p56
      %s59 = sadd.s32 %s58, 1
      %p62 = scmp.eq.s32.totalorder %s12, 1
      %p63 = scmp.ne.s32.totalorder %s58, %s60
      %p64 = scmp.eq.s32.totalorder %s12, 0
      %p65 = por %p63, %p64
      %p66 = scmp.ne.s32.totalorder %s58, %s60
      %p67 = scmp.eq.s32.totalorder %s17, 1
      %p68 = por %p66, %p67
      %p69 = scmp.ne.s32.totalorder %s60, %s61
      %p70 = scmp.eq.s32.totalorder %s17, 0
      %p71 = por %p69, %p70
      %p72 = scmp.ne.s32.totalorder %s60, %s61
      %p73 = scmp.eq.s32.totalorder %s18, 1
      %p74 = por %p72, %p73
      %p76 = scmp.ne.s32.totalorder %s61, %s75
      %p77 = scmp.eq.s32.totalorder %s18, 0
      %p78 = por %p76, %p77
      %s80 = sadd.s32 %s79, 1
      %p83 = scmp.eq.s32.totalorder %s12, 1
      %p84 = scmp.ne.s32.totalorder %s79, %s81
      %p85 = scmp.eq.s32.totalorder %s12, 0
      %p86 = por %p84, %p85
      %p87 = scmp.ne.s32.totalorder %s79, %s81
      %p88 = scmp.eq.s32.totalorder %s17, 1
      %p89 = por %p87, %p88
      %p90 = scmp.ne.s32.totalorder %s81, %s82
      %p91 = scmp.eq.s32.totalorder %s17, 0
      %p92 = por %p90, %p91
      %p93 = scmp.ne.s32.totalorder %s81, %s82
      %p94 = scmp.eq.s32.totalorder %s18, 1
      %p95 = por %p93, %p94
      %p97 = scmp.ne.s32.totalorder %s82, %s96
      %p98 = scmp.eq.s32.totalorder %s18, 0
      %p99 = por %p97, %p98
      %s100 = ssub.s32 %s19, %s31
      %s101 = ssub.s32 %s20, %s27
      %s102 = sor.u32 %s100, %s101
      %p103 = scmp.eq.s32.totalorder %s102, 0
      %s105 = sadd.s32 %s104, 1
      %s106 = scalar_select %p103, %s104, %s105
      %p109 = pneg %p103
      %p110 = scmp.eq.s32.totalorder %s12, 1
      %p111 = por %p109, %p110
      %p112 = scmp.ne.s32.totalorder %s104, %s107
      %p113 = scmp.eq.s32.totalorder %s12, 0
      %p114 = por %p112, %p113
      %p115 = scmp.ne.s32.totalorder %s104, %s107
      %p116 = scmp.eq.s32.totalorder %s17, 1
      %p117 = por %p115, %p116
      %p118 = scmp.ne.s32.totalorder %s107, %s108
      %p119 = scmp.eq.s32.totalorder %s17, 0
      %p120 = por %p118, %p119
      %p121 = scmp.ne.s32.totalorder %s107, %s108
      %p122 = scmp.eq.s32.totalorder %s18, 1
      %p123 = por %p121, %p122
      %p125 = scmp.ne.s32.totalorder %s108, %s124
      %p126 = scmp.eq.s32.totalorder %s18, 0
      %p127 = por %p125, %p126
      %p128 = scmp.le.s32.totalorder 1, %s12
      %p129 = scmp.lt.s32.totalorder %s12, 3
      %p130 = pnand %p128, %p129
      %p131 = pneg %p130
      // Predicated region
      $region9: #{tpu_custom_call.1} parent=5 // pred_check
        _
      $region10: #{tpu_custom_call.1} parent=5 // pred_check_branch
        %133 = sbr.rel (%p130) target = $region12
      $region11: #{tpu_custom_call.1} parent=5 // pred_region
        %s134 = ssub.s32 %s12, 1
        // Predicated region
        $region13: #{tpu_custom_call.1} parent=11 // pred_check
          %p135 = pneg %p71
        $region14: #{tpu_custom_call.1} parent=11 // pred_check_branch
          %137 = sbr.rel (%p135) target = $region16
        $region15: #{tpu_custom_call.1} parent=11 // pred_region
          _
        $region16: #{tpu_custom_call.1} parent=11 // pred_fallthru
          _
        // Predicated region
        $region17: #{tpu_custom_call.1} parent=11 // pred_check
          %p138 = pneg %p92
        $region18: #{tpu_custom_call.1} parent=11 // pred_check_branch
          %140 = sbr.rel (%p138) target = $region20
        $region19: #{tpu_custom_call.1} parent=11 // pred_region
          _
        $region20: #{tpu_custom_call.1} parent=11 // pred_fallthru
          _
      $region12: #{tpu_custom_call.1} parent=5 // pred_fallthru
        _
      %p141 = scmp.lt.s32.totalorder %s12, 2
      // Predicated region
      $region21: #{tpu_custom_call.1} parent=5 // pred_check
        %p142 = pneg %p141
      $region22: #{tpu_custom_call.1} parent=5 // pred_check_branch
        %144 = sbr.rel (%p142) target = $region24
      $region23: #{tpu_custom_call.1} parent=5 // pred_region
        // Predicated region
        $region25: #{tpu_custom_call.1} parent=23 // pred_check
          %p145 = pneg %p44
        $region26: #{tpu_custom_call.1} parent=23 // pred_check_branch
          %147 = sbr.rel (%p145) target = $region28
        $region27: #{tpu_custom_call.1} parent=23 // pred_region
          %p148 = scmp.lt.s32.totalorder %s19, 1
          %s149 = scalar_select %p148, %s19, 1
          %s150 = smul.addr %s149, 54
          %s151 = smul.addr %s150, 8
          %s152 = scalar_lea.vmem %s0, %s151
        $region28: #{tpu_custom_call.1} parent=23 // pred_fallthru
          _
      $region24: #{tpu_custom_call.1} parent=5 // pred_fallthru
        _
      %p153 = scmp.le.s32.totalorder 1, %s12
      %p154 = scmp.lt.s32.totalorder %s12, 3
      %p155 = pnand %p153, %p154
      %p156 = pneg %p155
      // Predicated region
      $region29: #{tpu_custom_call.1} parent=5 // pred_check
        _
      $region30: #{tpu_custom_call.1} parent=5 // pred_check_branch
        %158 = sbr.rel (%p155) target = $region32
      $region31: #{tpu_custom_call.1} parent=5 // pred_region
        %s159 = ssub.s32 %s12, 1
        %p160 = scmp.lt.s32.totalorder %s21, 1
        %s161 = scalar_select %p160, %s21, 1
        %s162 = smul.addr %s161, 54
        %s163 = smul.addr %s162, 8
        %s164 = scalar_lea.vmem %s0, %s163
        %p165 = pneg %p50
        %p166 = pneg %p47
        %p167 = pneg %p71
        %p168 = pneg %p68
        %p169 = pneg %p92
        %p170 = pneg %p89
        %p171 = pneg %p120
        %p172 = pneg %p117
        %s173 = sand.u32 %s107, 1
        %s174 = scalar_lea.sflag [#allocation3], %s173
        %s175 = sand.u32 %s107, 1
        %s176 = smul.addr %s175, 256
        %s177 = scalar_lea.vmem [#allocation2], %s176
        %p178 = scmp.lt.s32.totalorder %s21, 1
        %s179 = scalar_select %p178, %s21, 1
        %s180 = smul.addr %s179, 54
        %s181 = smul.addr %s180, 8
        %s182 = scalar_lea.vmem %s0, %s181
        %s183 = smul.u32 16, %s22
        %s184 = smul.u32 %s22, 16
        %s185 = smul.u32 %s184, 24
        %s186 = scalar_lea.vmem %s182, %s185
        %v187 = vld [vmem:[%s186] sm:$0xff]
        %v188 = vld [vmem:[%s186 + $0x8] sm:$0xff]
        %v189 = vld [vmem:[%s186 + $0x18] sm:$0xff]
        %v190 = vld [vmem:[%s186 + $0x20] sm:$0xff]
        %v191 = vld [vmem:[%s186 + $0x30] sm:$0xff]
        %v192 = vld [vmem:[%s186 + $0x38] sm:$0xff]
        %v193 = vld [vmem:[%s186 + $0x48] sm:$0xff]
        %v194 = vld [vmem:[%s186 + $0x50] sm:$0xff]
        %v195 = vld [vmem:[%s186 + $0x60] sm:$0xff]
        %v196 = vld [vmem:[%s186 + $0x68] sm:$0xff]
        %v197 = vld [vmem:[%s186 + $0x78] sm:$0xff]
        %v198 = vld [vmem:[%s186 + $0x80] sm:$0xff]
        %v199 = vld [vmem:[%s186 + $0x90] sm:$0xff]
        %v200 = vld [vmem:[%s186 + $0x98] sm:$0xff]
        %v201 = vld [vmem:[%s186 + $0xa8] sm:$0xff]
        %v202 = vld [vmem:[%s186 + $0xb0] sm:$0xff]
        %v203 = vld [vmem:[%s186 + $0xc0] sm:$0xff]
        %v204 = vld [vmem:[%s186 + $0xc8] sm:$0xff]
        %v205 = vld [vmem:[%s186 + $0xd8] sm:$0xff]
        %v206 = vld [vmem:[%s186 + $0xe0] sm:$0xff]
        %v207 = vld [vmem:[%s186 + $0xf0] sm:$0xff]
        %v208 = vld [vmem:[%s186 + $0xf8] sm:$0xff]
        %v209 = vld [vmem:[%s186 + $0x108] sm:$0xff]
        %v210 = vld [vmem:[%s186 + $0x110] sm:$0xff]
        %v211 = vld [vmem:[%s186 + $0x120] sm:$0xff]
        %v212 = vld [vmem:[%s186 + $0x128] sm:$0xff]
        %v213 = vld [vmem:[%s186 + $0x138] sm:$0xff]
        %v214 = vld [vmem:[%s186 + $0x140] sm:$0xff]
        %v215 = vld [vmem:[%s186 + $0x150] sm:$0xff]
        %v216 = vld [vmem:[%s186 + $0x158] sm:$0xff]
        %v217 = vld [vmem:[%s186 + $0x168] sm:$0xff]
        %v218 = vld [vmem:[%s186 + $0x170] sm:$0xff]
        %v219 = vld [vmem:[%s1] sm:$0xf]
        %v220 = vld [vmem:[%s186 + $0x1] sm:$0xff]
        %v221 = vld [vmem:[%s186 + $0x9] sm:$0xff]
        %v222 = vld [vmem:[%s186 + $0x19] sm:$0xff]
        %v223 = vld [vmem:[%s186 + $0x21] sm:$0xff]
        %v224 = vld [vmem:[%s186 + $0x31] sm:$0xff]
        %v225 = vld [vmem:[%s186 + $0x39] sm:$0xff]
        %v226 = vld [vmem:[%s186 + $0x49] sm:$0xff]
        %v227 = vld [vmem:[%s186 + $0x51] sm:$0xff]
        %v228 = vld [vmem:[%s186 + $0x61] sm:$0xff]
        %v229 = vld [vmem:[%s186 + $0x69] sm:$0xff]
        %v230 = vld [vmem:[%s186 + $0x79] sm:$0xff]
        %v231 = vld [vmem:[%s186 + $0x81] sm:$0xff]
        %v232 = vld [vmem:[%s186 + $0x91] sm:$0xff]
        %v233 = vld [vmem:[%s186 + $0x99] sm:$0xff]
        %v234 = vld [vmem:[%s186 + $0xa9] sm:$0xff]
        %v235 = vld [vmem:[%s186 + $0xb1] sm:$0xff]
        %v236 = vld [vmem:[%s186 + $0xc1] sm:$0xff]
        %v237 = vld [vmem:[%s186 + $0xc9] sm:$0xff]
        %v238 = vld [vmem:[%s186 + $0xd9] sm:$0xff]
        %v239 = vld [vmem:[%s186 + $0xe1] sm:$0xff]
        %v240 = vld [vmem:[%s186 + $0xf1] sm:$0xff]
        %v241 = vld [vmem:[%s186 + $0xf9] sm:$0xff]
        %v242 = vld [vmem:[%s186 + $0x109] sm:$0xff]
        %v243 = vld [vmem:[%s186 + $0x111] sm:$0xff]
        %v244 = vld [vmem:[%s186 + $0x121] sm:$0xff]
        %v245 = vld [vmem:[%s186 + $0x129] sm:$0xff]
        %v246 = vld [vmem:[%s186 + $0x139] sm:$0xff]
        %v247 = vld [vmem:[%s186 + $0x141] sm:$0xff]
        %v248 = vld [vmem:[%s186 + $0x151] sm:$0xff]
        %v249 = vld [vmem:[%s186 + $0x159] sm:$0xff]
        %v250 = vld [vmem:[%s186 + $0x169] sm:$0xff]
        %v251 = vld [vmem:[%s186 + $0x171] sm:$0xff]
        %s252 = scalar_lea.vmem %s1, 4
        %v253 = vld [vmem:[%s252] sm:$0xf]
        %vm254 = vcmask 31744
        %v256 = vsel %vm254, %v220, 0
        %v259 = vsel %vm254, %v221, 0
        %v262 = vsel %vm254, %v222, 0
        %v265 = vsel %vm254, %v223, 0
        %v268 = vsel %vm254, %v224, 0
        %v271 = vsel %vm254, %v225, 0
        %v274 = vsel %vm254, %v226, 0
        %v277 = vsel %vm254, %v227, 0
        %v280 = vsel %vm254, %v228, 0
        %v283 = vsel %vm254, %v229, 0
        %v286 = vsel %vm254, %v230, 0
        %v289 = vsel %vm254, %v231, 0
        %v292 = vsel %vm254, %v232, 0
        %v295 = vsel %vm254, %v233, 0
        %v298 = vsel %vm254, %v234, 0
        %v301 = vsel %vm254, %v235, 0
        %v304 = vsel %vm254, %v236, 0
        %v307 = vsel %vm254, %v237, 0
        %v310 = vsel %vm254, %v238, 0
        %v313 = vsel %vm254, %v239, 0
        %v316 = vsel %vm254, %v240, 0
        %v319 = vsel %vm254, %v241, 0
        %v322 = vsel %vm254, %v242, 0
        %v325 = vsel %vm254, %v243, 0
        %v328 = vsel %vm254, %v244, 0
        %v331 = vsel %vm254, %v245, 0
        %v334 = vsel %vm254, %v246, 0
        %v337 = vsel %vm254, %v247, 0
        %v340 = vsel %vm254, %v248, 0
        %v343 = vsel %vm254, %v249, 0
        %v346 = vsel %vm254, %v250, 0
        %v349 = vsel %vm254, %v251, 0
        %vm351 = vcmask 1043456
        %v353 = vsel %vm351, %v253, 0
        %355 = vmatpush.msra.mxu0 0.0
        %356 = vmatpush.msra.mxu0 0.0
        %357 = vmatpush.msra.mxu0 0.0
        %358 = vmatpush.msra.mxu0 0.0
        %359 = vmatpush.msra.mxu0 0.0
        %360 = vmatpush.msra.mxu0 0.0
        %361 = vmatpush.msra.mxu0 0.0
        %362 = vmatpush.msra.mxu0 0.0
        %363 = vmatpush.msra.mxu0 0.0
        %364 = vmatpush.msra.mxu0 0.0
        %365 = vmatpush.msra.mxu0 0.0
        %366 = vmatpush.msra.mxu0 0.0
        %367 = vmatpush.msra.mxu0 0.0
        %368 = vmatpush.msra.mxu0 0.0
        %369 = vmatpush.msra.mxu0 0.0
        %370 = vmatpush.msra.mxu0 %v353
        %371 = vmatmul.f32.gmra.mxu0 %v256
        %v372 = vpop.f32.mrf.mxu0
        %v373 = vadd.f32 0.0, %v372
        %374 = vmatmul.f32.gmra.mxu0 %v259
        %v375 = vpop.f32.mrf.mxu0
        %v376 = vadd.f32 0.0, %v375
        %377 = vmatmul.f32.gmra.mxu0 %v262
        %v378 = vpop.f32.mrf.mxu0
        %v379 = vadd.f32 0.0, %v378
        %380 = vmatmul.f32.gmra.mxu0 %v265
        %v381 = vpop.f32.mrf.mxu0
        %v382 = vadd.f32 0.0, %v381
        %383 = vmatmul.f32.gmra.mxu0 %v268
        %v384 = vpop.f32.mrf.mxu0
        %v385 = vadd.f32 0.0, %v384
        %386 = vmatmul.f32.gmra.mxu0 %v271
        %v387 = vpop.f32.mrf.mxu0
        %v388 = vadd.f32 0.0, %v387
        %389 = vmatmul.f32.gmra.mxu0 %v274
        %v390 = vpop.f32.mrf.mxu0
        %v391 = vadd.f32 0.0, %v390
        %392 = vmatmul.f32.gmra.mxu0 %v277
        %v393 = vpop.f32.mrf.mxu0
        %v394 = vadd.f32 0.0, %v393
        %395 = vmatmul.f32.gmra.mxu0 %v280
        %v396 = vpop.f32.mrf.mxu0
        %v397 = vadd.f32 0.0, %v396
        %398 = vmatmul.f32.gmra.mxu0 %v283
        %v399 = vpop.f32.mrf.mxu0
        %v400 = vadd.f32 0.0, %v399
        %401 = vmatmul.f32.gmra.mxu0 %v286
        %v402 = vpop.f32.mrf.mxu0
        %v403 = vadd.f32 0.0, %v402
        %404 = vmatmul.f32.gmra.mxu0 %v289
        %v405 = vpop.f32.mrf.mxu0
        %v406 = vadd.f32 0.0, %v405
        %407 = vmatmul.f32.gmra.mxu0 %v292
        %v408 = vpop.f32.mrf.mxu0
        %v409 = vadd.f32 0.0, %v408
        %410 = vmatmul.f32.gmra.mxu0 %v295
        %v411 = vpop.f32.mrf.mxu0
        %v412 = vadd.f32 0.0, %v411
        %413 = vmatmul.f32.gmra.mxu0 %v298
        %v414 = vpop.f32.mrf.mxu0
        %v415 = vadd.f32 0.0, %v414
        %416 = vmatmul.f32.gmra.mxu0 %v301
        %v417 = vpop.f32.mrf.mxu0
        %v418 = vadd.f32 0.0, %v417
        %419 = vmatmul.f32.gmra.mxu0 %v304
        %v420 = vpop.f32.mrf.mxu0
        %v421 = vadd.f32 0.0, %v420
        %422 = vmatmul.f32.gmra.mxu0 %v307
        %v423 = vpop.f32.mrf.mxu0
        %v424 = vadd.f32 0.0, %v423
        %425 = vmatmul.f32.gmra.mxu0 %v310
        %v426 = vpop.f32.mrf.mxu0
        %v427 = vadd.f32 0.0, %v426
        %428 = vmatmul.f32.gmra.mxu0 %v313
        %v429 = vpop.f32.mrf.mxu0
        %v430 = vadd.f32 0.0, %v429
        %431 = vmatmul.f32.gmra.mxu0 %v316
        %v432 = vpop.f32.mrf.mxu0
        %v433 = vadd.f32 0.0, %v432
        %434 = vmatmul.f32.gmra.mxu0 %v319
        %v435 = vpop.f32.mrf.mxu0
        %v436 = vadd.f32 0.0, %v435
        %437 = vmatmul.f32.gmra.mxu0 %v322
        %v438 = vpop.f32.mrf.mxu0
        %v439 = vadd.f32 0.0, %v438
        %440 = vmatmul.f32.gmra.mxu0 %v325
        %v441 = vpop.f32.mrf.mxu0
        %v442 = vadd.f32 0.0, %v441
        %443 = vmatmul.f32.gmra.mxu0 %v328
        %v444 = vpop.f32.mrf.mxu0
        %v445 = vadd.f32 0.0, %v444
        %446 = vmatmul.f32.gmra.mxu0 %v331
        %v447 = vpop.f32.mrf.mxu0
        %v448 = vadd.f32 0.0, %v447
        %449 = vmatmul.f32.gmra.mxu0 %v334
        %v450 = vpop.f32.mrf.mxu0
        %v451 = vadd.f32 0.0, %v450
        %452 = vmatmul.f32.gmra.mxu0 %v337
        %v453 = vpop.f32.mrf.mxu0
        %v454 = vadd.f32 0.0, %v453
        %455 = vmatmul.f32.gmra.mxu0 %v340
        %v456 = vpop.f32.mrf.mxu0
        %v457 = vadd.f32 0.0, %v456
        %458 = vmatmul.f32.gmra.mxu0 %v343
        %v459 = vpop.f32.mrf.mxu0
        %v460 = vadd.f32 0.0, %v459
        %461 = vmatmul.f32.gmra.mxu0 %v346
        %v462 = vpop.f32.mrf.mxu0
        %v463 = vadd.f32 0.0, %v462
        %464 = vmatmul.f32.gmra.mxu0 %v349
        %v465 = vpop.f32.mrf.mxu0
        %v466 = vadd.f32 0.0, %v465
        %467 = vdwg.mxu0
        %v469 = vsel %vm254, %v187, 0
        %v472 = vsel %vm254, %v188, 0
        %v475 = vsel %vm254, %v189, 0
        %v478 = vsel %vm254, %v190, 0
        %v481 = vsel %vm254, %v191, 0
        %v484 = vsel %vm254, %v192, 0
        %v487 = vsel %vm254, %v193, 0
        %v490 = vsel %vm254, %v194, 0
        %v493 = vsel %vm254, %v195, 0
        %v496 = vsel %vm254, %v196, 0
        %v499 = vsel %vm254, %v197, 0
        %v502 = vsel %vm254, %v198, 0
        %v505 = vsel %vm254, %v199, 0
        %v508 = vsel %vm254, %v200, 0
        %v511 = vsel %vm254, %v201, 0
        %v514 = vsel %vm254, %v202, 0
        %v517 = vsel %vm254, %v203, 0
        %v520 = vsel %vm254, %v204, 0
        %v523 = vsel %vm254, %v205, 0
        %v526 = vsel %vm254, %v206, 0
        %v529 = vsel %vm254, %v207, 0
        %v532 = vsel %vm254, %v208, 0
        %v535 = vsel %vm254, %v209, 0
        %v538 = vsel %vm254, %v210, 0
        %v541 = vsel %vm254, %v211, 0
        %v544 = vsel %vm254, %v212, 0
        %v547 = vsel %vm254, %v213, 0
        %v550 = vsel %vm254, %v214, 0
        %v553 = vsel %vm254, %v215, 0
        %v556 = vsel %vm254, %v216, 0
        %v559 = vsel %vm254, %v217, 0
        %v562 = vsel %vm254, %v218, 0
        %v565 = vsel %vm351, %v219, 0
        %567 = vmatpush.msra.mxu0 0.0
        %568 = vmatpush.msra.mxu0 0.0
        %569 = vmatpush.msra.mxu0 0.0
        %570 = vmatpush.msra.mxu0 0.0
        %571 = vmatpush.msra.mxu0 0.0
        %572 = vmatpush.msra.mxu0 0.0
        %573 = vmatpush.msra.mxu0 0.0
        %574 = vmatpush.msra.mxu0 0.0
        %575 = vmatpush.msra.mxu0 0.0
        %576 = vmatpush.msra.mxu0 0.0
        %577 = vmatpush.msra.mxu0 0.0
        %578 = vmatpush.msra.mxu0 0.0
        %579 = vmatpush.msra.mxu0 0.0
        %580 = vmatpush.msra.mxu0 0.0
        %581 = vmatpush.msra.mxu0 0.0
        %582 = vmatpush.msra.mxu0 %v565
        %583 = vmatmul.f32.gmra.mxu0 %v469
        %v584 = vpop.f32.mrf.mxu0
        %v585 = vadd.f32 %v373, %v584
        %586 = vmatmul.f32.gmra.mxu0 %v472
        %v587 = vpop.f32.mrf.mxu0
        %v588 = vadd.f32 %v376, %v587
        %589 = vmatmul.f32.gmra.mxu0 %v475
        %v590 = vpop.f32.mrf.mxu0
        %v591 = vadd.f32 %v379, %v590
        %592 = vmatmul.f32.gmra.mxu0 %v478
        %v593 = vpop.f32.mrf.mxu0
        %v594 = vadd.f32 %v382, %v593
        %595 = vmatmul.f32.gmra.mxu0 %v481
        %v596 = vpop.f32.mrf.mxu0
        %v597 = vadd.f32 %v385, %v596
        %598 = vmatmul.f32.gmra.mxu0 %v484
        %v599 = vpop.f32.mrf.mxu0
        %v600 = vadd.f32 %v388, %v599
        %601 = vmatmul.f32.gmra.mxu0 %v487
        %v602 = vpop.f32.mrf.mxu0
        %v603 = vadd.f32 %v391, %v602
        %604 = vmatmul.f32.gmra.mxu0 %v490
        %v605 = vpop.f32.mrf.mxu0
        %v606 = vadd.f32 %v394, %v605
        %607 = vmatmul.f32.gmra.mxu0 %v493
        %v608 = vpop.f32.mrf.mxu0
        %v609 = vadd.f32 %v397, %v608
        %610 = vmatmul.f32.gmra.mxu0 %v496
        %v611 = vpop.f32.mrf.mxu0
        %v612 = vadd.f32 %v400, %v611
        %613 = vmatmul.f32.gmra.mxu0 %v499
        %v614 = vpop.f32.mrf.mxu0
        %v615 = vadd.f32 %v403, %v614
        %616 = vmatmul.f32.gmra.mxu0 %v502
        %v617 = vpop.f32.mrf.mxu0
        %v618 = vadd.f32 %v406, %v617
        %619 = vmatmul.f32.gmra.mxu0 %v505
        %v620 = vpop.f32.mrf.mxu0
        %v621 = vadd.f32 %v409, %v620
        %622 = vmatmul.f32.gmra.mxu0 %v508
        %v623 = vpop.f32.mrf.mxu0
        %v624 = vadd.f32 %v412, %v623
        %625 = vmatmul.f32.gmra.mxu0 %v511
        %v626 = vpop.f32.mrf.mxu0
        %v627 = vadd.f32 %v415, %v626
        %628 = vmatmul.f32.gmra.mxu0 %v514
        %v629 = vpop.f32.mrf.mxu0
        %v630 = vadd.f32 %v418, %v629
        %631 = vmatmul.f32.gmra.mxu0 %v517
        %v632 = vpop.f32.mrf.mxu0
        %v633 = vadd.f32 %v421, %v632
        %634 = vmatmul.f32.gmra.mxu0 %v520
        %v635 = vpop.f32.mrf.mxu0
        %v636 = vadd.f32 %v424, %v635
        %637 = vmatmul.f32.gmra.mxu0 %v523
        %v638 = vpop.f32.mrf.mxu0
        %v639 = vadd.f32 %v427, %v638
        %640 = vmatmul.f32.gmra.mxu0 %v526
        %v641 = vpop.f32.mrf.mxu0
        %v642 = vadd.f32 %v430, %v641
        %643 = vmatmul.f32.gmra.mxu0 %v529
        %v644 = vpop.f32.mrf.mxu0
        %v645 = vadd.f32 %v433, %v644
        %646 = vmatmul.f32.gmra.mxu0 %v532
        %v647 = vpop.f32.mrf.mxu0
        %v648 = vadd.f32 %v436, %v647
        %649 = vmatmul.f32.gmra.mxu0 %v535
        %v650 = vpop.f32.mrf.mxu0
        %v651 = vadd.f32 %v439, %v650
        %652 = vmatmul.f32.gmra.mxu0 %v538
        %v653 = vpop.f32.mrf.mxu0
        %v654 = vadd.f32 %v442, %v653
        %655 = vmatmul.f32.gmra.mxu0 %v541
        %v656 = vpop.f32.mrf.mxu0
        %v657 = vadd.f32 %v445, %v656
        %658 = vmatmul.f32.gmra.mxu0 %v544
        %v659 = vpop.f32.mrf.mxu0
        %v660 = vadd.f32 %v448, %v659
        %661 = vmatmul.f32.gmra.mxu0 %v547
        %v662 = vpop.f32.mrf.mxu0
        %v663 = vadd.f32 %v451, %v662
        %664 = vmatmul.f32.gmra.mxu0 %v550
        %v665 = vpop.f32.mrf.mxu0
        %v666 = vadd.f32 %v454, %v665
        %667 = vmatmul.f32.gmra.mxu0 %v553
        %v668 = vpop.f32.mrf.mxu0
        %v669 = vadd.f32 %v457, %v668
        %670 = vmatmul.f32.gmra.mxu0 %v556
        %v671 = vpop.f32.mrf.mxu0
        %v672 = vadd.f32 %v460, %v671
        %673 = vmatmul.f32.gmra.mxu0 %v559
        %v674 = vpop.f32.mrf.mxu0
        %v675 = vadd.f32 %v463, %v674
        %676 = vmatmul.f32.gmra.mxu0 %v562
        %v677 = vpop.f32.mrf.mxu0
        %v678 = vadd.f32 %v466, %v677
        %679 = vdwg.mxu0
        %v680 = vld [vmem:[%s186 + $0x2] sm:$0xff]
        %v681 = vld [vmem:[%s186 + $0xa] sm:$0xff]
        %v682 = vld [vmem:[%s186 + $0x1a] sm:$0xff]
        %v683 = vld [vmem:[%s186 + $0x22] sm:$0xff]
        %v684 = vld [vmem:[%s186 + $0x32] sm:$0xff]
        %v685 = vld [vmem:[%s186 + $0x3a] sm:$0xff]
        %v686 = vld [vmem:[%s186 + $0x4a] sm:$0xff]
        %v687 = vld [vmem:[%s186 + $0x52] sm:$0xff]
        %v688 = vld [vmem:[%s186 + $0x62] sm:$0xff]
        %v689 = vld [vmem:[%s186 + $0x6a] sm:$0xff]
        %v690 = vld [vmem:[%s186 + $0x7a] sm:$0xff]
        %v691 = vld [vmem:[%s186 + $0x82] sm:$0xff]
        %v692 = vld [vmem:[%s186 + $0x92] sm:$0xff]
        %v693 = vld [vmem:[%s186 + $0x9a] sm:$0xff]
        %v694 = vld [vmem:[%s186 + $0xaa] sm:$0xff]
        %v695 = vld [vmem:[%s186 + $0xb2] sm:$0xff]
        %v696 = vld [vmem:[%s186 + $0xc2] sm:$0xff]
        %v697 = vld [vmem:[%s186 + $0xca] sm:$0xff]
        %v698 = vld [vmem:[%s186 + $0xda] sm:$0xff]
        %v699 = vld [vmem:[%s186 + $0xe2] sm:$0xff]
        %v700 = vld [vmem:[%s186 + $0xf2] sm:$0xff]
        %v701 = vld [vmem:[%s186 + $0xfa] sm:$0xff]
        %v702 = vld [vmem:[%s186 + $0x10a] sm:$0xff]
        %v703 = vld [vmem:[%s186 + $0x112] sm:$0xff]
        %v704 = vld [vmem:[%s186 + $0x122] sm:$0xff]
        %v705 = vld [vmem:[%s186 + $0x12a] sm:$0xff]
        %v706 = vld [vmem:[%s186 + $0x13a] sm:$0xff]
        %v707 = vld [vmem:[%s186 + $0x142] sm:$0xff]
        %v708 = vld [vmem:[%s186 + $0x152] sm:$0xff]
        %v709 = vld [vmem:[%s186 + $0x15a] sm:$0xff]
        %v710 = vld [vmem:[%s186 + $0x16a] sm:$0xff]
        %v711 = vld [vmem:[%s186 + $0x172] sm:$0xff]
        %s712 = scalar_lea.vmem %s1, 8
        %v713 = vld [vmem:[%s712] sm:$0xf]
        %v715 = vsel %vm254, %v680, 0
        %v718 = vsel %vm254, %v681, 0
        %v721 = vsel %vm254, %v682, 0
        %v724 = vsel %vm254, %v683, 0
        %v727 = vsel %vm254, %v684, 0
        %v730 = vsel %vm254, %v685, 0
        %v733 = vsel %vm254, %v686, 0
        %v736 = vsel %vm254, %v687, 0
        %v739 = vsel %vm254, %v688, 0
        %v742 = vsel %vm254, %v689, 0
        %v745 = vsel %vm254, %v690, 0
        %v748 = vsel %vm254, %v691, 0
        %v751 = vsel %vm254, %v692, 0
        %v754 = vsel %vm254, %v693, 0
        %v757 = vsel %vm254, %v694, 0
        %v760 = vsel %vm254, %v695, 0
        %v763 = vsel %vm254, %v696, 0
        %v766 = vsel %vm254, %v697, 0
        %v769 = vsel %vm254, %v698, 0
        %v772 = vsel %vm254, %v699, 0
        %v775 = vsel %vm254, %v700, 0
        %v778 = vsel %vm254, %v701, 0
        %v781 = vsel %vm254, %v702, 0
        %v784 = vsel %vm254, %v703, 0
        %v787 = vsel %vm254, %v704, 0
        %v790 = vsel %vm254, %v705, 0
        %v793 = vsel %vm254, %v706, 0
        %v796 = vsel %vm254, %v707, 0
        %v799 = vsel %vm254, %v708, 0
        %v802 = vsel %vm254, %v709, 0
        %v805 = vsel %vm254, %v710, 0
        %v808 = vsel %vm254, %v711, 0
        %v811 = vsel %vm351, %v713, 0
        %813 = vmatpush.msra.mxu0 0.0
        %814 = vmatpush.msra.mxu0 0.0
        %815 = vmatpush.msra.mxu0 0.0
        %816 = vmatpush.msra.mxu0 0.0
        %817 = vmatpush.msra.mxu0 0.0
        %818 = vmatpush.msra.mxu0 0.0
        %819 = vmatpush.msra.mxu0 0.0
        %820 = vmatpush.msra.mxu0 0.0
        %821 = vmatpush.msra.mxu0 0.0
        %822 = vmatpush.msra.mxu0 0.0
        %823 = vmatpush.msra.mxu0 0.0
        %824 = vmatpush.msra.mxu0 0.0
        %825 = vmatpush.msra.mxu0 0.0
        %826 = vmatpush.msra.mxu0 0.0
        %827 = vmatpush.msra.mxu0 0.0
        %828 = vmatpush.msra.mxu0 %v811
        %829 = vmatmul.f32.gmra.mxu0 %v715
        %v830 = vpop.f32.mrf.mxu0
        %v831 = vadd.f32 0.0, %v830
        %832 = vmatmul.f32.gmra.mxu0 %v718
        %v833 = vpop.f32.mrf.mxu0
        %v834 = vadd.f32 0.0, %v833
        %835 = vmatmul.f32.gmra.mxu0 %v721
        %v836 = vpop.f32.mrf.mxu0
        %v837 = vadd.f32 0.0, %v836
        %838 = vmatmul.f32.gmra.mxu0 %v724
        %v839 = vpop.f32.mrf.mxu0
        %v840 = vadd.f32 0.0, %v839
        %841 = vmatmul.f32.gmra.mxu0 %v727
        %v842 = vpop.f32.mrf.mxu0
        %v843 = vadd.f32 0.0, %v842
        %844 = vmatmul.f32.gmra.mxu0 %v730
        %v845 = vpop.f32.mrf.mxu0
        %v846 = vadd.f32 0.0, %v845
        %847 = vmatmul.f32.gmra.mxu0 %v733
        %v848 = vpop.f32.mrf.mxu0
        %v849 = vadd.f32 0.0, %v848
        %850 = vmatmul.f32.gmra.mxu0 %v736
        %v851 = vpop.f32.mrf.mxu0
        %v852 = vadd.f32 0.0, %v851
        %853 = vmatmul.f32.gmra.mxu0 %v739
        %v854 = vpop.f32.mrf.mxu0
        %v855 = vadd.f32 0.0, %v854
        %856 = vmatmul.f32.gmra.mxu0 %v742
        %v857 = vpop.f32.mrf.mxu0
        %v858 = vadd.f32 0.0, %v857
        %859 = vmatmul.f32.gmra.mxu0 %v745
        %v860 = vpop.f32.mrf.mxu0
        %v861 = vadd.f32 0.0, %v860
        %862 = vmatmul.f32.gmra.mxu0 %v748
        %v863 = vpop.f32.mrf.mxu0
        %v864 = vadd.f32 0.0, %v863
        %865 = vmatmul.f32.gmra.mxu0 %v751
        %v866 = vpop.f32.mrf.mxu0
        %v867 = vadd.f32 0.0, %v866
        %868 = vmatmul.f32.gmra.mxu0 %v754
        %v869 = vpop.f32.mrf.mxu0
        %v870 = vadd.f32 0.0, %v869
        %871 = vmatmul.f32.gmra.mxu0 %v757
        %v872 = vpop.f32.mrf.mxu0
        %v873 = vadd.f32 0.0, %v872
        %874 = vmatmul.f32.gmra.mxu0 %v760
        %v875 = vpop.f32.mrf.mxu0
        %v876 = vadd.f32 0.0, %v875
        %877 = vmatmul.f32.gmra.mxu0 %v763
        %v878 = vpop.f32.mrf.mxu0
        %v879 = vadd.f32 0.0, %v878
        %880 = vmatmul.f32.gmra.mxu0 %v766
        %v881 = vpop.f32.mrf.mxu0
        %v882 = vadd.f32 0.0, %v881
        %883 = vmatmul.f32.gmra.mxu0 %v769
        %v884 = vpop.f32.mrf.mxu0
        %v885 = vadd.f32 0.0, %v884
        %886 = vmatmul.f32.gmra.mxu0 %v772
        %v887 = vpop.f32.mrf.mxu0
        %v888 = vadd.f32 0.0, %v887
        %889 = vmatmul.f32.gmra.mxu0 %v775
        %v890 = vpop.f32.mrf.mxu0
        %v891 = vadd.f32 0.0, %v890
        %892 = vmatmul.f32.gmra.mxu0 %v778
        %v893 = vpop.f32.mrf.mxu0
        %v894 = vadd.f32 0.0, %v893
        %895 = vmatmul.f32.gmra.mxu0 %v781
        %v896 = vpop.f32.mrf.mxu0
        %v897 = vadd.f32 0.0, %v896
        %898 = vmatmul.f32.gmra.mxu0 %v784
        %v899 = vpop.f32.mrf.mxu0
        %v900 = vadd.f32 0.0, %v899
        %901 = vmatmul.f32.gmra.mxu0 %v787
        %v902 = vpop.f32.mrf.mxu0
        %v903 = vadd.f32 0.0, %v902
        %904 = vmatmul.f32.gmra.mxu0 %v790
        %v905 = vpop.f32.mrf.mxu0
        %v906 = vadd.f32 0.0, %v905
        %907 = vmatmul.f32.gmra.mxu0 %v793
        %v908 = vpop.f32.mrf.mxu0
        %v909 = vadd.f32 0.0, %v908
        %910 = vmatmul.f32.gmra.mxu0 %v796
        %v911 = vpop.f32.mrf.mxu0
        %v912 = vadd.f32 0.0, %v911
        %913 = vmatmul.f32.gmra.mxu0 %v799
        %v914 = vpop.f32.mrf.mxu0
        %v915 = vadd.f32 0.0, %v914
        %916 = vmatmul.f32.gmra.mxu0 %v802
        %v917 = vpop.f32.mrf.mxu0
        %v918 = vadd.f32 0.0, %v917
        %919 = vmatmul.f32.gmra.mxu0 %v805
        %v920 = vpop.f32.mrf.mxu0
        %v921 = vadd.f32 0.0, %v920
        %922 = vmatmul.f32.gmra.mxu0 %v808
        %v923 = vpop.f32.mrf.mxu0
        %v924 = vadd.f32 0.0, %v923
        %925 = vdwg.mxu0
        %v926 = vadd.f32 %v585, %v831
        %v927 = vadd.f32 %v588, %v834
        %v928 = vadd.f32 %v591, %v837
        %v929 = vadd.f32 %v594, %v840
        %v930 = vadd.f32 %v597, %v843
        %v931 = vadd.f32 %v600, %v846
        %v932 = vadd.f32 %v603, %v849
        %v933 = vadd.f32 %v606, %v852
        %v934 = vadd.f32 %v609, %v855
        %v935 = vadd.f32 %v612, %v858
        %v936 = vadd.f32 %v615, %v861
        %v937 = vadd.f32 %v618, %v864
        %v938 = vadd.f32 %v621, %v867
        %v939 = vadd.f32 %v624, %v870
        %v940 = vadd.f32 %v627, %v873
        %v941 = vadd.f32 %v630, %v876
        %v942 = vadd.f32 %v633, %v879
        %v943 = vadd.f32 %v636, %v882
        %v944 = vadd.f32 %v639, %v885
        %v945 = vadd.f32 %v642, %v888
        %v946 = vadd.f32 %v645, %v891
        %v947 = vadd.f32 %v648, %v894
        %v948 = vadd.f32 %v651, %v897
        %v949 = vadd.f32 %v654, %v900
        %v950 = vadd.f32 %v657, %v903
        %v951 = vadd.f32 %v660, %v906
        %v952 = vadd.f32 %v663, %v909
        %v953 = vadd.f32 %v666, %v912
        %v954 = vadd.f32 %v669, %v915
        %v955 = vadd.f32 %v672, %v918
        %v956 = vadd.f32 %v675, %v921
        %v957 = vadd.f32 %v678, %v924
        %s958 = sadd.s32 %s184, 1
        %s959 = smul.u32 %s958, 24
        %s960 = scalar_lea.vmem %s182, %s959
        %v961 = vld [vmem:[%s960] sm:$0xff]
        %v962 = vld [vmem:[%s960 + $0x8] sm:$0xff]
        %v963 = vld [vmem:[%s960 + $0x18] sm:$0xff]
        %v964 = vld [vmem:[%s960 + $0x20] sm:$0xff]
        %v965 = vld [vmem:[%s960 + $0x30] sm:$0xff]
        %v966 = vld [vmem:[%s960 + $0x38] sm:$0xff]
        %v967 = vld [vmem:[%s960 + $0x48] sm:$0xff]
        %v968 = vld [vmem:[%s960 + $0x50] sm:$0xff]
        %v969 = vld [vmem:[%s960 + $0x60] sm:$0xff]
        %v970 = vld [vmem:[%s960 + $0x68] sm:$0xff]
        %v971 = vld [vmem:[%s960 + $0x78] sm:$0xff]
        %v972 = vld [vmem:[%s960 + $0x80] sm:$0xff]
        %v973 = vld [vmem:[%s960 + $0x90] sm:$0xff]
        %v974 = vld [vmem:[%s960 + $0x98] sm:$0xff]
        %v975 = vld [vmem:[%s960 + $0xa8] sm:$0xff]
        %v976 = vld [vmem:[%s960 + $0xb0] sm:$0xff]
        %v977 = vld [vmem:[%s960 + $0xc0] sm:$0xff]
        %v978 = vld [vmem:[%s960 + $0xc8] sm:$0xff]
        %v979 = vld [vmem:[%s960 + $0xd8] sm:$0xff]
        %v980 = vld [vmem:[%s960 + $0xe0] sm:$0xff]
        %v981 = vld [vmem:[%s960 + $0xf0] sm:$0xff]
        %v982 = vld [vmem:[%s960 + $0xf8] sm:$0xff]
        %v983 = vld [vmem:[%s960 + $0x108] sm:$0xff]
        %v984 = vld [vmem:[%s960 + $0x110] sm:$0xff]
        %v985 = vld [vmem:[%s960 + $0x120] sm:$0xff]
        %v986 = vld [vmem:[%s960 + $0x128] sm:$0xff]
        %v987 = vld [vmem:[%s960 + $0x138] sm:$0xff]
        %v988 = vld [vmem:[%s960 + $0x140] sm:$0xff]
        %v989 = vld [vmem:[%s960 + $0x150] sm:$0xff]
        %v990 = vld [vmem:[%s960 + $0x158] sm:$0xff]
        %v991 = vld [vmem:[%s960 + $0x168] sm:$0xff]
        %v992 = vld [vmem:[%s960 + $0x170] sm:$0xff]
        %s993 = scalar_lea.vmem %s1, 12
        %v994 = vld [vmem:[%s993] sm:$0xf]
        %v996 = vsel %vm254, %v961, 0
        %v999 = vsel %vm254, %v962, 0
        %v1002 = vsel %vm254, %v963, 0
        %v1005 = vsel %vm254, %v964, 0
        %v1008 = vsel %vm254, %v965, 0
        %v1011 = vsel %vm254, %v966, 0
        %v1014 = vsel %vm254, %v967, 0
        %v1017 = vsel %vm254, %v968, 0
        %v1020 = vsel %vm254, %v969, 0
        %v1023 = vsel %vm254, %v970, 0
        %v1026 = vsel %vm254, %v971, 0
        %v1029 = vsel %vm254, %v972, 0
        %v1032 = vsel %vm254, %v973, 0
        %v1035 = vsel %vm254, %v974, 0
        %v1038 = vsel %vm254, %v975, 0
        %v1041 = vsel %vm254, %v976, 0
        %v1044 = vsel %vm254, %v977, 0
        %v1047 = vsel %vm254, %v978, 0
        %v1050 = vsel %vm254, %v979, 0
        %v1053 = vsel %vm254, %v980, 0
        %v1056 = vsel %vm254, %v981, 0
        %v1059 = vsel %vm254, %v982, 0
        %v1062 = vsel %vm254, %v983, 0
        %v1065 = vsel %vm254, %v984, 0
        %v1068 = vsel %vm254, %v985, 0
        %v1071 = vsel %vm254, %v986, 0
        %v1074 = vsel %vm254, %v987, 0
        %v1077 = vsel %vm254, %v988, 0
        %v1080 = vsel %vm254, %v989, 0
        %v1083 = vsel %vm254, %v990, 0
        %v1086 = vsel %vm254, %v991, 0
        %v1089 = vsel %vm254, %v992, 0
        %v1092 = vsel %vm351, %v994, 0
        %1094 = vmatpush.msra.mxu0 0.0
        %1095 = vmatpush.msra.mxu0 0.0
        %1096 = vmatpush.msra.mxu0 0.0
        %1097 = vmatpush.msra.mxu0 0.0
        %1098 = vmatpush.msra.mxu0 0.0
        %1099 = vmatpush.msra.mxu0 0.0
        %1100 = vmatpush.msra.mxu0 0.0
        %1101 = vmatpush.msra.mxu0 0.0
        %1102 = vmatpush.msra.mxu0 0.0
        %1103 = vmatpush.msra.mxu0 0.0
        %1104 = vmatpush.msra.mxu0 0.0
        %1105 = vmatpush.msra.mxu0 0.0
        %1106 = vmatpush.msra.mxu0 0.0
        %1107 = vmatpush.msra.mxu0 0.0
        %1108 = vmatpush.msra.mxu0 0.0
        %1109 = vmatpush.msra.mxu0 %v1092
        %1110 = vmatmul.f32.gmra.mxu0 %v996
        %v1111 = vpop.f32.mrf.mxu0
        %v1112 = vadd.f32 0.0, %v1111
        %1113 = vmatmul.f32.gmra.mxu0 %v999
        %v1114 = vpop.f32.mrf.mxu0
        %v1115 = vadd.f32 0.0, %v1114
        %1116 = vmatmul.f32.gmra.mxu0 %v1002
        %v1117 = vpop.f32.mrf.mxu0
        %v1118 = vadd.f32 0.0, %v1117
        %1119 = vmatmul.f32.gmra.mxu0 %v1005
        %v1120 = vpop.f32.mrf.mxu0
        %v1121 = vadd.f32 0.0, %v1120
        %1122 = vmatmul.f32.gmra.mxu0 %v1008
        %v1123 = vpop.f32.mrf.mxu0
        %v1124 = vadd.f32 0.0, %v1123
        %1125 = vmatmul.f32.gmra.mxu0 %v1011
        %v1126 = vpop.f32.mrf.mxu0
        %v1127 = vadd.f32 0.0, %v1126
        %1128 = vmatmul.f32.gmra.mxu0 %v1014
        %v1129 = vpop.f32.mrf.mxu0
        %v1130 = vadd.f32 0.0, %v1129
        %1131 = vmatmul.f32.gmra.mxu0 %v1017
        %v1132 = vpop.f32.mrf.mxu0
        %v1133 = vadd.f32 0.0, %v1132
        %1134 = vmatmul.f32.gmra.mxu0 %v1020
        %v1135 = vpop.f32.mrf.mxu0
        %v1136 = vadd.f32 0.0, %v1135
        %1137 = vmatmul.f32.gmra.mxu0 %v1023
        %v1138 = vpop.f32.mrf.mxu0
        %v1139 = vadd.f32 0.0, %v1138
        %1140 = vmatmul.f32.gmra.mxu0 %v1026
        %v1141 = vpop.f32.mrf.mxu0
        %v1142 = vadd.f32 0.0, %v1141
        %1143 = vmatmul.f32.gmra.mxu0 %v1029
        %v1144 = vpop.f32.mrf.mxu0
        %v1145 = vadd.f32 0.0, %v1144
        %1146 = vmatmul.f32.gmra.mxu0 %v1032
        %v1147 = vpop.f32.mrf.mxu0
        %v1148 = vadd.f32 0.0, %v1147
        %1149 = vmatmul.f32.gmra.mxu0 %v1035
        %v1150 = vpop.f32.mrf.mxu0
        %v1151 = vadd.f32 0.0, %v1150
        %1152 = vmatmul.f32.gmra.mxu0 %v1038
        %v1153 = vpop.f32.mrf.mxu0
        %v1154 = vadd.f32 0.0, %v1153
        %1155 = vmatmul.f32.gmra.mxu0 %v1041
        %v1156 = vpop.f32.mrf.mxu0
        %v1157 = vadd.f32 0.0, %v1156
        %1158 = vmatmul.f32.gmra.mxu0 %v1044
        %v1159 = vpop.f32.mrf.mxu0
        %v1160 = vadd.f32 0.0, %v1159
        %1161 = vmatmul.f32.gmra.mxu0 %v1047
        %v1162 = vpop.f32.mrf.mxu0
        %v1163 = vadd.f32 0.0, %v1162
        %1164 = vmatmul.f32.gmra.mxu0 %v1050
        %v1165 = vpop.f32.mrf.mxu0
        %v1166 = vadd.f32 0.0, %v1165
        %1167 = vmatmul.f32.gmra.mxu0 %v1053
        %v1168 = vpop.f32.mrf.mxu0
        %v1169 = vadd.f32 0.0, %v1168
        %1170 = vmatmul.f32.gmra.mxu0 %v1056
        %v1171 = vpop.f32.mrf.mxu0
        %v1172 = vadd.f32 0.0, %v1171
        %1173 = vmatmul.f32.gmra.mxu0 %v1059
        %v1174 = vpop.f32.mrf.mxu0
        %v1175 = vadd.f32 0.0, %v1174
        %1176 = vmatmul.f32.gmra.mxu0 %v1062
        %v1177 = vpop.f32.mrf.mxu0
        %v1178 = vadd.f32 0.0, %v1177
        %1179 = vmatmul.f32.gmra.mxu0 %v1065
        %v1180 = vpop.f32.mrf.mxu0
        %v1181 = vadd.f32 0.0, %v1180
        %1182 = vmatmul.f32.gmra.mxu0 %v1068
        %v1183 = vpop.f32.mrf.mxu0
        %v1184 = vadd.f32 0.0, %v1183
        %1185 = vmatmul.f32.gmra.mxu0 %v1071
        %v1186 = vpop.f32.mrf.mxu0
        %v1187 = vadd.f32 0.0, %v1186
        %1188 = vmatmul.f32.gmra.mxu0 %v1074
        %v1189 = vpop.f32.mrf.mxu0
        %v1190 = vadd.f32 0.0, %v1189
        %1191 = vmatmul.f32.gmra.mxu0 %v1077
        %v1192 = vpop.f32.mrf.mxu0
        %v1193 = vadd.f32 0.0, %v1192
        %1194 = vmatmul.f32.gmra.mxu0 %v1080
        %v1195 = vpop.f32.mrf.mxu0
        %v1196 = vadd.f32 0.0, %v1195
        %1197 = vmatmul.f32.gmra.mxu0 %v1083
        %v1198 = vpop.f32.mrf.mxu0
        %v1199 = vadd.f32 0.0, %v1198
        %1200 = vmatmul.f32.gmra.mxu0 %v1086
        %v1201 = vpop.f32.mrf.mxu0
        %v1202 = vadd.f32 0.0, %v1201
        %1203 = vmatmul.f32.gmra.mxu0 %v1089
        %v1204 = vpop.f32.mrf.mxu0
        %v1205 = vadd.f32 0.0, %v1204
        %1206 = vdwg.mxu0
        %v1207 = vadd.f32 %v926, %v1112
        %v1208 = vadd.f32 %v927, %v1115
        %v1209 = vadd.f32 %v928, %v1118
        %v1210 = vadd.f32 %v929, %v1121
        %v1211 = vadd.f32 %v930, %v1124
        %v1212 = vadd.f32 %v931, %v1127
        %v1213 = vadd.f32 %v932, %v1130
        %v1214 = vadd.f32 %v933, %v1133
        %v1215 = vadd.f32 %v934, %v1136
        %v1216 = vadd.f32 %v935, %v1139
        %v1217 = vadd.f32 %v936, %v1142
        %v1218 = vadd.f32 %v937, %v1145
        %v1219 = vadd.f32 %v938, %v1148
        %v1220 = vadd.f32 %v939, %v1151
        %v1221 = vadd.f32 %v940, %v1154
        %v1222 = vadd.f32 %v941, %v1157
        %v1223 = vadd.f32 %v942, %v1160
        %v1224 = vadd.f32 %v943, %v1163
        %v1225 = vadd.f32 %v944, %v1166
        %v1226 = vadd.f32 %v945, %v1169
        %v1227 = vadd.f32 %v946, %v1172
        %v1228 = vadd.f32 %v947, %v1175
        %v1229 = vadd.f32 %v948, %v1178
        %v1230 = vadd.f32 %v949, %v1181
        %v1231 = vadd.f32 %v950, %v1184
        %v1232 = vadd.f32 %v951, %v1187
        %v1233 = vadd.f32 %v952, %v1190
        %v1234 = vadd.f32 %v953, %v1193
        %v1235 = vadd.f32 %v954, %v1196
        %v1236 = vadd.f32 %v955, %v1199
        %v1237 = vadd.f32 %v956, %v1202
        %v1238 = vadd.f32 %v957, %v1205
        %v1239 = vld [vmem:[%s960 + $0x1] sm:$0xff]
        %v1240 = vld [vmem:[%s960 + $0x9] sm:$0xff]
        %v1241 = vld [vmem:[%s960 + $0x19] sm:$0xff]
        %v1242 = vld [vmem:[%s960 + $0x21] sm:$0xff]
        %v1243 = vld [vmem:[%s960 + $0x31] sm:$0xff]
        %v1244 = vld [vmem:[%s960 + $0x39] sm:$0xff]
        %v1245 = vld [vmem:[%s960 + $0x49] sm:$0xff]
        %v1246 = vld [vmem:[%s960 + $0x51] sm:$0xff]
        %v1247 = vld [vmem:[%s960 + $0x61] sm:$0xff]
        %v1248 = vld [vmem:[%s960 + $0x69] sm:$0xff]
        %v1249 = vld [vmem:[%s960 + $0x79] sm:$0xff]
        %v1250 = vld [vmem:[%s960 + $0x81] sm:$0xff]
        %v1251 = vld [vmem:[%s960 + $0x91] sm:$0xff]
        %v1252 = vld [vmem:[%s960 + $0x99] sm:$0xff]
        %v1253 = vld [vmem:[%s960 + $0xa9] sm:$0xff]
        %v1254 = vld [vmem:[%s960 + $0xb1] sm:$0xff]
        %v1255 = vld [vmem:[%s960 + $0xc1] sm:$0xff]
        %v1256 = vld [vmem:[%s960 + $0xc9] sm:$0xff]
        %v1257 = vld [vmem:[%s960 + $0xd9] sm:$0xff]
        %v1258 = vld [vmem:[%s960 + $0xe1] sm:$0xff]
        %v1259 = vld [vmem:[%s960 + $0xf1] sm:$0xff]
        %v1260 = vld [vmem:[%s960 + $0xf9] sm:$0xff]
        %v1261 = vld [vmem:[%s960 + $0x109] sm:$0xff]
        %v1262 = vld [vmem:[%s960 + $0x111] sm:$0xff]
        %v1263 = vld [vmem:[%s960 + $0x121] sm:$0xff]
        %v1264 = vld [vmem:[%s960 + $0x129] sm:$0xff]
        %v1265 = vld [vmem:[%s960 + $0x139] sm:$0xff]
        %v1266 = vld [vmem:[%s960 + $0x141] sm:$0xff]
        %v1267 = vld [vmem:[%s960 + $0x151] sm:$0xff]
        %v1268 = vld [vmem:[%s960 + $0x159] sm:$0xff]
        %v1269 = vld [vmem:[%s960 + $0x169] sm:$0xff]
        %v1270 = vld [vmem:[%s960 + $0x171] sm:$0xff]
        %s1271 = scalar_lea.vmem %s1, 16
        %v1272 = vld [vmem:[%s1271] sm:$0xf]
        %v1274 = vsel %vm254, %v1239, 0
        %v1277 = vsel %vm254, %v1240, 0
        %v1280 = vsel %vm254, %v1241, 0
        %v1283 = vsel %vm254, %v1242, 0
        %v1286 = vsel %vm254, %v1243, 0
        %v1289 = vsel %vm254, %v1244, 0
        %v1292 = vsel %vm254, %v1245, 0
        %v1295 = vsel %vm254, %v1246, 0
        %v1298 = vsel %vm254, %v1247, 0
        %v1301 = vsel %vm254, %v1248, 0
        %v1304 = vsel %vm254, %v1249, 0
        %v1307 = vsel %vm254, %v1250, 0
        %v1310 = vsel %vm254, %v1251, 0
        %v1313 = vsel %vm254, %v1252, 0
        %v1316 = vsel %vm254, %v1253, 0
        %v1319 = vsel %vm254, %v1254, 0
        %v1322 = vsel %vm254, %v1255, 0
        %v1325 = vsel %vm254, %v1256, 0
        %v1328 = vsel %vm254, %v1257, 0
        %v1331 = vsel %vm254, %v1258, 0
        %v1334 = vsel %vm254, %v1259, 0
        %v1337 = vsel %vm254, %v1260, 0
        %v1340 = vsel %vm254, %v1261, 0
        %v1343 = vsel %vm254, %v1262, 0
        %v1346 = vsel %vm254, %v1263, 0
        %v1349 = vsel %vm254, %v1264, 0
        %v1352 = vsel %vm254, %v1265, 0
        %v1355 = vsel %vm254, %v1266, 0
        %v1358 = vsel %vm254, %v1267, 0
        %v1361 = vsel %vm254, %v1268, 0
        %v1364 = vsel %vm254, %v1269, 0
        %v1367 = vsel %vm254, %v1270, 0
        %v1370 = vsel %vm351, %v1272, 0
        %1372 = vmatpush.msra.mxu0 0.0
        %1373 = vmatpush.msra.mxu0 0.0
        %1374 = vmatpush.msra.mxu0 0.0
        %1375 = vmatpush.msra.mxu0 0.0
        %1376 = vmatpush.msra.mxu0 0.0
        %1377 = vmatpush.msra.mxu0 0.0
        %1378 = vmatpush.msra.mxu0 0.0
        %1379 = vmatpush.msra.mxu0 0.0
        %1380 = vmatpush.msra.mxu0 0.0
        %1381 = vmatpush.msra.mxu0 0.0
        %1382 = vmatpush.msra.mxu0 0.0
        %1383 = vmatpush.msra.mxu0 0.0
        %1384 = vmatpush.msra.mxu0 0.0
        %1385 = vmatpush.msra.mxu0 0.0
        %1386 = vmatpush.msra.mxu0 0.0
        %1387 = vmatpush.msra.mxu0 %v1370
        %1388 = vmatmul.f32.gmra.mxu0 %v1274
        %v1389 = vpop.f32.mrf.mxu0
        %v1390 = vadd.f32 0.0, %v1389
        %1391 = vmatmul.f32.gmra.mxu0 %v1277
        %v1392 = vpop.f32.mrf.mxu0
        %v1393 = vadd.f32 0.0, %v1392
        %1394 = vmatmul.f32.gmra.mxu0 %v1280
        %v1395 = vpop.f32.mrf.mxu0
        %v1396 = vadd.f32 0.0, %v1395
        %1397 = vmatmul.f32.gmra.mxu0 %v1283
        %v1398 = vpop.f32.mrf.mxu0
        %v1399 = vadd.f32 0.0, %v1398
        %1400 = vmatmul.f32.gmra.mxu0 %v1286
        %v1401 = vpop.f32.mrf.mxu0
        %v1402 = vadd.f32 0.0, %v1401
        %1403 = vmatmul.f32.gmra.mxu0 %v1289
        %v1404 = vpop.f32.mrf.mxu0
        %v1405 = vadd.f32 0.0, %v1404
        %1406 = vmatmul.f32.gmra.mxu0 %v1292
        %v1407 = vpop.f32.mrf.mxu0
        %v1408 = vadd.f32 0.0, %v1407
        %1409 = vmatmul.f32.gmra.mxu0 %v1295
        %v1410 = vpop.f32.mrf.mxu0
        %v1411 = vadd.f32 0.0, %v1410
        %1412 = vmatmul.f32.gmra.mxu0 %v1298
        %v1413 = vpop.f32.mrf.mxu0
        %v1414 = vadd.f32 0.0, %v1413
        %1415 = vmatmul.f32.gmra.mxu0 %v1301
        %v1416 = vpop.f32.mrf.mxu0
        %v1417 = vadd.f32 0.0, %v1416
        %1418 = vmatmul.f32.gmra.mxu0 %v1304
        %v1419 = vpop.f32.mrf.mxu0
        %v1420 = vadd.f32 0.0, %v1419
        %1421 = vmatmul.f32.gmra.mxu0 %v1307
        %v1422 = vpop.f32.mrf.mxu0
        %v1423 = vadd.f32 0.0, %v1422
        %1424 = vmatmul.f32.gmra.mxu0 %v1310
        %v1425 = vpop.f32.mrf.mxu0
        %v1426 = vadd.f32 0.0, %v1425
        %1427 = vmatmul.f32.gmra.mxu0 %v1313
        %v1428 = vpop.f32.mrf.mxu0
        %v1429 = vadd.f32 0.0, %v1428
        %1430 = vmatmul.f32.gmra.mxu0 %v1316
        %v1431 = vpop.f32.mrf.mxu0
        %v1432 = vadd.f32 0.0, %v1431
        %1433 = vmatmul.f32.gmra.mxu0 %v1319
        %v1434 = vpop.f32.mrf.mxu0
        %v1435 = vadd.f32 0.0, %v1434
        %1436 = vmatmul.f32.gmra.mxu0 %v1322
        %v1437 = vpop.f32.mrf.mxu0
        %v1438 = vadd.f32 0.0, %v1437
        %1439 = vmatmul.f32.gmra.mxu0 %v1325
        %v1440 = vpop.f32.mrf.mxu0
        %v1441 = vadd.f32 0.0, %v1440
        %1442 = vmatmul.f32.gmra.mxu0 %v1328
        %v1443 = vpop.f32.mrf.mxu0
        %v1444 = vadd.f32 0.0, %v1443
        %1445 = vmatmul.f32.gmra.mxu0 %v1331
        %v1446 = vpop.f32.mrf.mxu0
        %v1447 = vadd.f32 0.0, %v1446
        %1448 = vmatmul.f32.gmra.mxu0 %v1334
        %v1449 = vpop.f32.mrf.mxu0
        %v1450 = vadd.f32 0.0, %v1449
        %1451 = vmatmul.f32.gmra.mxu0 %v1337
        %v1452 = vpop.f32.mrf.mxu0
        %v1453 = vadd.f32 0.0, %v1452
        %1454 = vmatmul.f32.gmra.mxu0 %v1340
        %v1455 = vpop.f32.mrf.mxu0
        %v1456 = vadd.f32 0.0, %v1455
        %1457 = vmatmul.f32.gmra.mxu0 %v1343
        %v1458 = vpop.f32.mrf.mxu0
        %v1459 = vadd.f32 0.0, %v1458
        %1460 = vmatmul.f32.gmra.mxu0 %v1346
        %v1461 = vpop.f32.mrf.mxu0
        %v1462 = vadd.f32 0.0, %v1461
        %1463 = vmatmul.f32.gmra.mxu0 %v1349
        %v1464 = vpop.f32.mrf.mxu0
        %v1465 = vadd.f32 0.0, %v1464
        %1466 = vmatmul.f32.gmra.mxu0 %v1352
        %v1467 = vpop.f32.mrf.mxu0
        %v1468 = vadd.f32 0.0, %v1467
        %1469 = vmatmul.f32.gmra.mxu0 %v1355
        %v1470 = vpop.f32.mrf.mxu0
        %v1471 = vadd.f32 0.0, %v1470
        %1472 = vmatmul.f32.gmra.mxu0 %v1358
        %v1473 = vpop.f32.mrf.mxu0
        %v1474 = vadd.f32 0.0, %v1473
        %1475 = vmatmul.f32.gmra.mxu0 %v1361
        %v1476 = vpop.f32.mrf.mxu0
        %v1477 = vadd.f32 0.0, %v1476
        %1478 = vmatmul.f32.gmra.mxu0 %v1364
        %v1479 = vpop.f32.mrf.mxu0
        %v1480 = vadd.f32 0.0, %v1479
        %1481 = vmatmul.f32.gmra.mxu0 %v1367
        %v1482 = vpop.f32.mrf.mxu0
        %v1483 = vadd.f32 0.0, %v1482
        %1484 = vdwg.mxu0
        %v1485 = vadd.f32 %v1207, %v1390
        %v1486 = vadd.f32 %v1208, %v1393
        %v1487 = vadd.f32 %v1209, %v1396
        %v1488 = vadd.f32 %v1210, %v1399
        %v1489 = vadd.f32 %v1211, %v1402
        %v1490 = vadd.f32 %v1212, %v1405
        %v1491 = vadd.f32 %v1213, %v1408
        %v1492 = vadd.f32 %v1214, %v1411
        %v1493 = vadd.f32 %v1215, %v1414
        %v1494 = vadd.f32 %v1216, %v1417
        %v1495 = vadd.f32 %v1217, %v1420
        %v1496 = vadd.f32 %v1218, %v1423
        %v1497 = vadd.f32 %v1219, %v1426
        %v1498 = vadd.f32 %v1220, %v1429
        %v1499 = vadd.f32 %v1221, %v1432
        %v1500 = vadd.f32 %v1222, %v1435
        %v1501 = vadd.f32 %v1223, %v1438
        %v1502 = vadd.f32 %v1224, %v1441
        %v1503 = vadd.f32 %v1225, %v1444
        %v1504 = vadd.f32 %v1226, %v1447
        %v1505 = vadd.f32 %v1227, %v1450
        %v1506 = vadd.f32 %v1228, %v1453
        %v1507 = vadd.f32 %v1229, %v1456
        %v1508 = vadd.f32 %v1230, %v1459
        %v1509 = vadd.f32 %v1231, %v1462
        %v1510 = vadd.f32 %v1232, %v1465
        %v1511 = vadd.f32 %v1233, %v1468
        %v1512 = vadd.f32 %v1234, %v1471
        %v1513 = vadd.f32 %v1235, %v1474
        %v1514 = vadd.f32 %v1236, %v1477
        %v1515 = vadd.f32 %v1237, %v1480
        %v1516 = vadd.f32 %v1238, %v1483
        %v1517 = vld [vmem:[%s960 + $0x2] sm:$0xff]
        %v1518 = vld [vmem:[%s960 + $0xa] sm:$0xff]
        %v1519 = vld [vmem:[%s960 + $0x1a] sm:$0xff]
        %v1520 = vld [vmem:[%s960 + $0x22] sm:$0xff]
        %v1521 = vld [vmem:[%s960 + $0x32] sm:$0xff]
        %v1522 = vld [vmem:[%s960 + $0x3a] sm:$0xff]
        %v1523 = vld [vmem:[%s960 + $0x4a] sm:$0xff]
        %v1524 = vld [vmem:[%s960 + $0x52] sm:$0xff]
        %v1525 = vld [vmem:[%s960 + $0x62] sm:$0xff]
        %v1526 = vld [vmem:[%s960 + $0x6a] sm:$0xff]
        %v1527 = vld [vmem:[%s960 + $0x7a] sm:$0xff]
        %v1528 = vld [vmem:[%s960 + $0x82] sm:$0xff]
        %v1529 = vld [vmem:[%s960 + $0x92] sm:$0xff]
        %v1530 = vld [vmem:[%s960 + $0x9a] sm:$0xff]
        %v1531 = vld [vmem:[%s960 + $0xaa] sm:$0xff]
        %v1532 = vld [vmem:[%s960 + $0xb2] sm:$0xff]
        %v1533 = vld [vmem:[%s960 + $0xc2] sm:$0xff]
        %v1534 = vld [vmem:[%s960 + $0xca] sm:$0xff]
        %v1535 = vld [vmem:[%s960 + $0xda] sm:$0xff]
        %v1536 = vld [vmem:[%s960 + $0xe2] sm:$0xff]
        %v1537 = vld [vmem:[%s960 + $0xf2] sm:$0xff]
        %v1538 = vld [vmem:[%s960 + $0xfa] sm:$0xff]
        %v1539 = vld [vmem:[%s960 + $0x10a] sm:$0xff]
        %v1540 = vld [vmem:[%s960 + $0x112] sm:$0xff]
        %v1541 = vld [vmem:[%s960 + $0x122] sm:$0xff]
        %v1542 = vld [vmem:[%s960 + $0x12a] sm:$0xff]
        %v1543 = vld [vmem:[%s960 + $0x13a] sm:$0xff]
        %v1544 = vld [vmem:[%s960 + $0x142] sm:$0xff]
        %v1545 = vld [vmem:[%s960 + $0x152] sm:$0xff]
        %v1546 = vld [vmem:[%s960 + $0x15a] sm:$0xff]
        %v1547 = vld [vmem:[%s960 + $0x16a] sm:$0xff]
        %v1548 = vld [vmem:[%s960 + $0x172] sm:$0xff]
        %s1549 = scalar_lea.vmem %s1, 20
        %v1550 = vld [vmem:[%s1549] sm:$0xf]
        %v1552 = vsel %vm254, %v1517, 0
        %v1555 = vsel %vm254, %v1518, 0
        %v1558 = vsel %vm254, %v1519, 0
        %v1561 = vsel %vm254, %v1520, 0
        %v1564 = vsel %vm254, %v1521, 0
        %v1567 = vsel %vm254, %v1522, 0
        %v1570 = vsel %vm254, %v1523, 0
        %v1573 = vsel %vm254, %v1524, 0
        %v1576 = vsel %vm254, %v1525, 0
        %v1579 = vsel %vm254, %v1526, 0
        %v1582 = vsel %vm254, %v1527, 0
        %v1585 = vsel %vm254, %v1528, 0
        %v1588 = vsel %vm254, %v1529, 0
        %v1591 = vsel %vm254, %v1530, 0
        %v1594 = vsel %vm254, %v1531, 0
        %v1597 = vsel %vm254, %v1532, 0
        %v1600 = vsel %vm254, %v1533, 0
        %v1603 = vsel %vm254, %v1534, 0
        %v1606 = vsel %vm254, %v1535, 0
        %v1609 = vsel %vm254, %v1536, 0
        %v1612 = vsel %vm254, %v1537, 0
        %v1615 = vsel %vm254, %v1538, 0
        %v1618 = vsel %vm254, %v1539, 0
        %v1621 = vsel %vm254, %v1540, 0
        %v1624 = vsel %vm254, %v1541, 0
        %v1627 = vsel %vm254, %v1542, 0
        %v1630 = vsel %vm254, %v1543, 0
        %v1633 = vsel %vm254, %v1544, 0
        %v1636 = vsel %vm254, %v1545, 0
        %v1639 = vsel %vm254, %v1546, 0
        %v1642 = vsel %vm254, %v1547, 0
        %v1645 = vsel %vm254, %v1548, 0
        %v1648 = vsel %vm351, %v1550, 0
        %1650 = vmatpush.msra.mxu0 0.0
        %1651 = vmatpush.msra.mxu0 0.0
        %1652 = vmatpush.msra.mxu0 0.0
        %1653 = vmatpush.msra.mxu0 0.0
        %1654 = vmatpush.msra.mxu0 0.0
        %1655 = vmatpush.msra.mxu0 0.0
        %1656 = vmatpush.msra.mxu0 0.0
        %1657 = vmatpush.msra.mxu0 0.0
        %1658 = vmatpush.msra.mxu0 0.0
        %1659 = vmatpush.msra.mxu0 0.0
        %1660 = vmatpush.msra.mxu0 0.0
        %1661 = vmatpush.msra.mxu0 0.0
        %1662 = vmatpush.msra.mxu0 0.0
        %1663 = vmatpush.msra.mxu0 0.0
        %1664 = vmatpush.msra.mxu0 0.0
        %1665 = vmatpush.msra.mxu0 %v1648
        %1666 = vmatmul.f32.gmra.mxu0 %v1552
        %v1667 = vpop.f32.mrf.mxu0
        %v1668 = vadd.f32 0.0, %v1667
        %1669 = vmatmul.f32.gmra.mxu0 %v1555
        %v1670 = vpop.f32.mrf.mxu0
        %v1671 = vadd.f32 0.0, %v1670
        %1672 = vmatmul.f32.gmra.mxu0 %v1558
        %v1673 = vpop.f32.mrf.mxu0
        %v1674 = vadd.f32 0.0, %v1673
        %1675 = vmatmul.f32.gmra.mxu0 %v1561
        %v1676 = vpop.f32.mrf.mxu0
        %v1677 = vadd.f32 0.0, %v1676
        %1678 = vmatmul.f32.gmra.mxu0 %v1564
        %v1679 = vpop.f32.mrf.mxu0
        %v1680 = vadd.f32 0.0, %v1679
        %1681 = vmatmul.f32.gmra.mxu0 %v1567
        %v1682 = vpop.f32.mrf.mxu0
        %v1683 = vadd.f32 0.0, %v1682
        %1684 = vmatmul.f32.gmra.mxu0 %v1570
        %v1685 = vpop.f32.mrf.mxu0
        %v1686 = vadd.f32 0.0, %v1685
        %1687 = vmatmul.f32.gmra.mxu0 %v1573
        %v1688 = vpop.f32.mrf.mxu0
        %v1689 = vadd.f32 0.0, %v1688
        %1690 = vmatmul.f32.gmra.mxu0 %v1576
        %v1691 = vpop.f32.mrf.mxu0
        %v1692 = vadd.f32 0.0, %v1691
        %1693 = vmatmul.f32.gmra.mxu0 %v1579
        %v1694 = vpop.f32.mrf.mxu0
        %v1695 = vadd.f32 0.0, %v1694
        %1696 = vmatmul.f32.gmra.mxu0 %v1582
        %v1697 = vpop.f32.mrf.mxu0
        %v1698 = vadd.f32 0.0, %v1697
        %1699 = vmatmul.f32.gmra.mxu0 %v1585
        %v1700 = vpop.f32.mrf.mxu0
        %v1701 = vadd.f32 0.0, %v1700
        %1702 = vmatmul.f32.gmra.mxu0 %v1588
        %v1703 = vpop.f32.mrf.mxu0
        %v1704 = vadd.f32 0.0, %v1703
        %1705 = vmatmul.f32.gmra.mxu0 %v1591
        %v1706 = vpop.f32.mrf.mxu0
        %v1707 = vadd.f32 0.0, %v1706
        %1708 = vmatmul.f32.gmra.mxu0 %v1594
        %v1709 = vpop.f32.mrf.mxu0
        %v1710 = vadd.f32 0.0, %v1709
        %1711 = vmatmul.f32.gmra.mxu0 %v1597
        %v1712 = vpop.f32.mrf.mxu0
        %v1713 = vadd.f32 0.0, %v1712
        %1714 = vmatmul.f32.gmra.mxu0 %v1600
        %v1715 = vpop.f32.mrf.mxu0
        %v1716 = vadd.f32 0.0, %v1715
        %1717 = vmatmul.f32.gmra.mxu0 %v1603
        %v1718 = vpop.f32.mrf.mxu0
        %v1719 = vadd.f32 0.0, %v1718
        %1720 = vmatmul.f32.gmra.mxu0 %v1606
        %v1721 = vpop.f32.mrf.mxu0
        %v1722 = vadd.f32 0.0, %v1721
        %1723 = vmatmul.f32.gmra.mxu0 %v1609
        %v1724 = vpop.f32.mrf.mxu0
        %v1725 = vadd.f32 0.0, %v1724
        %1726 = vmatmul.f32.gmra.mxu0 %v1612
        %v1727 = vpop.f32.mrf.mxu0
        %v1728 = vadd.f32 0.0, %v1727
        %1729 = vmatmul.f32.gmra.mxu0 %v1615
        %v1730 = vpop.f32.mrf.mxu0
        %v1731 = vadd.f32 0.0, %v1730
        %1732 = vmatmul.f32.gmra.mxu0 %v1618
        %v1733 = vpop.f32.mrf.mxu0
        %v1734 = vadd.f32 0.0, %v1733
        %1735 = vmatmul.f32.gmra.mxu0 %v1621
        %v1736 = vpop.f32.mrf.mxu0
        %v1737 = vadd.f32 0.0, %v1736
        %1738 = vmatmul.f32.gmra.mxu0 %v1624
        %v1739 = vpop.f32.mrf.mxu0
        %v1740 = vadd.f32 0.0, %v1739
        %1741 = vmatmul.f32.gmra.mxu0 %v1627
        %v1742 = vpop.f32.mrf.mxu0
        %v1743 = vadd.f32 0.0, %v1742
        %1744 = vmatmul.f32.gmra.mxu0 %v1630
        %v1745 = vpop.f32.mrf.mxu0
        %v1746 = vadd.f32 0.0, %v1745
        %1747 = vmatmul.f32.gmra.mxu0 %v1633
        %v1748 = vpop.f32.mrf.mxu0
        %v1749 = vadd.f32 0.0, %v1748
        %1750 = vmatmul.f32.gmra.mxu0 %v1636
        %v1751 = vpop.f32.mrf.mxu0
        %v1752 = vadd.f32 0.0, %v1751
        %1753 = vmatmul.f32.gmra.mxu0 %v1639
        %v1754 = vpop.f32.mrf.mxu0
        %v1755 = vadd.f32 0.0, %v1754
        %1756 = vmatmul.f32.gmra.mxu0 %v1642
        %v1757 = vpop.f32.mrf.mxu0
        %v1758 = vadd.f32 0.0, %v1757
        %1759 = vmatmul.f32.gmra.mxu0 %v1645
        %v1760 = vpop.f32.mrf.mxu0
        %v1761 = vadd.f32 0.0, %v1760
        %1762 = vdwg.mxu0
        %v1763 = vadd.f32 %v1485, %v1668
        %v1764 = vadd.f32 %v1486, %v1671
        %v1765 = vadd.f32 %v1487, %v1674
        %v1766 = vadd.f32 %v1488, %v1677
        %v1767 = vadd.f32 %v1489, %v1680
        %v1768 = vadd.f32 %v1490, %v1683
        %v1769 = vadd.f32 %v1491, %v1686
        %v1770 = vadd.f32 %v1492, %v1689
        %v1771 = vadd.f32 %v1493, %v1692
        %v1772 = vadd.f32 %v1494, %v1695
        %v1773 = vadd.f32 %v1495, %v1698
        %v1774 = vadd.f32 %v1496, %v1701
        %v1775 = vadd.f32 %v1497, %v1704
        %v1776 = vadd.f32 %v1498, %v1707
        %v1777 = vadd.f32 %v1499, %v1710
        %v1778 = vadd.f32 %v1500, %v1713
        %v1779 = vadd.f32 %v1501, %v1716
        %v1780 = vadd.f32 %v1502, %v1719
        %v1781 = vadd.f32 %v1503, %v1722
        %v1782 = vadd.f32 %v1504, %v1725
        %v1783 = vadd.f32 %v1505, %v1728
        %v1784 = vadd.f32 %v1506, %v1731
        %v1785 = vadd.f32 %v1507, %v1734
        %v1786 = vadd.f32 %v1508, %v1737
        %v1787 = vadd.f32 %v1509, %v1740
        %v1788 = vadd.f32 %v1510, %v1743
        %v1789 = vadd.f32 %v1511, %v1746
        %v1790 = vadd.f32 %v1512, %v1749
        %v1791 = vadd.f32 %v1513, %v1752
        %v1792 = vadd.f32 %v1514, %v1755
        %v1793 = vadd.f32 %v1515, %v1758
        %v1794 = vadd.f32 %v1516, %v1761
        %s1795 = sadd.s32 %s184, 2
        %s1796 = smul.u32 %s1795, 24
        %s1797 = scalar_lea.vmem %s182, %s1796
        %v1798 = vld [vmem:[%s1797] sm:$0xff]
        %v1799 = vld [vmem:[%s1797 + $0x8] sm:$0xff]
        %v1800 = vld [vmem:[%s1797 + $0x18] sm:$0xff]
        %v1801 = vld [vmem:[%s1797 + $0x20] sm:$0xff]
        %v1802 = vld [vmem:[%s1797 + $0x30] sm:$0xff]
        %v1803 = vld [vmem:[%s1797 + $0x38] sm:$0xff]
        %v1804 = vld [vmem:[%s1797 + $0x48] sm:$0xff]
        %v1805 = vld [vmem:[%s1797 + $0x50] sm:$0xff]
        %v1806 = vld [vmem:[%s1797 + $0x60] sm:$0xff]
        %v1807 = vld [vmem:[%s1797 + $0x68] sm:$0xff]
        %v1808 = vld [vmem:[%s1797 + $0x78] sm:$0xff]
        %v1809 = vld [vmem:[%s1797 + $0x80] sm:$0xff]
        %v1810 = vld [vmem:[%s1797 + $0x90] sm:$0xff]
        %v1811 = vld [vmem:[%s1797 + $0x98] sm:$0xff]
        %v1812 = vld [vmem:[%s1797 + $0xa8] sm:$0xff]
        %v1813 = vld [vmem:[%s1797 + $0xb0] sm:$0xff]
        %v1814 = vld [vmem:[%s1797 + $0xc0] sm:$0xff]
        %v1815 = vld [vmem:[%s1797 + $0xc8] sm:$0xff]
        %v1816 = vld [vmem:[%s1797 + $0xd8] sm:$0xff]
        %v1817 = vld [vmem:[%s1797 + $0xe0] sm:$0xff]
        %v1818 = vld [vmem:[%s1797 + $0xf0] sm:$0xff]
        %v1819 = vld [vmem:[%s1797 + $0xf8] sm:$0xff]
        %v1820 = vld [vmem:[%s1797 + $0x108] sm:$0xff]
        %v1821 = vld [vmem:[%s1797 + $0x110] sm:$0xff]
        %v1822 = vld [vmem:[%s1797 + $0x120] sm:$0xff]
        %v1823 = vld [vmem:[%s1797 + $0x128] sm:$0xff]
        %v1824 = vld [vmem:[%s1797 + $0x138] sm:$0xff]
        %v1825 = vld [vmem:[%s1797 + $0x140] sm:$0xff]
        %v1826 = vld [vmem:[%s1797 + $0x150] sm:$0xff]
        %v1827 = vld [vmem:[%s1797 + $0x158] sm:$0xff]
        %v1828 = vld [vmem:[%s1797 + $0x168] sm:$0xff]
        %v1829 = vld [vmem:[%s1797 + $0x170] sm:$0xff]
        %s1830 = scalar_lea.vmem %s1, 24
        %v1831 = vld [vmem:[%s1830] sm:$0xf]
        %v1833 = vsel %vm254, %v1798, 0
        %v1836 = vsel %vm254, %v1799, 0
        %v1839 = vsel %vm254, %v1800, 0
        %v1842 = vsel %vm254, %v1801, 0
        %v1845 = vsel %vm254, %v1802, 0
        %v1848 = vsel %vm254, %v1803, 0
        %v1851 = vsel %vm254, %v1804, 0
        %v1854 = vsel %vm254, %v1805, 0
        %v1857 = vsel %vm254, %v1806, 0
        %v1860 = vsel %vm254, %v1807, 0
        %v1863 = vsel %vm254, %v1808, 0
        %v1866 = vsel %vm254, %v1809, 0
        %v1869 = vsel %vm254, %v1810, 0
        %v1872 = vsel %vm254, %v1811, 0
        %v1875 = vsel %vm254, %v1812, 0
        %v1878 = vsel %vm254, %v1813, 0
        %v1881 = vsel %vm254, %v1814, 0
        %v1884 = vsel %vm254, %v1815, 0
        %v1887 = vsel %vm254, %v1816, 0
        %v1890 = vsel %vm254, %v1817, 0
        %v1893 = vsel %vm254, %v1818, 0
        %v1896 = vsel %vm254, %v1819, 0
        %v1899 = vsel %vm254, %v1820, 0
        %v1902 = vsel %vm254, %v1821, 0
        %v1905 = vsel %vm254, %v1822, 0
        %v1908 = vsel %vm254, %v1823, 0
        %v1911 = vsel %vm254, %v1824, 0
        %v1914 = vsel %vm254, %v1825, 0
        %v1917 = vsel %vm254, %v1826, 0
        %v1920 = vsel %vm254, %v1827, 0
        %v1923 = vsel %vm254, %v1828, 0
        %v1926 = vsel %vm254, %v1829, 0
        %v1929 = vsel %vm351, %v1831, 0
        %1931 = vmatpush.msra.mxu0 0.0
        %1932 = vmatpush.msra.mxu0 0.0
        %1933 = vmatpush.msra.mxu0 0.0
        %1934 = vmatpush.msra.mxu0 0.0
        %1935 = vmatpush.msra.mxu0 0.0
        %1936 = vmatpush.msra.mxu0 0.0
        %1937 = vmatpush.msra.mxu0 0.0
        %1938 = vmatpush.msra.mxu0 0.0
        %1939 = vmatpush.msra.mxu0 0.0
        %1940 = vmatpush.msra.mxu0 0.0
        %1941 = vmatpush.msra.mxu0 0.0
        %1942 = vmatpush.msra.mxu0 0.0
        %1943 = vmatpush.msra.mxu0 0.0
        %1944 = vmatpush.msra.mxu0 0.0
        %1945 = vmatpush.msra.mxu0 0.0
        %1946 = vmatpush.msra.mxu0 %v1929
        %1947 = vmatmul.f32.gmra.mxu0 %v1833
        %v1948 = vpop.f32.mrf.mxu0
        %v1949 = vadd.f32 0.0, %v1948
        %1950 = vmatmul.f32.gmra.mxu0 %v1836
        %v1951 = vpop.f32.mrf.mxu0
        %v1952 = vadd.f32 0.0, %v1951
        %1953 = vmatmul.f32.gmra.mxu0 %v1839
        %v1954 = vpop.f32.mrf.mxu0
        %v1955 = vadd.f32 0.0, %v1954
        %1956 = vmatmul.f32.gmra.mxu0 %v1842
        %v1957 = vpop.f32.mrf.mxu0
        %v1958 = vadd.f32 0.0, %v1957
        %1959 = vmatmul.f32.gmra.mxu0 %v1845
        %v1960 = vpop.f32.mrf.mxu0
        %v1961 = vadd.f32 0.0, %v1960
        %1962 = vmatmul.f32.gmra.mxu0 %v1848
        %v1963 = vpop.f32.mrf.mxu0
        %v1964 = vadd.f32 0.0, %v1963
        %1965 = vmatmul.f32.gmra.mxu0 %v1851
        %v1966 = vpop.f32.mrf.mxu0
        %v1967 = vadd.f32 0.0, %v1966
        %1968 = vmatmul.f32.gmra.mxu0 %v1854
        %v1969 = vpop.f32.mrf.mxu0
        %v1970 = vadd.f32 0.0, %v1969
        %1971 = vmatmul.f32.gmra.mxu0 %v1857
        %v1972 = vpop.f32.mrf.mxu0
        %v1973 = vadd.f32 0.0, %v1972
        %1974 = vmatmul.f32.gmra.mxu0 %v1860
        %v1975 = vpop.f32.mrf.mxu0
        %v1976 = vadd.f32 0.0, %v1975
        %1977 = vmatmul.f32.gmra.mxu0 %v1863
        %v1978 = vpop.f32.mrf.mxu0
        %v1979 = vadd.f32 0.0, %v1978
        %1980 = vmatmul.f32.gmra.mxu0 %v1866
        %v1981 = vpop.f32.mrf.mxu0
        %v1982 = vadd.f32 0.0, %v1981
        %1983 = vmatmul.f32.gmra.mxu0 %v1869
        %v1984 = vpop.f32.mrf.mxu0
        %v1985 = vadd.f32 0.0, %v1984
        %1986 = vmatmul.f32.gmra.mxu0 %v1872
        %v1987 = vpop.f32.mrf.mxu0
        %v1988 = vadd.f32 0.0, %v1987
        %1989 = vmatmul.f32.gmra.mxu0 %v1875
        %v1990 = vpop.f32.mrf.mxu0
        %v1991 = vadd.f32 0.0, %v1990
        %1992 = vmatmul.f32.gmra.mxu0 %v1878
        %v1993 = vpop.f32.mrf.mxu0
        %v1994 = vadd.f32 0.0, %v1993
        %1995 = vmatmul.f32.gmra.mxu0 %v1881
        %v1996 = vpop.f32.mrf.mxu0
        %v1997 = vadd.f32 0.0, %v1996
        %1998 = vmatmul.f32.gmra.mxu0 %v1884
        %v1999 = vpop.f32.mrf.mxu0
        %v2000 = vadd.f32 0.0, %v1999
        %2001 = vmatmul.f32.gmra.mxu0 %v1887
        %v2002 = vpop.f32.mrf.mxu0
        %v2003 = vadd.f32 0.0, %v2002
        %2004 = vmatmul.f32.gmra.mxu0 %v1890
        %v2005 = vpop.f32.mrf.mxu0
        %v2006 = vadd.f32 0.0, %v2005
        %2007 = vmatmul.f32.gmra.mxu0 %v1893
        %v2008 = vpop.f32.mrf.mxu0
        %v2009 = vadd.f32 0.0, %v2008
        %2010 = vmatmul.f32.gmra.mxu0 %v1896
        %v2011 = vpop.f32.mrf.mxu0
        %v2012 = vadd.f32 0.0, %v2011
        %2013 = vmatmul.f32.gmra.mxu0 %v1899
        %v2014 = vpop.f32.mrf.mxu0
        %v2015 = vadd.f32 0.0, %v2014
        %2016 = vmatmul.f32.gmra.mxu0 %v1902
        %v2017 = vpop.f32.mrf.mxu0
        %v2018 = vadd.f32 0.0, %v2017
        %2019 = vmatmul.f32.gmra.mxu0 %v1905
        %v2020 = vpop.f32.mrf.mxu0
        %v2021 = vadd.f32 0.0, %v2020
        %2022 = vmatmul.f32.gmra.mxu0 %v1908
        %v2023 = vpop.f32.mrf.mxu0
        %v2024 = vadd.f32 0.0, %v2023
        %2025 = vmatmul.f32.gmra.mxu0 %v1911
        %v2026 = vpop.f32.mrf.mxu0
        %v2027 = vadd.f32 0.0, %v2026
        %2028 = vmatmul.f32.gmra.mxu0 %v1914
        %v2029 = vpop.f32.mrf.mxu0
        %v2030 = vadd.f32 0.0, %v2029
        %2031 = vmatmul.f32.gmra.mxu0 %v1917
        %v2032 = vpop.f32.mrf.mxu0
        %v2033 = vadd.f32 0.0, %v2032
        %2034 = vmatmul.f32.gmra.mxu0 %v1920
        %v2035 = vpop.f32.mrf.mxu0
        %v2036 = vadd.f32 0.0, %v2035
        %2037 = vmatmul.f32.gmra.mxu0 %v1923
        %v2038 = vpop.f32.mrf.mxu0
        %v2039 = vadd.f32 0.0, %v2038
        %2040 = vmatmul.f32.gmra.mxu0 %v1926
        %v2041 = vpop.f32.mrf.mxu0
        %v2042 = vadd.f32 0.0, %v2041
        %2043 = vdwg.mxu0
        %v2044 = vadd.f32 %v1763, %v1949
        %v2045 = vadd.f32 %v1764, %v1952
        %v2046 = vadd.f32 %v1765, %v1955
        %v2047 = vadd.f32 %v1766, %v1958
        %v2048 = vadd.f32 %v1767, %v1961
        %v2049 = vadd.f32 %v1768, %v1964
        %v2050 = vadd.f32 %v1769, %v1967
        %v2051 = vadd.f32 %v1770, %v1970
        %v2052 = vadd.f32 %v1771, %v1973
        %v2053 = vadd.f32 %v1772, %v1976
        %v2054 = vadd.f32 %v1773, %v1979
        %v2055 = vadd.f32 %v1774, %v1982
        %v2056 = vadd.f32 %v1775, %v1985
        %v2057 = vadd.f32 %v1776, %v1988
        %v2058 = vadd.f32 %v1777, %v1991
        %v2059 = vadd.f32 %v1778, %v1994
        %v2060 = vadd.f32 %v1779, %v1997
        %v2061 = vadd.f32 %v1780, %v2000
        %v2062 = vadd.f32 %v1781, %v2003
        %v2063 = vadd.f32 %v1782, %v2006
        %v2064 = vadd.f32 %v1783, %v2009
        %v2065 = vadd.f32 %v1784, %v2012
        %v2066 = vadd.f32 %v1785, %v2015
        %v2067 = vadd.f32 %v1786, %v2018
        %v2068 = vadd.f32 %v1787, %v2021
        %v2069 = vadd.f32 %v1788, %v2024
        %v2070 = vadd.f32 %v1789, %v2027
        %v2071 = vadd.f32 %v1790, %v2030
        %v2072 = vadd.f32 %v1791, %v2033
        %v2073 = vadd.f32 %v1792, %v2036
        %v2074 = vadd.f32 %v1793, %v2039
        %v2075 = vadd.f32 %v1794, %v2042
        %v2076 = vld [vmem:[%s1797 + $0x1] sm:$0xff]
        %v2077 = vld [vmem:[%s1797 + $0x9] sm:$0xff]
        %v2078 = vld [vmem:[%s1797 + $0x19] sm:$0xff]
        %v2079 = vld [vmem:[%s1797 + $0x21] sm:$0xff]
        %v2080 = vld [vmem:[%s1797 + $0x31] sm:$0xff]
        %v2081 = vld [vmem:[%s1797 + $0x39] sm:$0xff]
        %v2082 = vld [vmem:[%s1797 + $0x49] sm:$0xff]
        %v2083 = vld [vmem:[%s1797 + $0x51] sm:$0xff]
        %v2084 = vld [vmem:[%s1797 + $0x61] sm:$0xff]
        %v2085 = vld [vmem:[%s1797 + $0x69] sm:$0xff]
        %v2086 = vld [vmem:[%s1797 + $0x79] sm:$0xff]
        %v2087 = vld [vmem:[%s1797 + $0x81] sm:$0xff]
        %v2088 = vld [vmem:[%s1797 + $0x91] sm:$0xff]
        %v2089 = vld [vmem:[%s1797 + $0x99] sm:$0xff]
        %v2090 = vld [vmem:[%s1797 + $0xa9] sm:$0xff]
        %v2091 = vld [vmem:[%s1797 + $0xb1] sm:$0xff]
        %v2092 = vld [vmem:[%s1797 + $0xc1] sm:$0xff]
        %v2093 = vld [vmem:[%s1797 + $0xc9] sm:$0xff]
        %v2094 = vld [vmem:[%s1797 + $0xd9] sm:$0xff]
        %v2095 = vld [vmem:[%s1797 + $0xe1] sm:$0xff]
        %v2096 = vld [vmem:[%s1797 + $0xf1] sm:$0xff]
        %v2097 = vld [vmem:[%s1797 + $0xf9] sm:$0xff]
        %v2098 = vld [vmem:[%s1797 + $0x109] sm:$0xff]
        %v2099 = vld [vmem:[%s1797 + $0x111] sm:$0xff]
        %v2100 = vld [vmem:[%s1797 + $0x121] sm:$0xff]
        %v2101 = vld [vmem:[%s1797 + $0x129] sm:$0xff]
        %v2102 = vld [vmem:[%s1797 + $0x139] sm:$0xff]
        %v2103 = vld [vmem:[%s1797 + $0x141] sm:$0xff]
        %v2104 = vld [vmem:[%s1797 + $0x151] sm:$0xff]
        %v2105 = vld [vmem:[%s1797 + $0x159] sm:$0xff]
        %v2106 = vld [vmem:[%s1797 + $0x169] sm:$0xff]
        %v2107 = vld [vmem:[%s1797 + $0x171] sm:$0xff]
        %s2108 = scalar_lea.vmem %s1, 28
        %v2109 = vld [vmem:[%s2108] sm:$0xf]
        %v2111 = vsel %vm254, %v2076, 0
        %v2114 = vsel %vm254, %v2077, 0
        %v2117 = vsel %vm254, %v2078, 0
        %v2120 = vsel %vm254, %v2079, 0
        %v2123 = vsel %vm254, %v2080, 0
        %v2126 = vsel %vm254, %v2081, 0
        %v2129 = vsel %vm254, %v2082, 0
        %v2132 = vsel %vm254, %v2083, 0
        %v2135 = vsel %vm254, %v2084, 0
        %v2138 = vsel %vm254, %v2085, 0
        %v2141 = vsel %vm254, %v2086, 0
        %v2144 = vsel %vm254, %v2087, 0
        %v2147 = vsel %vm254, %v2088, 0
        %v2150 = vsel %vm254, %v2089, 0
        %v2153 = vsel %vm254, %v2090, 0
        %v2156 = vsel %vm254, %v2091, 0
        %v2159 = vsel %vm254, %v2092, 0
        %v2162 = vsel %vm254, %v2093, 0
        %v2165 = vsel %vm254, %v2094, 0
        %v2168 = vsel %vm254, %v2095, 0
        %v2171 = vsel %vm254, %v2096, 0
        %v2174 = vsel %vm254, %v2097, 0
        %v2177 = vsel %vm254, %v2098, 0
        %v2180 = vsel %vm254, %v2099, 0
        %v2183 = vsel %vm254, %v2100, 0
        %v2186 = vsel %vm254, %v2101, 0
        %v2189 = vsel %vm254, %v2102, 0
        %v2192 = vsel %vm254, %v2103, 0
        %v2195 = vsel %vm254, %v2104, 0
        %v2198 = vsel %vm254, %v2105, 0
        %v2201 = vsel %vm254, %v2106, 0
        %v2204 = vsel %vm254, %v2107, 0
        %v2207 = vsel %vm351, %v2109, 0
        %2209 = vmatpush.msra.mxu0 0.0
        %2210 = vmatpush.msra.mxu0 0.0
        %2211 = vmatpush.msra.mxu0 0.0
        %2212 = vmatpush.msra.mxu0 0.0
        %2213 = vmatpush.msra.mxu0 0.0
        %2214 = vmatpush.msra.mxu0 0.0
        %2215 = vmatpush.msra.mxu0 0.0
        %2216 = vmatpush.msra.mxu0 0.0
        %2217 = vmatpush.msra.mxu0 0.0
        %2218 = vmatpush.msra.mxu0 0.0
        %2219 = vmatpush.msra.mxu0 0.0
        %2220 = vmatpush.msra.mxu0 0.0
        %2221 = vmatpush.msra.mxu0 0.0
        %2222 = vmatpush.msra.mxu0 0.0
        %2223 = vmatpush.msra.mxu0 0.0
        %2224 = vmatpush.msra.mxu0 %v2207
        %2225 = vmatmul.f32.gmra.mxu0 %v2111
        %v2226 = vpop.f32.mrf.mxu0
        %v2227 = vadd.f32 0.0, %v2226
        %2228 = vmatmul.f32.gmra.mxu0 %v2114
        %v2229 = vpop.f32.mrf.mxu0
        %v2230 = vadd.f32 0.0, %v2229
        %2231 = vmatmul.f32.gmra.mxu0 %v2117
        %v2232 = vpop.f32.mrf.mxu0
        %v2233 = vadd.f32 0.0, %v2232
        %2234 = vmatmul.f32.gmra.mxu0 %v2120
        %v2235 = vpop.f32.mrf.mxu0
        %v2236 = vadd.f32 0.0, %v2235
        %2237 = vmatmul.f32.gmra.mxu0 %v2123
        %v2238 = vpop.f32.mrf.mxu0
        %v2239 = vadd.f32 0.0, %v2238
        %2240 = vmatmul.f32.gmra.mxu0 %v2126
        %v2241 = vpop.f32.mrf.mxu0
        %v2242 = vadd.f32 0.0, %v2241
        %2243 = vmatmul.f32.gmra.mxu0 %v2129
        %v2244 = vpop.f32.mrf.mxu0
        %v2245 = vadd.f32 0.0, %v2244
        %2246 = vmatmul.f32.gmra.mxu0 %v2132
        %v2247 = vpop.f32.mrf.mxu0
        %v2248 = vadd.f32 0.0, %v2247
        %2249 = vmatmul.f32.gmra.mxu0 %v2135
        %v2250 = vpop.f32.mrf.mxu0
        %v2251 = vadd.f32 0.0, %v2250
        %2252 = vmatmul.f32.gmra.mxu0 %v2138
        %v2253 = vpop.f32.mrf.mxu0
        %v2254 = vadd.f32 0.0, %v2253
        %2255 = vmatmul.f32.gmra.mxu0 %v2141
        %v2256 = vpop.f32.mrf.mxu0
        %v2257 = vadd.f32 0.0, %v2256
        %2258 = vmatmul.f32.gmra.mxu0 %v2144
        %v2259 = vpop.f32.mrf.mxu0
        %v2260 = vadd.f32 0.0, %v2259
        %2261 = vmatmul.f32.gmra.mxu0 %v2147
        %v2262 = vpop.f32.mrf.mxu0
        %v2263 = vadd.f32 0.0, %v2262
        %2264 = vmatmul.f32.gmra.mxu0 %v2150
        %v2265 = vpop.f32.mrf.mxu0
        %v2266 = vadd.f32 0.0, %v2265
        %2267 = vmatmul.f32.gmra.mxu0 %v2153
        %v2268 = vpop.f32.mrf.mxu0
        %v2269 = vadd.f32 0.0, %v2268
        %2270 = vmatmul.f32.gmra.mxu0 %v2156
        %v2271 = vpop.f32.mrf.mxu0
        %v2272 = vadd.f32 0.0, %v2271
        %2273 = vmatmul.f32.gmra.mxu0 %v2159
        %v2274 = vpop.f32.mrf.mxu0
        %v2275 = vadd.f32 0.0, %v2274
        %2276 = vmatmul.f32.gmra.mxu0 %v2162
        %v2277 = vpop.f32.mrf.mxu0
        %v2278 = vadd.f32 0.0, %v2277
        %2279 = vmatmul.f32.gmra.mxu0 %v2165
        %v2280 = vpop.f32.mrf.mxu0
        %v2281 = vadd.f32 0.0, %v2280
        %2282 = vmatmul.f32.gmra.mxu0 %v2168
        %v2283 = vpop.f32.mrf.mxu0
        %v2284 = vadd.f32 0.0, %v2283
        %2285 = vmatmul.f32.gmra.mxu0 %v2171
        %v2286 = vpop.f32.mrf.mxu0
        %v2287 = vadd.f32 0.0, %v2286
        %2288 = vmatmul.f32.gmra.mxu0 %v2174
        %v2289 = vpop.f32.mrf.mxu0
        %v2290 = vadd.f32 0.0, %v2289
        %2291 = vmatmul.f32.gmra.mxu0 %v2177
        %v2292 = vpop.f32.mrf.mxu0
        %v2293 = vadd.f32 0.0, %v2292
        %2294 = vmatmul.f32.gmra.mxu0 %v2180
        %v2295 = vpop.f32.mrf.mxu0
        %v2296 = vadd.f32 0.0, %v2295
        %2297 = vmatmul.f32.gmra.mxu0 %v2183
        %v2298 = vpop.f32.mrf.mxu0
        %v2299 = vadd.f32 0.0, %v2298
        %2300 = vmatmul.f32.gmra.mxu0 %v2186
        %v2301 = vpop.f32.mrf.mxu0
        %v2302 = vadd.f32 0.0, %v2301
        %2303 = vmatmul.f32.gmra.mxu0 %v2189
        %v2304 = vpop.f32.mrf.mxu0
        %v2305 = vadd.f32 0.0, %v2304
        %2306 = vmatmul.f32.gmra.mxu0 %v2192
        %v2307 = vpop.f32.mrf.mxu0
        %v2308 = vadd.f32 0.0, %v2307
        %2309 = vmatmul.f32.gmra.mxu0 %v2195
        %v2310 = vpop.f32.mrf.mxu0
        %v2311 = vadd.f32 0.0, %v2310
        %2312 = vmatmul.f32.gmra.mxu0 %v2198
        %v2313 = vpop.f32.mrf.mxu0
        %v2314 = vadd.f32 0.0, %v2313
        %2315 = vmatmul.f32.gmra.mxu0 %v2201
        %v2316 = vpop.f32.mrf.mxu0
        %v2317 = vadd.f32 0.0, %v2316
        %2318 = vmatmul.f32.gmra.mxu0 %v2204
        %v2319 = vpop.f32.mrf.mxu0
        %v2320 = vadd.f32 0.0, %v2319
        %2321 = vdwg.mxu0
        %v2322 = vadd.f32 %v2044, %v2227
        %v2323 = vadd.f32 %v2045, %v2230
        %v2324 = vadd.f32 %v2046, %v2233
        %v2325 = vadd.f32 %v2047, %v2236
        %v2326 = vadd.f32 %v2048, %v2239
        %v2327 = vadd.f32 %v2049, %v2242
        %v2328 = vadd.f32 %v2050, %v2245
        %v2329 = vadd.f32 %v2051, %v2248
        %v2330 = vadd.f32 %v2052, %v2251
        %v2331 = vadd.f32 %v2053, %v2254
        %v2332 = vadd.f32 %v2054, %v2257
        %v2333 = vadd.f32 %v2055, %v2260
        %v2334 = vadd.f32 %v2056, %v2263
        %v2335 = vadd.f32 %v2057, %v2266
        %v2336 = vadd.f32 %v2058, %v2269
        %v2337 = vadd.f32 %v2059, %v2272
        %v2338 = vadd.f32 %v2060, %v2275
        %v2339 = vadd.f32 %v2061, %v2278
        %v2340 = vadd.f32 %v2062, %v2281
        %v2341 = vadd.f32 %v2063, %v2284
        %v2342 = vadd.f32 %v2064, %v2287
        %v2343 = vadd.f32 %v2065, %v2290
        %v2344 = vadd.f32 %v2066, %v2293
        %v2345 = vadd.f32 %v2067, %v2296
        %v2346 = vadd.f32 %v2068, %v2299
        %v2347 = vadd.f32 %v2069, %v2302
        %v2348 = vadd.f32 %v2070, %v2305
        %v2349 = vadd.f32 %v2071, %v2308
        %v2350 = vadd.f32 %v2072, %v2311
        %v2351 = vadd.f32 %v2073, %v2314
        %v2352 = vadd.f32 %v2074, %v2317
        %v2353 = vadd.f32 %v2075, %v2320
        %v2354 = vld [vmem:[%s1797 + $0x2] sm:$0xff]
        %v2355 = vld [vmem:[%s1797 + $0xa] sm:$0xff]
        %v2356 = vld [vmem:[%s1797 + $0x1a] sm:$0xff]
        %v2357 = vld [vmem:[%s1797 + $0x22] sm:$0xff]
        %v2358 = vld [vmem:[%s1797 + $0x32] sm:$0xff]
        %v2359 = vld [vmem:[%s1797 + $0x3a] sm:$0xff]
        %v2360 = vld [vmem:[%s1797 + $0x4a] sm:$0xff]
        %v2361 = vld [vmem:[%s1797 + $0x52] sm:$0xff]
        %v2362 = vld [vmem:[%s1797 + $0x62] sm:$0xff]
        %v2363 = vld [vmem:[%s1797 + $0x6a] sm:$0xff]
        %v2364 = vld [vmem:[%s1797 + $0x7a] sm:$0xff]
        %v2365 = vld [vmem:[%s1797 + $0x82] sm:$0xff]
        %v2366 = vld [vmem:[%s1797 + $0x92] sm:$0xff]
        %v2367 = vld [vmem:[%s1797 + $0x9a] sm:$0xff]
        %v2368 = vld [vmem:[%s1797 + $0xaa] sm:$0xff]
        %v2369 = vld [vmem:[%s1797 + $0xb2] sm:$0xff]
        %v2370 = vld [vmem:[%s1797 + $0xc2] sm:$0xff]
        %v2371 = vld [vmem:[%s1797 + $0xca] sm:$0xff]
        %v2372 = vld [vmem:[%s1797 + $0xda] sm:$0xff]
        %v2373 = vld [vmem:[%s1797 + $0xe2] sm:$0xff]
        %v2374 = vld [vmem:[%s1797 + $0xf2] sm:$0xff]
        %v2375 = vld [vmem:[%s1797 + $0xfa] sm:$0xff]
        %v2376 = vld [vmem:[%s1797 + $0x10a] sm:$0xff]
        %v2377 = vld [vmem:[%s1797 + $0x112] sm:$0xff]
        %v2378 = vld [vmem:[%s1797 + $0x122] sm:$0xff]
        %v2379 = vld [vmem:[%s1797 + $0x12a] sm:$0xff]
        %v2380 = vld [vmem:[%s1797 + $0x13a] sm:$0xff]
        %v2381 = vld [vmem:[%s1797 + $0x142] sm:$0xff]
        %v2382 = vld [vmem:[%s1797 + $0x152] sm:$0xff]
        %v2383 = vld [vmem:[%s1797 + $0x15a] sm:$0xff]
        %v2384 = vld [vmem:[%s1797 + $0x16a] sm:$0xff]
        %v2385 = vld [vmem:[%s1797 + $0x172] sm:$0xff]
        %s2386 = scalar_lea.vmem %s1, 32
        %v2387 = vld [vmem:[%s2386] sm:$0xf]
        %v2389 = vsel %vm254, %v2354, 0
        %v2392 = vsel %vm254, %v2355, 0
        %v2395 = vsel %vm254, %v2356, 0
        %v2398 = vsel %vm254, %v2357, 0
        %v2401 = vsel %vm254, %v2358, 0
        %v2404 = vsel %vm254, %v2359, 0
        %v2407 = vsel %vm254, %v2360, 0
        %v2410 = vsel %vm254, %v2361, 0
        %v2413 = vsel %vm254, %v2362, 0
        %v2416 = vsel %vm254, %v2363, 0
        %v2419 = vsel %vm254, %v2364, 0
        %v2422 = vsel %vm254, %v2365, 0
        %v2425 = vsel %vm254, %v2366, 0
        %v2428 = vsel %vm254, %v2367, 0
        %v2431 = vsel %vm254, %v2368, 0
        %v2434 = vsel %vm254, %v2369, 0
        %v2437 = vsel %vm254, %v2370, 0
        %v2440 = vsel %vm254, %v2371, 0
        %v2443 = vsel %vm254, %v2372, 0
        %v2446 = vsel %vm254, %v2373, 0
        %v2449 = vsel %vm254, %v2374, 0
        %v2452 = vsel %vm254, %v2375, 0
        %v2455 = vsel %vm254, %v2376, 0
        %v2458 = vsel %vm254, %v2377, 0
        %v2461 = vsel %vm254, %v2378, 0
        %v2464 = vsel %vm254, %v2379, 0
        %v2467 = vsel %vm254, %v2380, 0
        %v2470 = vsel %vm254, %v2381, 0
        %v2473 = vsel %vm254, %v2382, 0
        %v2476 = vsel %vm254, %v2383, 0
        %v2479 = vsel %vm254, %v2384, 0
        %v2482 = vsel %vm254, %v2385, 0
        %v2485 = vsel %vm351, %v2387, 0
        %2487 = vmatpush.msra.mxu0 0.0
        %2488 = vmatpush.msra.mxu0 0.0
        %2489 = vmatpush.msra.mxu0 0.0
        %2490 = vmatpush.msra.mxu0 0.0
        %2491 = vmatpush.msra.mxu0 0.0
        %2492 = vmatpush.msra.mxu0 0.0
        %2493 = vmatpush.msra.mxu0 0.0
        %2494 = vmatpush.msra.mxu0 0.0
        %2495 = vmatpush.msra.mxu0 0.0
        %2496 = vmatpush.msra.mxu0 0.0
        %2497 = vmatpush.msra.mxu0 0.0
        %2498 = vmatpush.msra.mxu0 0.0
        %2499 = vmatpush.msra.mxu0 0.0
        %2500 = vmatpush.msra.mxu0 0.0
        %2501 = vmatpush.msra.mxu0 0.0
        %2502 = vmatpush.msra.mxu0 %v2485
        %2503 = vmatmul.f32.gmra.mxu0 %v2389
        %v2504 = vpop.f32.mrf.mxu0
        %v2505 = vadd.f32 0.0, %v2504
        %2506 = vmatmul.f32.gmra.mxu0 %v2392
        %v2507 = vpop.f32.mrf.mxu0
        %v2508 = vadd.f32 0.0, %v2507
        %2509 = vmatmul.f32.gmra.mxu0 %v2395
        %v2510 = vpop.f32.mrf.mxu0
        %v2511 = vadd.f32 0.0, %v2510
        %2512 = vmatmul.f32.gmra.mxu0 %v2398
        %v2513 = vpop.f32.mrf.mxu0
        %v2514 = vadd.f32 0.0, %v2513
        %2515 = vmatmul.f32.gmra.mxu0 %v2401
        %v2516 = vpop.f32.mrf.mxu0
        %v2517 = vadd.f32 0.0, %v2516
        %2518 = vmatmul.f32.gmra.mxu0 %v2404
        %v2519 = vpop.f32.mrf.mxu0
        %v2520 = vadd.f32 0.0, %v2519
        %2521 = vmatmul.f32.gmra.mxu0 %v2407
        %v2522 = vpop.f32.mrf.mxu0
        %v2523 = vadd.f32 0.0, %v2522
        %2524 = vmatmul.f32.gmra.mxu0 %v2410
        %v2525 = vpop.f32.mrf.mxu0
        %v2526 = vadd.f32 0.0, %v2525
        %2527 = vmatmul.f32.gmra.mxu0 %v2413
        %v2528 = vpop.f32.mrf.mxu0
        %v2529 = vadd.f32 0.0, %v2528
        %2530 = vmatmul.f32.gmra.mxu0 %v2416
        %v2531 = vpop.f32.mrf.mxu0
        %v2532 = vadd.f32 0.0, %v2531
        %2533 = vmatmul.f32.gmra.mxu0 %v2419
        %v2534 = vpop.f32.mrf.mxu0
        %v2535 = vadd.f32 0.0, %v2534
        %2536 = vmatmul.f32.gmra.mxu0 %v2422
        %v2537 = vpop.f32.mrf.mxu0
        %v2538 = vadd.f32 0.0, %v2537
        %2539 = vmatmul.f32.gmra.mxu0 %v2425
        %v2540 = vpop.f32.mrf.mxu0
        %v2541 = vadd.f32 0.0, %v2540
        %2542 = vmatmul.f32.gmra.mxu0 %v2428
        %v2543 = vpop.f32.mrf.mxu0
        %v2544 = vadd.f32 0.0, %v2543
        %2545 = vmatmul.f32.gmra.mxu0 %v2431
        %v2546 = vpop.f32.mrf.mxu0
        %v2547 = vadd.f32 0.0, %v2546
        %2548 = vmatmul.f32.gmra.mxu0 %v2434
        %v2549 = vpop.f32.mrf.mxu0
        %v2550 = vadd.f32 0.0, %v2549
        %2551 = vmatmul.f32.gmra.mxu0 %v2437
        %v2552 = vpop.f32.mrf.mxu0
        %v2553 = vadd.f32 0.0, %v2552
        %2554 = vmatmul.f32.gmra.mxu0 %v2440
        %v2555 = vpop.f32.mrf.mxu0
        %v2556 = vadd.f32 0.0, %v2555
        %2557 = vmatmul.f32.gmra.mxu0 %v2443
        %v2558 = vpop.f32.mrf.mxu0
        %v2559 = vadd.f32 0.0, %v2558
        %2560 = vmatmul.f32.gmra.mxu0 %v2446
        %v2561 = vpop.f32.mrf.mxu0
        %v2562 = vadd.f32 0.0, %v2561
        %2563 = vmatmul.f32.gmra.mxu0 %v2449
        %v2564 = vpop.f32.mrf.mxu0
        %v2565 = vadd.f32 0.0, %v2564
        %2566 = vmatmul.f32.gmra.mxu0 %v2452
        %v2567 = vpop.f32.mrf.mxu0
        %v2568 = vadd.f32 0.0, %v2567
        %2569 = vmatmul.f32.gmra.mxu0 %v2455
        %v2570 = vpop.f32.mrf.mxu0
        %v2571 = vadd.f32 0.0, %v2570
        %2572 = vmatmul.f32.gmra.mxu0 %v2458
        %v2573 = vpop.f32.mrf.mxu0
        %v2574 = vadd.f32 0.0, %v2573
        %2575 = vmatmul.f32.gmra.mxu0 %v2461
        %v2576 = vpop.f32.mrf.mxu0
        %v2577 = vadd.f32 0.0, %v2576
        %2578 = vmatmul.f32.gmra.mxu0 %v2464
        %v2579 = vpop.f32.mrf.mxu0
        %v2580 = vadd.f32 0.0, %v2579
        %2581 = vmatmul.f32.gmra.mxu0 %v2467
        %v2582 = vpop.f32.mrf.mxu0
        %v2583 = vadd.f32 0.0, %v2582
        %2584 = vmatmul.f32.gmra.mxu0 %v2470
        %v2585 = vpop.f32.mrf.mxu0
        %v2586 = vadd.f32 0.0, %v2585
        %2587 = vmatmul.f32.gmra.mxu0 %v2473
        %v2588 = vpop.f32.mrf.mxu0
        %v2589 = vadd.f32 0.0, %v2588
        %2590 = vmatmul.f32.gmra.mxu0 %v2476
        %v2591 = vpop.f32.mrf.mxu0
        %v2592 = vadd.f32 0.0, %v2591
        %2593 = vmatmul.f32.gmra.mxu0 %v2479
        %v2594 = vpop.f32.mrf.mxu0
        %v2595 = vadd.f32 0.0, %v2594
        %2596 = vmatmul.f32.gmra.mxu0 %v2482
        %v2597 = vpop.f32.mrf.mxu0
        %v2598 = vadd.f32 0.0, %v2597
        %2599 = vdwg.mxu0
        %v2600 = vadd.f32 %v2322, %v2505
        %v2601 = vadd.f32 %v2323, %v2508
        %v2602 = vadd.f32 %v2324, %v2511
        %v2603 = vadd.f32 %v2325, %v2514
        %v2604 = vadd.f32 %v2326, %v2517
        %v2605 = vadd.f32 %v2327, %v2520
        %v2606 = vadd.f32 %v2328, %v2523
        %v2607 = vadd.f32 %v2329, %v2526
        %v2608 = vadd.f32 %v2330, %v2529
        %v2609 = vadd.f32 %v2331, %v2532
        %v2610 = vadd.f32 %v2332, %v2535
        %v2611 = vadd.f32 %v2333, %v2538
        %v2612 = vadd.f32 %v2334, %v2541
        %v2613 = vadd.f32 %v2335, %v2544
        %v2614 = vadd.f32 %v2336, %v2547
        %v2615 = vadd.f32 %v2337, %v2550
        %v2616 = vadd.f32 %v2338, %v2553
        %v2617 = vadd.f32 %v2339, %v2556
        %v2618 = vadd.f32 %v2340, %v2559
        %v2619 = vadd.f32 %v2341, %v2562
        %v2620 = vadd.f32 %v2342, %v2565
        %v2621 = vadd.f32 %v2343, %v2568
        %v2622 = vadd.f32 %v2344, %v2571
        %v2623 = vadd.f32 %v2345, %v2574
        %v2624 = vadd.f32 %v2346, %v2577
        %v2625 = vadd.f32 %v2347, %v2580
        %v2626 = vadd.f32 %v2348, %v2583
        %v2627 = vadd.f32 %v2349, %v2586
        %v2628 = vadd.f32 %v2350, %v2589
        %v2629 = vadd.f32 %v2351, %v2592
        %v2630 = vadd.f32 %v2352, %v2595
        %v2631 = vadd.f32 %v2353, %v2598
        %v2632 = vld [vmem:[%s2] sm:$0x1]
        %v2634 = vperm.slane %v2632, 0
        %v2636 = vadd.f32 %v2600, %v2634
        %v2637 = vadd.f32 %v2601, %v2634
        %v2638 = vadd.f32 %v2602, %v2634
        %v2639 = vadd.f32 %v2603, %v2634
        %v2640 = vadd.f32 %v2604, %v2634
        %v2641 = vadd.f32 %v2605, %v2634
        %v2642 = vadd.f32 %v2606, %v2634
        %v2643 = vadd.f32 %v2607, %v2634
        %v2644 = vadd.f32 %v2608, %v2634
        %v2645 = vadd.f32 %v2609, %v2634
        %v2646 = vadd.f32 %v2610, %v2634
        %v2647 = vadd.f32 %v2611, %v2634
        %v2648 = vadd.f32 %v2612, %v2634
        %v2649 = vadd.f32 %v2613, %v2634
        %v2650 = vadd.f32 %v2614, %v2634
        %v2651 = vadd.f32 %v2615, %v2634
        %v2652 = vadd.f32 %v2616, %v2634
        %v2653 = vadd.f32 %v2617, %v2634
        %v2654 = vadd.f32 %v2618, %v2634
        %v2655 = vadd.f32 %v2619, %v2634
        %v2656 = vadd.f32 %v2620, %v2634
        %v2657 = vadd.f32 %v2621, %v2634
        %v2658 = vadd.f32 %v2622, %v2634
        %v2659 = vadd.f32 %v2623, %v2634
        %v2660 = vadd.f32 %v2624, %v2634
        %v2661 = vadd.f32 %v2625, %v2634
        %v2662 = vadd.f32 %v2626, %v2634
        %v2663 = vadd.f32 %v2627, %v2634
        %v2664 = vadd.f32 %v2628, %v2634
        %v2665 = vadd.f32 %v2629, %v2634
        %v2666 = vadd.f32 %v2630, %v2634
        %v2667 = vadd.f32 %v2631, %v2634
        %2668 = vst [vmem:[%s177] sm:$0xff] %v2636
        %2669 = vst [vmem:[%s177 + $0x8] sm:$0xff] %v2637
        %2670 = vst [vmem:[%s177 + $0x10] sm:$0xff] %v2638
        %2671 = vst [vmem:[%s177 + $0x18] sm:$0xff] %v2639
        %2672 = vst [vmem:[%s177 + $0x20] sm:$0xff] %v2640
        %2673 = vst [vmem:[%s177 + $0x28] sm:$0xff] %v2641
        %2674 = vst [vmem:[%s177 + $0x30] sm:$0xff] %v2642
        %2675 = vst [vmem:[%s177 + $0x38] sm:$0xff] %v2643
        %2676 = vst [vmem:[%s177 + $0x40] sm:$0xff] %v2644
        %2677 = vst [vmem:[%s177 + $0x48] sm:$0xff] %v2645
        %2678 = vst [vmem:[%s177 + $0x50] sm:$0xff] %v2646
        %2679 = vst [vmem:[%s177 + $0x58] sm:$0xff] %v2647
        %2680 = vst [vmem:[%s177 + $0x60] sm:$0xff] %v2648
        %2681 = vst [vmem:[%s177 + $0x68] sm:$0xff] %v2649
        %2682 = vst [vmem:[%s177 + $0x70] sm:$0xff] %v2650
        %2683 = vst [vmem:[%s177 + $0x78] sm:$0xff] %v2651
        %2684 = vst [vmem:[%s177 + $0x80] sm:$0xff] %v2652
        %2685 = vst [vmem:[%s177 + $0x88] sm:$0xff] %v2653
        %2686 = vst [vmem:[%s177 + $0x90] sm:$0xff] %v2654
        %2687 = vst [vmem:[%s177 + $0x98] sm:$0xff] %v2655
        %2688 = vst [vmem:[%s177 + $0xa0] sm:$0xff] %v2656
        %2689 = vst [vmem:[%s177 + $0xa8] sm:$0xff] %v2657
        %2690 = vst [vmem:[%s177 + $0xb0] sm:$0xff] %v2658
        %2691 = vst [vmem:[%s177 + $0xb8] sm:$0xff] %v2659
        %2692 = vst [vmem:[%s177 + $0xc0] sm:$0xff] %v2660
        %2693 = vst [vmem:[%s177 + $0xc8] sm:$0xff] %v2661
        %2694 = vst [vmem:[%s177 + $0xd0] sm:$0xff] %v2662
        %2695 = vst [vmem:[%s177 + $0xd8] sm:$0xff] %v2663
        %2696 = vst [vmem:[%s177 + $0xe0] sm:$0xff] %v2664
        %2697 = vst [vmem:[%s177 + $0xe8] sm:$0xff] %v2665
        %2698 = vst [vmem:[%s177 + $0xf0] sm:$0xff] %v2666
        %2699 = vst [vmem:[%s177 + $0xf8] sm:$0xff] %v2667
        %s2700 = sand.u32 %s107, 1
        %s2701 = scalar_lea.sflag [#allocation3], %s2700
        %s2702 = sand.u32 %s107, 1
        %s2703 = smul.addr %s2702, 256
        %s2704 = scalar_lea.vmem [#allocation2], %s2703
        // Predicated region
        $region33: #{tpu_custom_call.1} parent=31 // pred_check
          %p2705 = pneg %p117
        $region34: #{tpu_custom_call.1} parent=31 // pred_check_branch
          %2707 = sbr.rel (%p2705) target = $region36
        $region35: #{tpu_custom_call.1} parent=31 // pred_region
          %s2708 = smul.u32 16, %s22
          %2710 = vsyncadd %s2701, 0
          %s2711 = smul.addr %s2708, 2
          %s2712 = smul.addr %s21, 32
          %s2713 = sadd.s32 %s2711, %s2712
          %s2714 = smul.addr %s2713, 8
          %s2715 = scalar_lea.hbm %s3, %s2714
          %s2716 = sshll.u32 %s2704, 4
          %s2717 = int_to_ptr.vmem [resolvable:$true] %s2716
          %s2718 = sshll.u32 %s2715, 4
          %s2719 = int_to_ptr.hbm [resolvable:$true] %s2718
          %2724 = dma.vmem_to_hbm [thread:$0]  %s2717, 4096, %s2719, %s2701, 128, 128, 8
        $region36: #{tpu_custom_call.1} parent=31 // pred_fallthru
          _
      $region32: #{tpu_custom_call.1} parent=5 // pred_fallthru
        _
      %p2725 = scmp.le.s32.totalorder 2, %s12
      // Predicated region
      $region37: #{tpu_custom_call.1} parent=5 // pred_check
        %p2726 = pneg %p2725
      $region38: #{tpu_custom_call.1} parent=5 // pred_check_branch
        %2728 = sbr.rel (%p2726) target = $region40
      $region39: #{tpu_custom_call.1} parent=5 // pred_region
        %s2729 = ssub.s32 %s12, 2
        // Predicated region
        $region41: #{tpu_custom_call.1} parent=39 // pred_check
          %p2730 = pneg %p123
        $region42: #{tpu_custom_call.1} parent=39 // pred_check_branch
          %2732 = sbr.rel (%p2730) target = $region44
        $region43: #{tpu_custom_call.1} parent=39 // pred_region
          %s2733 = sand.u32 %s108, 1
          %s2734 = scalar_lea.sflag [#allocation3], %s2733
          %s2735 = sand.u32 %s108, 1
          %s2736 = smul.addr %s2735, 256
          %s2737 = scalar_lea.vmem [#allocation2], %s2736
          %2739 = dma.done %s2734, 4096
        $region44: #{tpu_custom_call.1} parent=39 // pred_fallthru
          _
      $region40: #{tpu_custom_call.1} parent=5 // pred_fallthru
        _
    $region6: #{tpu_custom_call.1} parent=1 // loop_footer
      %s16 = sadd.s32 1, %s12
    $region7: #{tpu_custom_call.1} parent=1 // loop_footer_branch
      %11 = sbr.rel target = $region3
    $region8: #{tpu_custom_call.1} parent=1 // loop_exit
      _
    %2740 = vsyncpa [#allocation3], 1
    %s2741 = scalar_lea.sflag [#allocation3], 1
    %2742 = vsyncpa %s2741, 1

</llo_original>
